<compile_context>
chip_gen: v7x
topology: tpu7x:2x2x1
jax: 0.10.0
libtpu: 0.0.40
codegen_flags: <defaults>
</compile_context>

<pallas_src>
import functools

import jax
import jax.numpy as jnp
from jax.experimental import pallas as pl
from jax.experimental.pallas import tpu as pltpu

NEG_SLOPE = 0.01  # torch.nn.LeakyReLU default
LANE = 128


def _leaky_relu(x):
    # max-form: mul + max (2 VALU ops/elem) vs compare+select+mul (3).
    # Identical to the where-form for 0 < slope < 1.
    return jnp.maximum(x, NEG_SLOPE * x)


def _round_up(n, m):
    return (n + m - 1) // m * m


def _act_dtype_for_device():
    """bf16 activations on chips with a bf16 VPU (v6e / v7x); f32 otherwise
    (v5e has no bf16 VALU).  Correct on every chip; only affects speed."""
    try:
        kind = jax.devices()[0].device_kind.lower()
    except Exception:
        return jnp.float32
    if ("v6" in kind) or ("v7" in kind) or ("7x" in kind):
        return jnp.bfloat16
    return jnp.float32


def mlp_kernel(prev_ref, curr_ref,
               w1a_ref, w1b_ref, b1_ref,
               w2_ref, b2_ref,
               w3_ref, b3_ref,
               w4_ref, b4_ref,
               w5_ref, b5_ref,
               w6_ref, b6_ref,
               o_ref, *, act_dtype):
    """Fused 6-layer MLP, LeakyReLU between hidden layers.

    MXU inputs are bf16 (weights stored bf16, activations cast just before the
    dot); accumulation and bias add stay f32; the LeakyReLU runs in
    `act_dtype` (bf16 on v6e/v7x, f32 on v5e)."""
    wdt = w2_ref.dtype

    def linear(h, w_ref, b_ref):
        return (jnp.dot(h.astype(wdt), w_ref[...],
                        preferred_element_type=jnp.float32)
                + b_ref[...])

    def act(y_f32):
        # Cast once (the value is about to be rounded to bf16 for the next
        # MXU op anyway), then mul+max in the packed dtype.
        return _leaky_relu(y_f32.astype(act_dtype))

    # Layer 1: split matmul over the prev/curr halves of W1 (no concat).
    y = (jnp.dot(prev_ref[...].astype(wdt), w1a_ref[...],
                 preferred_element_type=jnp.float32)
         + jnp.dot(curr_ref[...].astype(wdt), w1b_ref[...],
                   preferred_element_type=jnp.float32)
         + b1_ref[...])
    h = act(y)
    h = act(linear(h, w2_ref, b2_ref))
    h = act(linear(h, w3_ref, b3_ref))
    h = act(linear(h, w4_ref, b4_ref))
    h = act(linear(h, w5_ref, b5_ref))
    o_ref[...] = linear(h, w6_ref, b6_ref).astype(o_ref.dtype)


def prepare_params(params, prev_len, *, weight_dtype=jnp.bfloat16):
    """One-time param prep (call once, NOT per forward):
      - transpose PyTorch (out, in) weights to (in, out), cast to bf16
      - biases to f32 shape (1, out)
      - lane-pad the final layer to a multiple of 128
      - split W1 into prev/curr halves so the kernel needs no concat.
    Returns (flat_args, n_out, n_out_padded)."""
    n_out = params[-1][0].shape[0]
    n_out_p = _round_up(n_out, LANE)

    prepped = []
    for i, (w, b) in enumerate(params):
        wt = jnp.asarray(w).T.astype(weight_dtype)            # (in, out)
        bb = jnp.asarray(b).reshape(1, -1).astype(jnp.float32)
        if i == len(params) - 1 and n_out_p != n_out:
            wt = jnp.pad(wt, ((0, 0), (0, n_out_p - n_out)))
            bb = jnp.pad(bb, ((0, 0), (0, n_out_p - n_out)))
        prepped.append((wt, bb))

    w1, b1 = prepped[0]
    flat = [w1[:prev_len], w1[prev_len:], b1]
    for wt, bb in prepped[1:]:
        flat.extend([wt, bb])
    return tuple(flat), n_out, n_out_p


def basic_mlp_forward(prev_state, curr_weather, prepped, n_out, n_out_p,
                      *, batch_tile=1024, act_dtype=None):
    """prepped: output of prepare_params (already transposed / bf16 / padded)."""
    batch = prev_state.shape[0]
    prev_len = prev_state.shape[1]
    curr_len = curr_weather.shape[1]
    # TODO(synk): a zero-width prev/curr half would give a (0, 1024) weight
    #             block which Mosaic rejects; merge halves in that case.
    assert prev_len > 0 and curr_len > 0, "prev_len and curr_len must be > 0"

    if act_dtype is None:
        act_dtype = _act_dtype_for_device()

    # ---- batch tiling ------------------------------------------------------
    # Per-grid-step overhead is ~0.35 us, so use big tiles (cap 1024 rows,
    # peak VMEM ~18-20 MB).  Pick the number of tiles first, then size the
    # tile to the batch: this minimizes tail padding AND guarantees >=2 grid
    # steps whenever batch >= 16 so v7x's two TensorCores both get work.
    tb_cap = min(batch_tile, _round_up(batch, 8))
    nt = pl.cdiv(batch, tb_cap)
    if batch >= 16:
        nt = max(nt, 2)
    tb = _round_up(pl.cdiv(batch, nt), 8)     # multiple of 8 sublanes
    pb = nt * tb
    if pb != batch:
        pad = ((0, pb - batch), (0, 0))
        prev_state = jnp.pad(prev_state, pad)
        curr_weather = jnp.pad(curr_weather, pad)

    x_map = lambda i: (i, 0)        # batch-tiled inputs / output
    resident = lambda i: (0, 0)     # weights/biases: same block every step

    in_specs = [
        pl.BlockSpec((tb, prev_len), x_map),
        pl.BlockSpec((tb, curr_len), x_map),
    ] + [pl.BlockSpec(a.shape, resident) for a in prepped]

    # Advisory cost estimate: flops ~ 2*B*sum(K*N); bytes ~ weights + act I/O.
    dims = [prev_len + curr_len, 1024, 512, 512, 512, 512, n_out_p]
    flops = 2 * batch * sum(dims[i] * dims[i + 1] for i in range(len(dims) - 1))
    w_bytes = sum(int(a.size) * a.dtype.itemsize for a in prepped)
    io_bytes = (batch * (prev_len + curr_len) + batch * n_out_p) * 4
    cost = pl.CostEstimate(flops=flops, transcendentals=0,
                           bytes_accessed=w_bytes + io_bytes)

    out = pl.pallas_call(
        functools.partial(mlp_kernel, act_dtype=act_dtype),
        out_shape=jax.ShapeDtypeStruct((pb, n_out_p), jnp.float32),
        grid=(nt,),
        in_specs=in_specs,
        out_specs=pl.BlockSpec((tb, n_out_p), x_map),
        compiler_params=pltpu.CompilerParams(
            dimension_semantics=("parallel",),
            vmem_limit_bytes=32 << 20,
        ),
        cost_estimate=cost,
    )(prev_state, curr_weather, *prepped)

    return out[:batch, :n_out]


def init_params(key, prev_len, curr_len, n_out):
    """Deterministic init mimicking nn.Linear's U(-1/sqrt(fan_in), 1/sqrt(fan_in)).
    Weights kept in PyTorch layout (out_features, in_features)."""
    dims = [prev_len + curr_len, 1024, 512, 512, 512, 512, n_out]
    params = []
    for i in range(len(dims) - 1):
        fan_in, fan_out = dims[i], dims[i + 1]
        key, kw, kb = jax.random.split(key, 3)
        bound = 1.0 / jnp.sqrt(jnp.float32(fan_in))
        w = jax.random.uniform(kw, (fan_out, fan_in), jnp.float32, -bound, bound)
        b = jax.random.uniform(kb, (fan_out,), jnp.float32, -bound, bound)
        params.append((w, b))
    return params


def reference_forward(prev_state, curr_weather, params,
                      *, weight_dtype=jnp.bfloat16):
    """Pure-JAX reference mirroring the kernel's numerics (bf16 MXU inputs,
    f32 accumulation) for a tight correctness check."""
    h = jnp.concatenate([prev_state, curr_weather], axis=1)
    for i, (w, b) in enumerate(params):
        wt = w.T.astype(weight_dtype)
        h = jnp.dot(h.astype(weight_dtype), wt,
                    preferred_element_type=jnp.float32) + b
        if i < len(params) - 1:
            h = _leaky_relu(h)
    return h


if __name__ == "__main__":
    prev_len, curr_len, n_out = 8, 24, 4
    batch = 2

    key = jax.random.PRNGKey(0)
    kp, kc, kparams = jax.random.split(key, 3)

    prev_state = jax.random.normal(kp, (batch, prev_len), jnp.float32)
    curr_weather = jax.random.normal(kc, (batch, curr_len), jnp.float32)
    params = init_params(kparams, prev_len, curr_len, n_out)

    # One-time prep: transpose / bf16 cast / lane-pad (NOT per forward call).
    prepped, n_out_, n_out_p = prepare_params(params, prev_len)

    out = basic_mlp_forward(prev_state, curr_weather, prepped, n_out_, n_out_p)
    out = jax.block_until_ready(out)

    ref = reference_forward(prev_state, curr_weather, params)
    assert out.shape == (batch, n_out)
    assert jnp.allclose(out, ref, atol=1e-2, rtol=1e-2), "mismatch vs JAX reference"

    print("KERNEL_OK")
</pallas_src>

<mosaic_0001>
module attributes {stable_mosaic.version = 11 : i64} {
  func.func @mlp_kernel(%arg0: i32, %arg1: memref<8x8xf32, #tpu.memory_space<vmem>>, %arg2: memref<8x24xf32, #tpu.memory_space<vmem>>, %arg3: memref<8x1024xbf16, #tpu.memory_space<vmem>>, %arg4: memref<24x1024xbf16, #tpu.memory_space<vmem>>, %arg5: memref<1x1024xf32, #tpu.memory_space<vmem>>, %arg6: memref<1024x512xbf16, #tpu.memory_space<vmem>>, %arg7: memref<1x512xf32, #tpu.memory_space<vmem>>, %arg8: memref<512x512xbf16, #tpu.memory_space<vmem>>, %arg9: memref<1x512xf32, #tpu.memory_space<vmem>>, %arg10: memref<512x512xbf16, #tpu.memory_space<vmem>>, %arg11: memref<1x512xf32, #tpu.memory_space<vmem>>, %arg12: memref<512x512xbf16, #tpu.memory_space<vmem>>, %arg13: memref<1x512xf32, #tpu.memory_space<vmem>>, %arg14: memref<512x128xbf16, #tpu.memory_space<vmem>>, %arg15: memref<1x128xf32, #tpu.memory_space<vmem>>, %arg16: memref<8x128xf32, #tpu.memory_space<vmem>>) attributes {dimension_semantics = [#tpu.dimension_semantics<parallel>], iteration_bounds = array<i64: 1>, scalar_prefetch = 0 : i64, scratch_operands = 0 : i64, tpu.core_type = #tpu.core_type<tc>, window_params = [{transform_indices = @transform_0, window_bounds = array<i64: 8, 8>}, {transform_indices = @transform_1, window_bounds = array<i64: 8, 24>}, {pipeline_mode = #tpu.pipeline_mode<synchronous>, transform_indices = @transform_2, window_bounds = array<i64: 8, 1024>}, {pipeline_mode = #tpu.pipeline_mode<synchronous>, transform_indices = @transform_3, window_bounds = array<i64: 24, 1024>}, {pipeline_mode = #tpu.pipeline_mode<synchronous>, transform_indices = @transform_4, window_bounds = array<i64: 1, 1024>}, {pipeline_mode = #tpu.pipeline_mode<synchronous>, transform_indices = @transform_5, window_bounds = array<i64: 1024, 512>}, {pipeline_mode = #tpu.pipeline_mode<synchronous>, transform_indices = @transform_6, window_bounds = array<i64: 1, 512>}, {pipeline_mode = #tpu.pipeline_mode<synchronous>, transform_indices = @transform_7, window_bounds = array<i64: 512, 512>}, {pipeline_mode = #tpu.pipeline_mode<synchronous>, transform_indices = @transform_8, window_bounds = array<i64: 1, 512>}, {pipeline_mode = #tpu.pipeline_mode<synchronous>, transform_indices = @transform_9, window_bounds = array<i64: 512, 512>}, {pipeline_mode = #tpu.pipeline_mode<synchronous>, transform_indices = @transform_10, window_bounds = array<i64: 1, 512>}, {pipeline_mode = #tpu.pipeline_mode<synchronous>, transform_indices = @transform_11, window_bounds = array<i64: 512, 512>}, {pipeline_mode = #tpu.pipeline_mode<synchronous>, transform_indices = @transform_12, window_bounds = array<i64: 1, 512>}, {pipeline_mode = #tpu.pipeline_mode<synchronous>, transform_indices = @transform_13, window_bounds = array<i64: 512, 128>}, {pipeline_mode = #tpu.pipeline_mode<synchronous>, transform_indices = @transform_14, window_bounds = array<i64: 1, 128>}, {transform_indices = @transform_15, window_bounds = array<i64: 8, 128>}]} {
    %c0 = arith.constant 0 : index
    %c0_0 = arith.constant 0 : index
    %0 = vector.load %arg1[%c0, %c0_0] : memref<8x8xf32, #tpu.memory_space<vmem>>, vector<8x8xf32>
    %1 = arith.truncf %0 : vector<8x8xf32> to vector<8x8xbf16>
    %c0_1 = arith.constant 0 : index
    %c0_2 = arith.constant 0 : index
    %2 = vector.load %arg3[%c0_1, %c0_2] : memref<8x1024xbf16, #tpu.memory_space<vmem>>, vector<8x1024xbf16>
    %cst = arith.constant dense<0.000000e+00> : vector<8x1024xf32>
    %3 = tpu.matmul %1, %2, %cst {dimension_numbers = #tpu.dot_dimension_numbers<[1], [0], [0], [1], [0, 0, 1, 1], [], []>} : vector<8x8xbf16>, vector<8x1024xbf16>, vector<8x1024xf32> -> vector<8x1024xf32>
    %c0_3 = arith.constant 0 : index
    %c0_4 = arith.constant 0 : index
    %4 = vector.load %arg2[%c0_3, %c0_4] : memref<8x24xf32, #tpu.memory_space<vmem>>, vector<8x24xf32>
    %5 = arith.truncf %4 : vector<8x24xf32> to vector<8x24xbf16>
    %c0_5 = arith.constant 0 : index
    %c0_6 = arith.constant 0 : index
    %6 = vector.load %arg4[%c0_5, %c0_6] : memref<24x1024xbf16, #tpu.memory_space<vmem>>, vector<24x1024xbf16>
    %cst_7 = arith.constant dense<0.000000e+00> : vector<8x1024xf32>
    %7 = tpu.matmul %5, %6, %cst_7 {dimension_numbers = #tpu.dot_dimension_numbers<[1], [0], [0], [1], [0, 0, 1, 1], [], []>} : vector<8x24xbf16>, vector<24x1024xbf16>, vector<8x1024xf32> -> vector<8x1024xf32>
    %8 = arith.addf %3, %7 : vector<8x1024xf32>
    %c0_8 = arith.constant 0 : index
    %c0_9 = arith.constant 0 : index
    %9 = vector.load %arg5[%c0_8, %c0_9] : memref<1x1024xf32, #tpu.memory_space<vmem>>, vector<1x1024xf32>
    %10 = vector.broadcast %9 : vector<1x1024xf32> to vector<8x1024xf32>
    %11 = arith.addf %8, %10 : vector<8x1024xf32>
    %cst_10 = arith.constant 0.00999999977 : f32
    %12 = vector.broadcast %cst_10 : f32 to vector<8x1024xf32>
    %13 = arith.mulf %12, %11 : vector<8x1024xf32>
    %14 = arith.maximumf %11, %13 : vector<8x1024xf32>
    %15 = arith.truncf %14 : vector<8x1024xf32> to vector<8x1024xbf16>
    %c0_11 = arith.constant 0 : index
    %c0_12 = arith.constant 0 : index
    %16 = vector.load %arg6[%c0_11, %c0_12] : memref<1024x512xbf16, #tpu.memory_space<vmem>>, vector<1024x512xbf16>
    %cst_13 = arith.constant dense<0.000000e+00> : vector<8x512xf32>
    %17 = tpu.matmul %15, %16, %cst_13 {dimension_numbers = #tpu.dot_dimension_numbers<[1], [0], [0], [1], [0, 0, 1, 1], [], []>} : vector<8x1024xbf16>, vector<1024x512xbf16>, vector<8x512xf32> -> vector<8x512xf32>
    %c0_14 = arith.constant 0 : index
    %c0_15 = arith.constant 0 : index
    %18 = vector.load %arg7[%c0_14, %c0_15] : memref<1x512xf32, #tpu.memory_space<vmem>>, vector<1x512xf32>
    %19 = vector.broadcast %18 : vector<1x512xf32> to vector<8x512xf32>
    %20 = arith.addf %17, %19 : vector<8x512xf32>
    %cst_16 = arith.constant 0.00999999977 : f32
    %21 = vector.broadcast %cst_16 : f32 to vector<8x512xf32>
    %22 = arith.mulf %21, %20 : vector<8x512xf32>
    %23 = arith.maximumf %20, %22 : vector<8x512xf32>
    %24 = arith.truncf %23 : vector<8x512xf32> to vector<8x512xbf16>
    %c0_17 = arith.constant 0 : index
    %c0_18 = arith.constant 0 : index
    %25 = vector.load %arg8[%c0_17, %c0_18] : memref<512x512xbf16, #tpu.memory_space<vmem>>, vector<512x512xbf16>
    %cst_19 = arith.constant dense<0.000000e+00> : vector<8x512xf32>
    %26 = tpu.matmul %24, %25, %cst_19 {dimension_numbers = #tpu.dot_dimension_numbers<[1], [0], [0], [1], [0, 0, 1, 1], [], []>} : vector<8x512xbf16>, vector<512x512xbf16>, vector<8x512xf32> -> vector<8x512xf32>
    %c0_20 = arith.constant 0 : index
    %c0_21 = arith.constant 0 : index
    %27 = vector.load %arg9[%c0_20, %c0_21] : memref<1x512xf32, #tpu.memory_space<vmem>>, vector<1x512xf32>
    %28 = vector.broadcast %27 : vector<1x512xf32> to vector<8x512xf32>
    %29 = arith.addf %26, %28 : vector<8x512xf32>
    %cst_22 = arith.constant 0.00999999977 : f32
    %30 = vector.broadcast %cst_22 : f32 to vector<8x512xf32>
    %31 = arith.mulf %30, %29 : vector<8x512xf32>
    %32 = arith.maximumf %29, %31 : vector<8x512xf32>
    %33 = arith.truncf %32 : vector<8x512xf32> to vector<8x512xbf16>
    %c0_23 = arith.constant 0 : index
    %c0_24 = arith.constant 0 : index
    %34 = vector.load %arg10[%c0_23, %c0_24] : memref<512x512xbf16, #tpu.memory_space<vmem>>, vector<512x512xbf16>
    %cst_25 = arith.constant dense<0.000000e+00> : vector<8x512xf32>
    %35 = tpu.matmul %33, %34, %cst_25 {dimension_numbers = #tpu.dot_dimension_numbers<[1], [0], [0], [1], [0, 0, 1, 1], [], []>} : vector<8x512xbf16>, vector<512x512xbf16>, vector<8x512xf32> -> vector<8x512xf32>
    %c0_26 = arith.constant 0 : index
    %c0_27 = arith.constant 0 : index
    %36 = vector.load %arg11[%c0_26, %c0_27] : memref<1x512xf32, #tpu.memory_space<vmem>>, vector<1x512xf32>
    %37 = vector.broadcast %36 : vector<1x512xf32> to vector<8x512xf32>
    %38 = arith.addf %35, %37 : vector<8x512xf32>
    %cst_28 = arith.constant 0.00999999977 : f32
    %39 = vector.broadcast %cst_28 : f32 to vector<8x512xf32>
    %40 = arith.mulf %39, %38 : vector<8x512xf32>
    %41 = arith.maximumf %38, %40 : vector<8x512xf32>
    %42 = arith.truncf %41 : vector<8x512xf32> to vector<8x512xbf16>
    %c0_29 = arith.constant 0 : index
    %c0_30 = arith.constant 0 : index
    %43 = vector.load %arg12[%c0_29, %c0_30] : memref<512x512xbf16, #tpu.memory_space<vmem>>, vector<512x512xbf16>
    %cst_31 = arith.constant dense<0.000000e+00> : vector<8x512xf32>
    %44 = tpu.matmul %42, %43, %cst_31 {dimension_numbers = #tpu.dot_dimension_numbers<[1], [0], [0], [1], [0, 0, 1, 1], [], []>} : vector<8x512xbf16>, vector<512x512xbf16>, vector<8x512xf32> -> vector<8x512xf32>
    %c0_32 = arith.constant 0 : index
    %c0_33 = arith.constant 0 : index
    %45 = vector.load %arg13[%c0_32, %c0_33] : memref<1x512xf32, #tpu.memory_space<vmem>>, vector<1x512xf32>
    %46 = vector.broadcast %45 : vector<1x512xf32> to vector<8x512xf32>
    %47 = arith.addf %44, %46 : vector<8x512xf32>
    %cst_34 = arith.constant 0.00999999977 : f32
    %48 = vector.broadcast %cst_34 : f32 to vector<8x512xf32>
    %49 = arith.mulf %48, %47 : vector<8x512xf32>
    %50 = arith.maximumf %47, %49 : vector<8x512xf32>
    %51 = arith.truncf %50 : vector<8x512xf32> to vector<8x512xbf16>
    %c0_35 = arith.constant 0 : index
    %c0_36 = arith.constant 0 : index
    %52 = vector.load %arg14[%c0_35, %c0_36] : memref<512x128xbf16, #tpu.memory_space<vmem>>, vector<512x128xbf16>
    %cst_37 = arith.constant dense<0.000000e+00> : vector<8x128xf32>
    %53 = tpu.matmul %51, %52, %cst_37 {dimension_numbers = #tpu.dot_dimension_numbers<[1], [0], [0], [1], [0, 0, 1, 1], [], []>} : vector<8x512xbf16>, vector<512x128xbf16>, vector<8x128xf32> -> vector<8x128xf32>
    %c0_38 = arith.constant 0 : index
    %c0_39 = arith.constant 0 : index
    %54 = vector.load %arg15[%c0_38, %c0_39] : memref<1x128xf32, #tpu.memory_space<vmem>>, vector<1x128xf32>
    %55 = vector.broadcast %54 : vector<1x128xf32> to vector<8x128xf32>
    %56 = arith.addf %53, %55 : vector<8x128xf32>
    %c0_40 = arith.constant 0 : index
    %c0_41 = arith.constant 0 : index
    %57 = vector.load %arg16[%c0_40, %c0_41] : memref<8x128xf32, #tpu.memory_space<vmem>>, vector<8x128xf32>
    tpu.vector_store %arg16[%c0_40, %c0_41], %56 {strides = array<i32>} : memref<8x128xf32, #tpu.memory_space<vmem>>, vector<8x128xf32>,
    return
  }
  func.func @transform_0(%arg0: i32) -> (i32, i32) {
    %c0_i32 = arith.constant 0 : i32
    %c0_i32_0 = arith.constant 0 : i32
    return %arg0, %c0_i32 : i32, i32
  }
  func.func @transform_1(%arg0: i32) -> (i32, i32) {
    %c0_i32 = arith.constant 0 : i32
    %c0_i32_0 = arith.constant 0 : i32
    return %arg0, %c0_i32 : i32, i32
  }
  func.func @transform_2(%arg0: i32) -> (i32, i32) {
    %c0_i32 = arith.constant 0 : i32
    %c0_i32_0 = arith.constant 0 : i32
    %c0_i32_1 = arith.constant 0 : i32
    return %c0_i32, %c0_i32_0 : i32, i32
  }
  func.func @transform_3(%arg0: i32) -> (i32, i32) {
    %c0_i32 = arith.constant 0 : i32
    %c0_i32_0 = arith.constant 0 : i32
    %c0_i32_1 = arith.constant 0 : i32
    return %c0_i32, %c0_i32_0 : i32, i32
  }
  func.func @transform_4(%arg0: i32) -> (i32, i32) {
    %c0_i32 = arith.constant 0 : i32
    %c0_i32_0 = arith.constant 0 : i32
    %c0_i32_1 = arith.constant 0 : i32
    return %c0_i32, %c0_i32_0 : i32, i32
  }
  func.func @transform_5(%arg0: i32) -> (i32, i32) {
    %c0_i32 = arith.constant 0 : i32
    %c0_i32_0 = arith.constant 0 : i32
    %c0_i32_1 = arith.constant 0 : i32
    return %c0_i32, %c0_i32_0 : i32, i32
  }
  func.func @transform_6(%arg0: i32) -> (i32, i32) {
    %c0_i32 = arith.constant 0 : i32
    %c0_i32_0 = arith.constant 0 : i32
    %c0_i32_1 = arith.constant 0 : i32
    return %c0_i32, %c0_i32_0 : i32, i32
  }
  func.func @transform_7(%arg0: i32) -> (i32, i32) {
    %c0_i32 = arith.constant 0 : i32
    %c0_i32_0 = arith.constant 0 : i32
    %c0_i32_1 = arith.constant 0 : i32
    return %c0_i32, %c0_i32_0 : i32, i32
  }
  func.func @transform_8(%arg0: i32) -> (i32, i32) {
    %c0_i32 = arith.constant 0 : i32
    %c0_i32_0 = arith.constant 0 : i32
    %c0_i32_1 = arith.constant 0 : i32
    return %c0_i32, %c0_i32_0 : i32, i32
  }
  func.func @transform_9(%arg0: i32) -> (i32, i32) {
    %c0_i32 = arith.constant 0 : i32
    %c0_i32_0 = arith.constant 0 : i32
    %c0_i32_1 = arith.constant 0 : i32
    return %c0_i32, %c0_i32_0 : i32, i32
  }
  func.func @transform_10(%arg0: i32) -> (i32, i32) {
    %c0_i32 = arith.constant 0 : i32
    %c0_i32_0 = arith.constant 0 : i32
    %c0_i32_1 = arith.constant 0 : i32
    return %c0_i32, %c0_i32_0 : i32, i32
  }
  func.func @transform_11(%arg0: i32) -> (i32, i32) {
    %c0_i32 = arith.constant 0 : i32
    %c0_i32_0 = arith.constant 0 : i32
    %c0_i32_1 = arith.constant 0 : i32
    return %c0_i32, %c0_i32_0 : i32, i32
  }
  func.func @transform_12(%arg0: i32) -> (i32, i32) {
    %c0_i32 = arith.constant 0 : i32
    %c0_i32_0 = arith.constant 0 : i32
    %c0_i32_1 = arith.constant 0 : i32
    return %c0_i32, %c0_i32_0 : i32, i32
  }
  func.func @transform_13(%arg0: i32) -> (i32, i32) {
    %c0_i32 = arith.constant 0 : i32
    %c0_i32_0 = arith.constant 0 : i32
    %c0_i32_1 = arith.constant 0 : i32
    return %c0_i32, %c0_i32_0 : i32, i32
  }
  func.func @transform_14(%arg0: i32) -> (i32, i32) {
    %c0_i32 = arith.constant 0 : i32
    %c0_i32_0 = arith.constant 0 : i32
    %c0_i32_1 = arith.constant 0 : i32
    return %c0_i32, %c0_i32_0 : i32, i32
  }
  func.func @transform_15(%arg0: i32) -> (i32, i32) {
    %c0_i32 = arith.constant 0 : i32
    %c0_i32_0 = arith.constant 0 : i32
    return %arg0, %c0_i32 : i32, i32
  }
}

</mosaic_0001>

<llo_original>
// kernel: tpu_custom_call.1
$region0: #{tpu_custom_call.1}
  #allocation0 [shape = 'u32[]', space=smem, size = 0x4, offset = 0x4, fixed_abs, tag = 'smem constant byte address 0x4 - core index']
  #allocation1 [shape = 'u32[144,128]{1,0:T(1,128)}', space=vmem, size = 0x12000, scoped, tag = 'internal scratch']
  %s0 = inlined_call_operand.hbm [shape: f32[8,8], index: 0, kind: input, shape index: {}]
  %s1 = inlined_call_operand.hbm [shape: f32[8,24], index: 1, kind: input, shape index: {}]
  %s2 = inlined_call_operand.hbm [shape: bf16[8,1024], index: 2, kind: input, shape index: {}]
  %s3 = inlined_call_operand.hbm [shape: bf16[24,1024], index: 3, kind: input, shape index: {}]
  %s4 = inlined_call_operand.vmem [shape: f32[1,1024], index: 4, kind: input, shape index: {}]
  %s5 = inlined_call_operand.hbm [shape: bf16[1024,512], index: 5, kind: input, shape index: {}]
  %s6 = inlined_call_operand.vmem [shape: f32[1,512], index: 6, kind: input, shape index: {}]
  %s7 = inlined_call_operand.hbm [shape: bf16[512,512], index: 7, kind: input, shape index: {}]
  %s8 = inlined_call_operand.vmem [shape: f32[1,512], index: 8, kind: input, shape index: {}]
  %s9 = inlined_call_operand.hbm [shape: bf16[512,512], index: 9, kind: input, shape index: {}]
  %s10 = inlined_call_operand.vmem [shape: f32[1,512], index: 10, kind: input, shape index: {}]
  %s11 = inlined_call_operand.hbm [shape: bf16[512,512], index: 11, kind: input, shape index: {}]
  %s12 = inlined_call_operand.vmem [shape: f32[1,512], index: 12, kind: input, shape index: {}]
  %s13 = inlined_call_operand.hbm [shape: bf16[512,128], index: 13, kind: input, shape index: {}]
  %s14 = inlined_call_operand.vmem [shape: f32[1,128], index: 14, kind: input, shape index: {}]
  %s15 = inlined_call_operand.hbm [shape: f32[8,128], index: 15, kind: output, shape index: {}]
  %s16 = sld [smem:[#allocation0]]
  $region106: #{tpu_custom_call.1} parent=0
    _
  %s18 = ssub.s32 1, %s16
  %s19 = scalar_select 0, %s18, %s16
  $region1: #{tpu_custom_call.1} parent=0
    #allocation2 [shape = 'u8[4096]{0}', space=vmem, size = 0x1000, scoped, tag = 'input window, operand 0, single buffered']
    #allocation3 [shape = 's32[1]{0}', space=sflag, size = 0x4, scoped, tag = 'scoped memory for tpu_custom_call.1']
    #allocation4 [shape = 's32[1]{0}', space=sflag, size = 0x4, scoped, tag = 'scoped memory for tpu_custom_call.1']
    #allocation5 [shape = 'u8[4096]{0}', space=vmem, size = 0x1000, scoped, tag = 'input window, operand 1, single buffered']
    #allocation6 [shape = 's32[1]{0}', space=sflag, size = 0x4, scoped, tag = 'scoped memory for tpu_custom_call.1']
    #allocation7 [shape = 'u8[16384]{0}', space=vmem, size = 0x4000, scoped, tag = 'input window, operand 2, single buffered']
    #allocation8 [shape = 'u8[49152]{0}', space=vmem, size = 0xc000, scoped, tag = 'input window, operand 3, single buffered']
    #allocation9 [shape = 's32[1]{0}', space=sflag, size = 0x4, scoped, tag = 'scoped memory for tpu_custom_call.1']
    #allocation10 [shape = 'u8[1048576]{0}', space=vmem, size = 0x100000, scoped, tag = 'input window, operand 5, single buffered']
    #allocation11 [shape = 'u8[524288]{0}', space=vmem, size = 0x80000, scoped, tag = 'input window, operand 7, single buffered']
    #allocation12 [shape = 's32[1]{0}', space=sflag, size = 0x4, scoped, tag = 'scoped memory for tpu_custom_call.1']
    #allocation13 [shape = 'u8[524288]{0}', space=vmem, size = 0x80000, scoped, tag = 'input window, operand 9, single buffered']
    #allocation14 [shape = 'u8[524288]{0}', space=vmem, size = 0x80000, scoped, tag = 'input window, operand 11, single buffered']
    #allocation15 [shape = 's32[1]{0}', space=sflag, size = 0x4, scoped, tag = 'scoped memory for tpu_custom_call.1']
    #allocation16 [shape = 'u8[131072]{0}', space=vmem, size = 0x20000, scoped, tag = 'input window, operand 13, single buffered']
    #allocation17 [shape = 'u8[4096]{0}', space=vmem, size = 0x1000, scoped, tag = 'output window, operand 0, single buffered']
    %20 = vsyncpa [#allocation3], 0
    %21 = vsyncpa [#allocation6], 0
    %22 = vsyncpa [#allocation9], 0
    %23 = vsyncpa [#allocation12], 0
    %24 = vsyncpa [#allocation15], 0
    %25 = vsyncpa [#allocation4], 0
    // Predicated region
    $region2: #{tpu_custom_call.1} parent=1 // pred_check
      _
    $region3: #{tpu_custom_call.1} parent=1 // pred_check_branch
      %27 = sbr.rel (0) target = $region5
    $region4: #{tpu_custom_call.1} parent=1 // pred_region
      %s29 = ssub.s32 128, 128
      %30 = vsyncadd [#allocation3], %s29
      %s32 = sshll.u32 [#allocation2], 4
      %s33 = int_to_ptr.vmem [resolvable:$true] %s32
      %35 = dma.hbm_to_vmem [thread:$0]  %s0, 128, %s33, [#allocation3]
    $region5: #{tpu_custom_call.1} parent=1 // pred_fallthru
      _
    // Predicated region
    $region6: #{tpu_custom_call.1} parent=1 // pred_check
      _
    $region7: #{tpu_custom_call.1} parent=1 // pred_check_branch
      %37 = sbr.rel (0) target = $region9
    $region8: #{tpu_custom_call.1} parent=1 // pred_region
      %s39 = ssub.s32 128, 128
      %40 = vsyncadd [#allocation6], %s39
      %s42 = sshll.u32 [#allocation5], 4
      %s43 = int_to_ptr.vmem [resolvable:$true] %s42
      %45 = dma.hbm_to_vmem [thread:$0]  %s1, 128, %s43, [#allocation6]
    $region9: #{tpu_custom_call.1} parent=1 // pred_fallthru
      _
    // Predicated region
    $region10: #{tpu_custom_call.1} parent=1 // pred_check
      _
    $region11: #{tpu_custom_call.1} parent=1 // pred_check_branch
      %47 = sbr.rel (0) target = $region13
    $region12: #{tpu_custom_call.1} parent=1 // pred_region
      %s49 = ssub.s32 512, 512
      %50 = vsyncadd [#allocation6], %s49
      %s52 = sshll.u32 [#allocation7], 4
      %s53 = int_to_ptr.vmem [resolvable:$true] %s52
      %55 = dma.hbm_to_vmem [thread:$0]  %s2, 512, %s53, [#allocation6]
    $region13: #{tpu_custom_call.1} parent=1 // pred_fallthru
      _
    // Predicated region
    $region14: #{tpu_custom_call.1} parent=1 // pred_check
      _
    $region15: #{tpu_custom_call.1} parent=1 // pred_check_branch
      %57 = sbr.rel (0) target = $region17
    $region16: #{tpu_custom_call.1} parent=1 // pred_region
      %s59 = ssub.s32 1536, 1536
      %60 = vsyncadd [#allocation9], %s59
      %s61 = sshll.u32 [#allocation8], 4
      %s62 = int_to_ptr.vmem [resolvable:$true] %s61
      %67 = dma.hbm_to_vmem [thread:$0]  %s3, 1536, %s62, [#allocation9], 512, 512, 32
    $region17: #{tpu_custom_call.1} parent=1 // pred_fallthru
      _
    // Predicated region
    $region18: #{tpu_custom_call.1} parent=1 // pred_check
      _
    $region19: #{tpu_custom_call.1} parent=1 // pred_check_branch
      %69 = sbr.rel (0) target = $region21
    $region20: #{tpu_custom_call.1} parent=1 // pred_region
      _
    $region21: #{tpu_custom_call.1} parent=1 // pred_fallthru
      _
    // Predicated region
    $region22: #{tpu_custom_call.1} parent=1 // pred_check
      _
    $region23: #{tpu_custom_call.1} parent=1 // pred_check_branch
      %71 = sbr.rel (0) target = $region25
    $region24: #{tpu_custom_call.1} parent=1 // pred_region
      %s73 = ssub.s32 32768, 32768
      %74 = vsyncadd [#allocation9], %s73
      %s75 = sshll.u32 [#allocation10], 4
      %s76 = int_to_ptr.vmem [resolvable:$true] %s75
      %81 = dma.hbm_to_vmem [thread:$0]  %s5, 32768, %s76, [#allocation9], 256, 256, 16
    $region25: #{tpu_custom_call.1} parent=1 // pred_fallthru
      _
    // Predicated region
    $region26: #{tpu_custom_call.1} parent=1 // pred_check
      _
    $region27: #{tpu_custom_call.1} parent=1 // pred_check_branch
      %83 = sbr.rel (0) target = $region29
    $region28: #{tpu_custom_call.1} parent=1 // pred_region
      _
    $region29: #{tpu_custom_call.1} parent=1 // pred_fallthru
      _
    // Predicated region
    $region30: #{tpu_custom_call.1} parent=1 // pred_check
      _
    $region31: #{tpu_custom_call.1} parent=1 // pred_check_branch
      %85 = sbr.rel (0) target = $region33
    $region32: #{tpu_custom_call.1} parent=1 // pred_region
      %s87 = ssub.s32 16384, 16384
      %88 = vsyncadd [#allocation12], %s87
      %s89 = sshll.u32 [#allocation11], 4
      %s90 = int_to_ptr.vmem [resolvable:$true] %s89
      %95 = dma.hbm_to_vmem [thread:$0]  %s7, 16384, %s90, [#allocation12], 256, 256, 16
    $region33: #{tpu_custom_call.1} parent=1 // pred_fallthru
      _
    // Predicated region
    $region34: #{tpu_custom_call.1} parent=1 // pred_check
      _
    $region35: #{tpu_custom_call.1} parent=1 // pred_check_branch
      %97 = sbr.rel (0) target = $region37
    $region36: #{tpu_custom_call.1} parent=1 // pred_region
      _
    $region37: #{tpu_custom_call.1} parent=1 // pred_fallthru
      _
    // Predicated region
    $region38: #{tpu_custom_call.1} parent=1 // pred_check
      _
    $region39: #{tpu_custom_call.1} parent=1 // pred_check_branch
      %99 = sbr.rel (0) target = $region41
    $region40: #{tpu_custom_call.1} parent=1 // pred_region
      %s101 = ssub.s32 16384, 16384
      %102 = vsyncadd [#allocation12], %s101
      %s103 = sshll.u32 [#allocation13], 4
      %s104 = int_to_ptr.vmem [resolvable:$true] %s103
      %109 = dma.hbm_to_vmem [thread:$0]  %s9, 16384, %s104, [#allocation12], 256, 256, 16
    $region41: #{tpu_custom_call.1} parent=1 // pred_fallthru
      _
    // Predicated region
    $region42: #{tpu_custom_call.1} parent=1 // pred_check
      _
    $region43: #{tpu_custom_call.1} parent=1 // pred_check_branch
      %111 = sbr.rel (0) target = $region45
    $region44: #{tpu_custom_call.1} parent=1 // pred_region
      _
    $region45: #{tpu_custom_call.1} parent=1 // pred_fallthru
      _
    // Predicated region
    $region46: #{tpu_custom_call.1} parent=1 // pred_check
      _
    $region47: #{tpu_custom_call.1} parent=1 // pred_check_branch
      %113 = sbr.rel (0) target = $region49
    $region48: #{tpu_custom_call.1} parent=1 // pred_region
      %s115 = ssub.s32 16384, 16384
      %116 = vsyncadd [#allocation15], %s115
      %s117 = sshll.u32 [#allocation14], 4
      %s118 = int_to_ptr.vmem [resolvable:$true] %s117
      %123 = dma.hbm_to_vmem [thread:$0]  %s11, 16384, %s118, [#allocation15], 256, 256, 16
    $region49: #{tpu_custom_call.1} parent=1 // pred_fallthru
      _
    // Predicated region
    $region50: #{tpu_custom_call.1} parent=1 // pred_check
      _
    $region51: #{tpu_custom_call.1} parent=1 // pred_check_branch
      %125 = sbr.rel (0) target = $region53
    $region52: #{tpu_custom_call.1} parent=1 // pred_region
      _
    $region53: #{tpu_custom_call.1} parent=1 // pred_fallthru
      _
    // Predicated region
    $region54: #{tpu_custom_call.1} parent=1 // pred_check
      _
    $region55: #{tpu_custom_call.1} parent=1 // pred_check_branch
      %127 = sbr.rel (0) target = $region57
    $region56: #{tpu_custom_call.1} parent=1 // pred_region
      %s129 = ssub.s32 4096, 4096
      %130 = vsyncadd [#allocation15], %s129
      %s131 = sshll.u32 [#allocation16], 4
      %s132 = int_to_ptr.vmem [resolvable:$true] %s131
      %137 = dma.hbm_to_vmem [thread:$0]  %s13, 4096, %s132, [#allocation15], 64, 64, 4
    $region57: #{tpu_custom_call.1} parent=1 // pred_fallthru
      _
    // Predicated region
    $region58: #{tpu_custom_call.1} parent=1 // pred_check
      _
    $region59: #{tpu_custom_call.1} parent=1 // pred_check_branch
      %139 = sbr.rel (0) target = $region61
    $region60: #{tpu_custom_call.1} parent=1 // pred_region
      _
    $region61: #{tpu_custom_call.1} parent=1 // pred_fallthru
      _
    // Predicated region
    $region62: #{tpu_custom_call.1} parent=1 // pred_check
      _
    $region63: #{tpu_custom_call.1} parent=1 // pred_check_branch
      %141 = sbr.rel (0) target = $region65
    $region64: #{tpu_custom_call.1} parent=1 // pred_region
      %142 = dma.done [#allocation3], 128
    $region65: #{tpu_custom_call.1} parent=1 // pred_fallthru
      _
    // Predicated region
    $region66: #{tpu_custom_call.1} parent=1 // pred_check
      _
    $region67: #{tpu_custom_call.1} parent=1 // pred_check_branch
      %144 = sbr.rel (0) target = $region69
    $region68: #{tpu_custom_call.1} parent=1 // pred_region
      %145 = dma.done [#allocation6], 128
    $region69: #{tpu_custom_call.1} parent=1 // pred_fallthru
      _
    // Predicated region
    $region70: #{tpu_custom_call.1} parent=1 // pred_check
      _
    $region71: #{tpu_custom_call.1} parent=1 // pred_check_branch
      %147 = sbr.rel (0) target = $region73
    $region72: #{tpu_custom_call.1} parent=1 // pred_region
      %148 = dma.done [#allocation6], 512
    $region73: #{tpu_custom_call.1} parent=1 // pred_fallthru
      _
    // Predicated region
    $region74: #{tpu_custom_call.1} parent=1 // pred_check
      _
    $region75: #{tpu_custom_call.1} parent=1 // pred_check_branch
      %150 = sbr.rel (0) target = $region77
    $region76: #{tpu_custom_call.1} parent=1 // pred_region
      %151 = dma.done [#allocation9], 1536
    $region77: #{tpu_custom_call.1} parent=1 // pred_fallthru
      _
    // Predicated region
    $region78: #{tpu_custom_call.1} parent=1 // pred_check
      _
    $region79: #{tpu_custom_call.1} parent=1 // pred_check_branch
      %153 = sbr.rel (0) target = $region81
    $region80: #{tpu_custom_call.1} parent=1 // pred_region
      %154 = dma.done [#allocation9], 32768
    $region81: #{tpu_custom_call.1} parent=1 // pred_fallthru
      _
    // Predicated region
    $region82: #{tpu_custom_call.1} parent=1 // pred_check
      _
    $region83: #{tpu_custom_call.1} parent=1 // pred_check_branch
      %156 = sbr.rel (0) target = $region85
    $region84: #{tpu_custom_call.1} parent=1 // pred_region
      %157 = dma.done [#allocation12], 16384
    $region85: #{tpu_custom_call.1} parent=1 // pred_fallthru
      _
    // Predicated region
    $region86: #{tpu_custom_call.1} parent=1 // pred_check
      _
    $region87: #{tpu_custom_call.1} parent=1 // pred_check_branch
      %159 = sbr.rel (0) target = $region89
    $region88: #{tpu_custom_call.1} parent=1 // pred_region
      %160 = dma.done [#allocation12], 16384
    $region89: #{tpu_custom_call.1} parent=1 // pred_fallthru
      _
    // Predicated region
    $region90: #{tpu_custom_call.1} parent=1 // pred_check
      _
    $region91: #{tpu_custom_call.1} parent=1 // pred_check_branch
      %162 = sbr.rel (0) target = $region93
    $region92: #{tpu_custom_call.1} parent=1 // pred_region
      %163 = dma.done [#allocation15], 16384
    $region93: #{tpu_custom_call.1} parent=1 // pred_fallthru
      _
    // Predicated region
    $region94: #{tpu_custom_call.1} parent=1 // pred_check
      _
    $region95: #{tpu_custom_call.1} parent=1 // pred_check_branch
      %165 = sbr.rel (0) target = $region97
    $region96: #{tpu_custom_call.1} parent=1 // pred_region
      %166 = dma.done [#allocation15], 4096
    $region97: #{tpu_custom_call.1} parent=1 // pred_fallthru
      _
    %v168 = vld [vmem:[#allocation2] sm:$0xff]
    %v169 = vpack.c.bf16 %v168, %v168
    %v170 = vld [vmem:[#allocation7] sm:$0xff]
    %v171 = vld [vmem:[#allocation7 + $0x8] sm:$0xff]
    %v172 = vld [vmem:[#allocation7 + $0x10] sm:$0xff]
    %v173 = vld [vmem:[#allocation7 + $0x18] sm:$0xff]
    %v174 = vld [vmem:[#allocation5] sm:$0xff]
    %v175 = vpack.c.bf16 %v174, %v174
    %v176 = vld [vmem:[#allocation8] sm:$0xff]
    %v177 = vld [vmem:[#allocation8 + $0x8] sm:$0xff]
    %v178 = vld [vmem:[#allocation8 + $0x10] sm:$0xff]
    %v179 = vld [vmem:[#allocation8 + $0x18] sm:$0xff]
    %v180 = vld [vmem:[#allocation8 + $0x20] sm:$0xff]
    %v181 = vld [vmem:[#allocation8 + $0x28] sm:$0xff]
    %v182 = vld [vmem:[#allocation8 + $0x30] sm:$0xff]
    %v183 = vld [vmem:[#allocation8 + $0x38] sm:$0xff]
    %v184 = vld [vmem:[#allocation8 + $0x40] sm:$0xff]
    %v185 = vld [vmem:[#allocation8 + $0x48] sm:$0xff]
    %v186 = vld [vmem:[#allocation8 + $0x50] sm:$0xff]
    %v187 = vld [vmem:[#allocation8 + $0x58] sm:$0xff]
    %v200 = vunpack.c.l.b16 %v176
    %v201 = vunpack.c.h.b16 %v176
    %v202 = vunpack.c.l.b16 %v177
    %v203 = vunpack.c.h.b16 %v177
    %v204 = vunpack.c.l.b16 %v178
    %v205 = vunpack.c.h.b16 %v178
    %v206 = vunpack.c.l.b16 %v179
    %v207 = vunpack.c.h.b16 %v179
    %v208 = vunpack.c.l.b16 %v180
    %v209 = vunpack.c.h.b16 %v180
    %v210 = vunpack.c.l.b16 %v181
    %v211 = vunpack.c.h.b16 %v181
    %v212 = vunpack.c.l.b16 %v182
    %v213 = vunpack.c.h.b16 %v182
    %v214 = vunpack.c.l.b16 %v183
    %v215 = vunpack.c.h.b16 %v183
    %v216 = vunpack.c.l.b16 %v184
    %v217 = vunpack.c.h.b16 %v184
    %v218 = vunpack.c.l.b16 %v185
    %v219 = vunpack.c.h.b16 %v185
    %v220 = vunpack.c.l.b16 %v186
    %v221 = vunpack.c.h.b16 %v186
    %v222 = vunpack.c.l.b16 %v187
    %v223 = vunpack.c.h.b16 %v187
    %v224 = vpack.c.b16 %v208, %v200
    %v225 = vpack.c.b16 %v209, %v201
    %v226 = vpack.c.b16 %v210, %v202
    %v227 = vpack.c.b16 %v211, %v203
    %v228 = vpack.c.b16 %v212, %v204
    %v229 = vpack.c.b16 %v213, %v205
    %v230 = vpack.c.b16 %v214, %v206
    %v231 = vpack.c.b16 %v215, %v207
    %v232 = vpack.c.b16 %v216, %v216
    %v233 = vpack.c.b16 %v217, %v217
    %v234 = vpack.c.b16 %v218, %v218
    %v235 = vpack.c.b16 %v219, %v219
    %v236 = vpack.c.b16 %v220, %v220
    %v237 = vpack.c.b16 %v221, %v221
    %v238 = vpack.c.b16 %v222, %v222
    %v239 = vpack.c.b16 %v223, %v223
    %vm248 = vcmask 195584
    %v250 = vsel %vm248, %v175, 0
    %vm252 = vcmask 1043456
    %v254 = vsel %vm252, %v232, 0
    %v257 = vsel %vm252, %v233, 0
    %v260 = vsel %vm252, %v234, 0
    %v263 = vsel %vm252, %v235, 0
    %v266 = vsel %vm252, %v236, 0
    %v269 = vsel %vm252, %v237, 0
    %v272 = vsel %vm252, %v238, 0
    %v275 = vsel %vm252, %v239, 0
    %277 = vmatprep.subr.bf16.mxu0 %v225
    %278 = vmatpush1.bf16.msra.mxu0 %v224
    %279 = vmatprep.subr.bf16.mxu0 %v257
    %280 = vmatpush1.bf16.msra.mxu0 %v254
    %281 = vmatprep.subr.bf16.mxu0 0
    %282 = vmatpush1.bf16.msra.mxu0 0
    %283 = vmatprep.subr.bf16.mxu0 0
    %284 = vmatpush1.bf16.msra.mxu0 0
    %285 = vmatprep.subr.bf16.mxu0 0
    %286 = vmatpush1.bf16.msra.mxu0 0
    %287 = vmatprep.subr.bf16.mxu0 0
    %288 = vmatpush1.bf16.msra.mxu0 0
    %289 = vmatprep.subr.bf16.mxu0 0
    %290 = vmatpush1.bf16.msra.mxu0 0
    %291 = vmatprep.subr.bf16.mxu0 0
    %292 = vmatpush1.bf16.msra.mxu0 0
    %293 = vmatprep.subr.bf16.mxu0 0
    %294 = vmatpush1.bf16.msra.mxu0 0
    %295 = vmatprep.subr.bf16.mxu0 0
    %296 = vmatpush1.bf16.msra.mxu0 0
    %297 = vmatprep.subr.bf16.mxu0 0
    %298 = vmatpush1.bf16.msra.mxu0 0
    %299 = vmatprep.subr.bf16.mxu0 0
    %300 = vmatpush1.bf16.msra.mxu0 0
    %301 = vmatprep.subr.bf16.mxu0 0
    %302 = vmatpush1.bf16.msra.mxu0 0
    %303 = vmatprep.subr.bf16.mxu0 0
    %304 = vmatpush1.bf16.msra.mxu0 0
    %305 = vmatprep.subr.bf16.mxu0 0
    %306 = vmatpush1.bf16.msra.mxu0 0
    %307 = vmatprep.subr.bf16.mxu0 0
    %308 = vmatpush1.bf16.msra.mxu0 0
    %309 = vmatprep.mubr.bf16.mxu0 0
    %310 = vmatmul.mubr.bf16.gmra.mrb[0].mxu0 %v250
    %v311 = vpop.f32.mrb[0].mxu0
    %v312 = vadd.f32 0.0, %v311
    %v313 = vpop.f32.mrb[0].mxu0
    %v314 = vadd.f32 0.0, %v313
    %v315 = vpop.f32.mrb[0].mxu0
    %v316 = vpop.f32.mrb[0].mxu0
    %317 = vdwg.mxu0
    %318 = vmatprep.subr.bf16.mxu0 %v227
    %319 = vmatpush1.bf16.msra.mxu0 %v226
    %320 = vmatprep.subr.bf16.mxu0 %v263
    %321 = vmatpush1.bf16.msra.mxu0 %v260
    %322 = vmatprep.subr.bf16.mxu0 0
    %323 = vmatpush1.bf16.msra.mxu0 0
    %324 = vmatprep.subr.bf16.mxu0 0
    %325 = vmatpush1.bf16.msra.mxu0 0
    %326 = vmatprep.subr.bf16.mxu0 0
    %327 = vmatpush1.bf16.msra.mxu0 0
    %328 = vmatprep.subr.bf16.mxu0 0
    %329 = vmatpush1.bf16.msra.mxu0 0
    %330 = vmatprep.subr.bf16.mxu0 0
    %331 = vmatpush1.bf16.msra.mxu0 0
    %332 = vmatprep.subr.bf16.mxu0 0
    %333 = vmatpush1.bf16.msra.mxu0 0
    %334 = vmatprep.subr.bf16.mxu0 0
    %335 = vmatpush1.bf16.msra.mxu0 0
    %336 = vmatprep.subr.bf16.mxu0 0
    %337 = vmatpush1.bf16.msra.mxu0 0
    %338 = vmatprep.subr.bf16.mxu0 0
    %339 = vmatpush1.bf16.msra.mxu0 0
    %340 = vmatprep.subr.bf16.mxu0 0
    %341 = vmatpush1.bf16.msra.mxu0 0
    %342 = vmatprep.subr.bf16.mxu0 0
    %343 = vmatpush1.bf16.msra.mxu0 0
    %344 = vmatprep.subr.bf16.mxu0 0
    %345 = vmatpush1.bf16.msra.mxu0 0
    %346 = vmatprep.subr.bf16.mxu0 0
    %347 = vmatpush1.bf16.msra.mxu0 0
    %348 = vmatprep.subr.bf16.mxu0 0
    %349 = vmatpush1.bf16.msra.mxu0 0
    %350 = vmatprep.mubr.bf16.mxu0 0
    %351 = vmatmul.mubr.bf16.gmra.mrb[0].mxu0 %v250
    %v352 = vpop.f32.mrb[0].mxu0
    %v353 = vadd.f32 0.0, %v352
    %v354 = vpop.f32.mrb[0].mxu0
    %v355 = vadd.f32 0.0, %v354
    %v356 = vpop.f32.mrb[0].mxu0
    %v357 = vpop.f32.mrb[0].mxu0
    %358 = vdwg.mxu0
    %359 = vmatprep.subr.bf16.mxu0 %v229
    %360 = vmatpush1.bf16.msra.mxu0 %v228
    %361 = vmatprep.subr.bf16.mxu0 %v269
    %362 = vmatpush1.bf16.msra.mxu0 %v266
    %363 = vmatprep.subr.bf16.mxu0 0
    %364 = vmatpush1.bf16.msra.mxu0 0
    %365 = vmatprep.subr.bf16.mxu0 0
    %366 = vmatpush1.bf16.msra.mxu0 0
    %367 = vmatprep.subr.bf16.mxu0 0
    %368 = vmatpush1.bf16.msra.mxu0 0
    %369 = vmatprep.subr.bf16.mxu0 0
    %370 = vmatpush1.bf16.msra.mxu0 0
    %371 = vmatprep.subr.bf16.mxu0 0
    %372 = vmatpush1.bf16.msra.mxu0 0
    %373 = vmatprep.subr.bf16.mxu0 0
    %374 = vmatpush1.bf16.msra.mxu0 0
    %375 = vmatprep.subr.bf16.mxu0 0
    %376 = vmatpush1.bf16.msra.mxu0 0
    %377 = vmatprep.subr.bf16.mxu0 0
    %378 = vmatpush1.bf16.msra.mxu0 0
    %379 = vmatprep.subr.bf16.mxu0 0
    %380 = vmatpush1.bf16.msra.mxu0 0
    %381 = vmatprep.subr.bf16.mxu0 0
    %382 = vmatpush1.bf16.msra.mxu0 0
    %383 = vmatprep.subr.bf16.mxu0 0
    %384 = vmatpush1.bf16.msra.mxu0 0
    %385 = vmatprep.subr.bf16.mxu0 0
    %386 = vmatpush1.bf16.msra.mxu0 0
    %387 = vmatprep.subr.bf16.mxu0 0
    %388 = vmatpush1.bf16.msra.mxu0 0
    %389 = vmatprep.subr.bf16.mxu0 0
    %390 = vmatpush1.bf16.msra.mxu0 0
    %391 = vmatprep.mubr.bf16.mxu0 0
    %392 = vmatmul.mubr.bf16.gmra.mrb[0].mxu0 %v250
    %v393 = vpop.f32.mrb[0].mxu0
    %v394 = vadd.f32 0.0, %v393
    %v395 = vpop.f32.mrb[0].mxu0
    %v396 = vadd.f32 0.0, %v395
    %v397 = vpop.f32.mrb[0].mxu0
    %v398 = vpop.f32.mrb[0].mxu0
    %399 = vdwg.mxu0
    %400 = vmatprep.subr.bf16.mxu0 %v231
    %401 = vmatpush1.bf16.msra.mxu0 %v230
    %402 = vmatprep.subr.bf16.mxu0 %v275
    %403 = vmatpush1.bf16.msra.mxu0 %v272
    %404 = vmatprep.subr.bf16.mxu0 0
    %405 = vmatpush1.bf16.msra.mxu0 0
    %406 = vmatprep.subr.bf16.mxu0 0
    %407 = vmatpush1.bf16.msra.mxu0 0
    %408 = vmatprep.subr.bf16.mxu0 0
    %409 = vmatpush1.bf16.msra.mxu0 0
    %410 = vmatprep.subr.bf16.mxu0 0
    %411 = vmatpush1.bf16.msra.mxu0 0
    %412 = vmatprep.subr.bf16.mxu0 0
    %413 = vmatpush1.bf16.msra.mxu0 0
    %414 = vmatprep.subr.bf16.mxu0 0
    %415 = vmatpush1.bf16.msra.mxu0 0
    %416 = vmatprep.subr.bf16.mxu0 0
    %417 = vmatpush1.bf16.msra.mxu0 0
    %418 = vmatprep.subr.bf16.mxu0 0
    %419 = vmatpush1.bf16.msra.mxu0 0
    %420 = vmatprep.subr.bf16.mxu0 0
    %421 = vmatpush1.bf16.msra.mxu0 0
    %422 = vmatprep.subr.bf16.mxu0 0
    %423 = vmatpush1.bf16.msra.mxu0 0
    %424 = vmatprep.subr.bf16.mxu0 0
    %425 = vmatpush1.bf16.msra.mxu0 0
    %426 = vmatprep.subr.bf16.mxu0 0
    %427 = vmatpush1.bf16.msra.mxu0 0
    %428 = vmatprep.subr.bf16.mxu0 0
    %429 = vmatpush1.bf16.msra.mxu0 0
    %430 = vmatprep.subr.bf16.mxu0 0
    %431 = vmatpush1.bf16.msra.mxu0 0
    %432 = vmatprep.mubr.bf16.mxu0 0
    %433 = vmatmul.mubr.bf16.gmra.mrb[0].mxu0 %v250
    %v434 = vpop.f32.mrb[0].mxu0
    %v435 = vadd.f32 0.0, %v434
    %v436 = vpop.f32.mrb[0].mxu0
    %v437 = vadd.f32 0.0, %v436
    %v438 = vpop.f32.mrb[0].mxu0
    %v439 = vpop.f32.mrb[0].mxu0
    %440 = vdwg.mxu0
    %v445 = vunpack.c.l.b16 %v170
    %v446 = vunpack.c.h.b16 %v170
    %v447 = vunpack.c.l.b16 %v171
    %v448 = vunpack.c.h.b16 %v171
    %v449 = vunpack.c.l.b16 %v172
    %v450 = vunpack.c.h.b16 %v172
    %v451 = vunpack.c.l.b16 %v173
    %v452 = vunpack.c.h.b16 %v173
    %v453 = vpack.c.b16 %v445, %v445
    %v454 = vpack.c.b16 %v446, %v446
    %v455 = vpack.c.b16 %v447, %v447
    %v456 = vpack.c.b16 %v448, %v448
    %v457 = vpack.c.b16 %v449, %v449
    %v458 = vpack.c.b16 %v450, %v450
    %v459 = vpack.c.b16 %v451, %v451
    %v460 = vpack.c.b16 %v452, %v452
    %vm461 = vcmask 64512
    %v463 = vsel %vm461, %v169, 0
    %v466 = vsel %vm252, %v453, 0
    %v469 = vsel %vm252, %v454, 0
    %v472 = vsel %vm252, %v455, 0
    %v475 = vsel %vm252, %v456, 0
    %v478 = vsel %vm252, %v457, 0
    %v481 = vsel %vm252, %v458, 0
    %v484 = vsel %vm252, %v459, 0
    %v487 = vsel %vm252, %v460, 0
    %489 = vmatprep.subr.bf16.mxu0 %v469
    %490 = vmatpush1.bf16.msra.mxu0 %v466
    %491 = vmatprep.subr.bf16.mxu0 0
    %492 = vmatpush1.bf16.msra.mxu0 0
    %493 = vmatprep.subr.bf16.mxu0 0
    %494 = vmatpush1.bf16.msra.mxu0 0
    %495 = vmatprep.subr.bf16.mxu0 0
    %496 = vmatpush1.bf16.msra.mxu0 0
    %497 = vmatprep.subr.bf16.mxu0 0
    %498 = vmatpush1.bf16.msra.mxu0 0
    %499 = vmatprep.subr.bf16.mxu0 0
    %500 = vmatpush1.bf16.msra.mxu0 0
    %501 = vmatprep.subr.bf16.mxu0 0
    %502 = vmatpush1.bf16.msra.mxu0 0
    %503 = vmatprep.subr.bf16.mxu0 0
    %504 = vmatpush1.bf16.msra.mxu0 0
    %505 = vmatprep.subr.bf16.mxu0 0
    %506 = vmatpush1.bf16.msra.mxu0 0
    %507 = vmatprep.subr.bf16.mxu0 0
    %508 = vmatpush1.bf16.msra.mxu0 0
    %509 = vmatprep.subr.bf16.mxu0 0
    %510 = vmatpush1.bf16.msra.mxu0 0
    %511 = vmatprep.subr.bf16.mxu0 0
    %512 = vmatpush1.bf16.msra.mxu0 0
    %513 = vmatprep.subr.bf16.mxu0 0
    %514 = vmatpush1.bf16.msra.mxu0 0
    %515 = vmatprep.subr.bf16.mxu0 0
    %516 = vmatpush1.bf16.msra.mxu0 0
    %517 = vmatprep.subr.bf16.mxu0 0
    %518 = vmatpush1.bf16.msra.mxu0 0
    %519 = vmatprep.subr.bf16.mxu0 0
    %520 = vmatpush1.bf16.msra.mxu0 0
    %521 = vmatprep.mubr.bf16.mxu0 0
    %522 = vmatmul.mubr.bf16.gmra.mrb[0].mxu0 %v463
    %v523 = vpop.f32.mrb[0].mxu0
    %v524 = vadd.f32 %v312, %v523
    %v525 = vpop.f32.mrb[0].mxu0
    %v526 = vadd.f32 %v314, %v525
    %v527 = vpop.f32.mrb[0].mxu0
    %v528 = vpop.f32.mrb[0].mxu0
    %529 = vdwg.mxu0
    %530 = vmatprep.subr.bf16.mxu0 %v475
    %531 = vmatpush1.bf16.msra.mxu0 %v472
    %532 = vmatprep.subr.bf16.mxu0 0
    %533 = vmatpush1.bf16.msra.mxu0 0
    %534 = vmatprep.subr.bf16.mxu0 0
    %535 = vmatpush1.bf16.msra.mxu0 0
    %536 = vmatprep.subr.bf16.mxu0 0
    %537 = vmatpush1.bf16.msra.mxu0 0
    %538 = vmatprep.subr.bf16.mxu0 0
    %539 = vmatpush1.bf16.msra.mxu0 0
    %540 = vmatprep.subr.bf16.mxu0 0
    %541 = vmatpush1.bf16.msra.mxu0 0
    %542 = vmatprep.subr.bf16.mxu0 0
    %543 = vmatpush1.bf16.msra.mxu0 0
    %544 = vmatprep.subr.bf16.mxu0 0
    %545 = vmatpush1.bf16.msra.mxu0 0
    %546 = vmatprep.subr.bf16.mxu0 0
    %547 = vmatpush1.bf16.msra.mxu0 0
    %548 = vmatprep.subr.bf16.mxu0 0
    %549 = vmatpush1.bf16.msra.mxu0 0
    %550 = vmatprep.subr.bf16.mxu0 0
    %551 = vmatpush1.bf16.msra.mxu0 0
    %552 = vmatprep.subr.bf16.mxu0 0
    %553 = vmatpush1.bf16.msra.mxu0 0
    %554 = vmatprep.subr.bf16.mxu0 0
    %555 = vmatpush1.bf16.msra.mxu0 0
    %556 = vmatprep.subr.bf16.mxu0 0
    %557 = vmatpush1.bf16.msra.mxu0 0
    %558 = vmatprep.subr.bf16.mxu0 0
    %559 = vmatpush1.bf16.msra.mxu0 0
    %560 = vmatprep.subr.bf16.mxu0 0
    %561 = vmatpush1.bf16.msra.mxu0 0
    %562 = vmatprep.mubr.bf16.mxu0 0
    %563 = vmatmul.mubr.bf16.gmra.mrb[0].mxu0 %v463
    %v564 = vpop.f32.mrb[0].mxu0
    %v565 = vadd.f32 %v353, %v564
    %v566 = vpop.f32.mrb[0].mxu0
    %v567 = vadd.f32 %v355, %v566
    %v568 = vpop.f32.mrb[0].mxu0
    %v569 = vpop.f32.mrb[0].mxu0
    %570 = vdwg.mxu0
    %571 = vmatprep.subr.bf16.mxu0 %v481
    %572 = vmatpush1.bf16.msra.mxu0 %v478
    %573 = vmatprep.subr.bf16.mxu0 0
    %574 = vmatpush1.bf16.msra.mxu0 0
    %575 = vmatprep.subr.bf16.mxu0 0
    %576 = vmatpush1.bf16.msra.mxu0 0
    %577 = vmatprep.subr.bf16.mxu0 0
    %578 = vmatpush1.bf16.msra.mxu0 0
    %579 = vmatprep.subr.bf16.mxu0 0
    %580 = vmatpush1.bf16.msra.mxu0 0
    %581 = vmatprep.subr.bf16.mxu0 0
    %582 = vmatpush1.bf16.msra.mxu0 0
    %583 = vmatprep.subr.bf16.mxu0 0
    %584 = vmatpush1.bf16.msra.mxu0 0
    %585 = vmatprep.subr.bf16.mxu0 0
    %586 = vmatpush1.bf16.msra.mxu0 0
    %587 = vmatprep.subr.bf16.mxu0 0
    %588 = vmatpush1.bf16.msra.mxu0 0
    %589 = vmatprep.subr.bf16.mxu0 0
    %590 = vmatpush1.bf16.msra.mxu0 0
    %591 = vmatprep.subr.bf16.mxu0 0
    %592 = vmatpush1.bf16.msra.mxu0 0
    %593 = vmatprep.subr.bf16.mxu0 0
    %594 = vmatpush1.bf16.msra.mxu0 0
    %595 = vmatprep.subr.bf16.mxu0 0
    %596 = vmatpush1.bf16.msra.mxu0 0
    %597 = vmatprep.subr.bf16.mxu0 0
    %598 = vmatpush1.bf16.msra.mxu0 0
    %599 = vmatprep.subr.bf16.mxu0 0
    %600 = vmatpush1.bf16.msra.mxu0 0
    %601 = vmatprep.subr.bf16.mxu0 0
    %602 = vmatpush1.bf16.msra.mxu0 0
    %603 = vmatprep.mubr.bf16.mxu0 0
    %604 = vmatmul.mubr.bf16.gmra.mrb[0].mxu0 %v463
    %v605 = vpop.f32.mrb[0].mxu0
    %v606 = vadd.f32 %v394, %v605
    %v607 = vpop.f32.mrb[0].mxu0
    %v608 = vadd.f32 %v396, %v607
    %v609 = vpop.f32.mrb[0].mxu0
    %v610 = vpop.f32.mrb[0].mxu0
    %611 = vdwg.mxu0
    %612 = vmatprep.subr.bf16.mxu0 %v487
    %613 = vmatpush1.bf16.msra.mxu0 %v484
    %614 = vmatprep.subr.bf16.mxu0 0
    %615 = vmatpush1.bf16.msra.mxu0 0
    %616 = vmatprep.subr.bf16.mxu0 0
    %617 = vmatpush1.bf16.msra.mxu0 0
    %618 = vmatprep.subr.bf16.mxu0 0
    %619 = vmatpush1.bf16.msra.mxu0 0
    %620 = vmatprep.subr.bf16.mxu0 0
    %621 = vmatpush1.bf16.msra.mxu0 0
    %622 = vmatprep.subr.bf16.mxu0 0
    %623 = vmatpush1.bf16.msra.mxu0 0
    %624 = vmatprep.subr.bf16.mxu0 0
    %625 = vmatpush1.bf16.msra.mxu0 0
    %626 = vmatprep.subr.bf16.mxu0 0
    %627 = vmatpush1.bf16.msra.mxu0 0
    %628 = vmatprep.subr.bf16.mxu0 0
    %629 = vmatpush1.bf16.msra.mxu0 0
    %630 = vmatprep.subr.bf16.mxu0 0
    %631 = vmatpush1.bf16.msra.mxu0 0
    %632 = vmatprep.subr.bf16.mxu0 0
    %633 = vmatpush1.bf16.msra.mxu0 0
    %634 = vmatprep.subr.bf16.mxu0 0
    %635 = vmatpush1.bf16.msra.mxu0 0
    %636 = vmatprep.subr.bf16.mxu0 0
    %637 = vmatpush1.bf16.msra.mxu0 0
    %638 = vmatprep.subr.bf16.mxu0 0
    %639 = vmatpush1.bf16.msra.mxu0 0
    %640 = vmatprep.subr.bf16.mxu0 0
    %641 = vmatpush1.bf16.msra.mxu0 0
    %642 = vmatprep.subr.bf16.mxu0 0
    %643 = vmatpush1.bf16.msra.mxu0 0
    %644 = vmatprep.mubr.bf16.mxu0 0
    %645 = vmatmul.mubr.bf16.gmra.mrb[0].mxu0 %v463
    %v646 = vpop.f32.mrb[0].mxu0
    %v647 = vadd.f32 %v435, %v646
    %v648 = vpop.f32.mrb[0].mxu0
    %v649 = vadd.f32 %v437, %v648
    %v650 = vpop.f32.mrb[0].mxu0
    %v651 = vpop.f32.mrb[0].mxu0
    %652 = vdwg.mxu0
    %v653 = vld [vmem:[%s4] sm:$0xff]
    %v655 = vlaneseq
    %v656 = vshrl.u32 %v655, 7
    %v657 = vsub.s32 0, %v656
    %v658 = vrot.slane %v653, %v657
    %v659 = vlaneseq
    %v660 = vshrl.u32 %v659, 7
    %v661 = vsub.s32 1, %v660
    %v662 = vrot.slane %v653, %v661
    %v663 = vlaneseq
    %v664 = vshrl.u32 %v663, 7
    %v665 = vsub.s32 2, %v664
    %v666 = vrot.slane %v653, %v665
    %v667 = vlaneseq
    %v668 = vshrl.u32 %v667, 7
    %v669 = vsub.s32 3, %v668
    %v670 = vrot.slane %v653, %v669
    %v671 = vlaneseq
    %v672 = vshrl.u32 %v671, 7
    %v673 = vsub.s32 4, %v672
    %v674 = vrot.slane %v653, %v673
    %v675 = vlaneseq
    %v676 = vshrl.u32 %v675, 7
    %v677 = vsub.s32 5, %v676
    %v678 = vrot.slane %v653, %v677
    %v679 = vlaneseq
    %v680 = vshrl.u32 %v679, 7
    %v681 = vsub.s32 6, %v680
    %v682 = vrot.slane %v653, %v681
    %v683 = vlaneseq
    %v684 = vshrl.u32 %v683, 7
    %v685 = vsub.s32 7, %v684
    %v686 = vrot.slane %v653, %v685
    %v695 = vadd.f32 %v524, %v658
    %v696 = vadd.f32 %v526, %v662
    %v697 = vadd.f32 %v565, %v666
    %v698 = vadd.f32 %v567, %v670
    %v699 = vadd.f32 %v606, %v674
    %v700 = vadd.f32 %v608, %v678
    %v701 = vadd.f32 %v647, %v682
    %v702 = vadd.f32 %v649, %v686
    %v703 = vmul.f32 %v695, 0.01
    %v704 = vmul.f32 %v696, 0.01
    %v705 = vmul.f32 %v697, 0.01
    %v706 = vmul.f32 %v698, 0.01
    %v707 = vmul.f32 %v699, 0.01
    %v708 = vmul.f32 %v700, 0.01
    %v709 = vmul.f32 %v701, 0.01
    %v710 = vmul.f32 %v702, 0.01
    %v711 = vmax.f32 %v695, %v703
    %v712 = vmax.f32 %v696, %v704
    %v713 = vmax.f32 %v697, %v705
    %v714 = vmax.f32 %v698, %v706
    %v715 = vmax.f32 %v699, %v707
    %v716 = vmax.f32 %v700, %v708
    %v717 = vmax.f32 %v701, %v709
    %v718 = vmax.f32 %v702, %v710
    %v719 = vpack.c.bf16 %v711, %v711
    %v720 = vpack.c.bf16 %v712, %v712
    %v721 = vpack.c.bf16 %v713, %v713
    %v722 = vpack.c.bf16 %v714, %v714
    %v723 = vpack.c.bf16 %v715, %v715
    %v724 = vpack.c.bf16 %v716, %v716
    %v725 = vpack.c.bf16 %v717, %v717
    %v726 = vpack.c.bf16 %v718, %v718
    %v727 = vld [vmem:[#allocation10] sm:$0xff]
    %v728 = vld [vmem:[#allocation10 + $0x8] sm:$0xff]
    %v729 = vld [vmem:[#allocation10 + $0x10] sm:$0xff]
    %v730 = vld [vmem:[#allocation10 + $0x18] sm:$0xff]
    %v731 = vld [vmem:[#allocation10 + $0x20] sm:$0xff]
    %v732 = vld [vmem:[#allocation10 + $0x28] sm:$0xff]
    %v733 = vld [vmem:[#allocation10 + $0x30] sm:$0xff]
    %v734 = vld [vmem:[#allocation10 + $0x38] sm:$0xff]
    %v735 = vld [vmem:[#allocation10 + $0x40] sm:$0xff]
    %v736 = vld [vmem:[#allocation10 + $0x48] sm:$0xff]
    %v737 = vld [vmem:[#allocation10 + $0x50] sm:$0xff]
    %v738 = vld [vmem:[#allocation10 + $0x58] sm:$0xff]
    %v739 = vld [vmem:[#allocation10 + $0x60] sm:$0xff]
    %v740 = vld [vmem:[#allocation10 + $0x68] sm:$0xff]
    %v741 = vld [vmem:[#allocation10 + $0x70] sm:$0xff]
    %v742 = vld [vmem:[#allocation10 + $0x78] sm:$0xff]
    %v743 = vld [vmem:[#allocation10 + $0x80] sm:$0xff]
    %v744 = vld [vmem:[#allocation10 + $0x88] sm:$0xff]
    %v745 = vld [vmem:[#allocation10 + $0x90] sm:$0xff]
    %v746 = vld [vmem:[#allocation10 + $0x98] sm:$0xff]
    %v747 = vld [vmem:[#allocation10 + $0xa0] sm:$0xff]
    %v748 = vld [vmem:[#allocation10 + $0xa8] sm:$0xff]
    %v749 = vld [vmem:[#allocation10 + $0xb0] sm:$0xff]
    %v750 = vld [vmem:[#allocation10 + $0xb8] sm:$0xff]
    %v751 = vld [vmem:[#allocation10 + $0xc0] sm:$0xff]
    %v752 = vld [vmem:[#allocation10 + $0xc8] sm:$0xff]
    %v753 = vld [vmem:[#allocation10 + $0xd0] sm:$0xff]
    %v754 = vld [vmem:[#allocation10 + $0xd8] sm:$0xff]
    %v755 = vld [vmem:[#allocation10 + $0xe0] sm:$0xff]
    %v756 = vld [vmem:[#allocation10 + $0xe8] sm:$0xff]
    %v757 = vld [vmem:[#allocation10 + $0xf0] sm:$0xff]
    %v758 = vld [vmem:[#allocation10 + $0xf8] sm:$0xff]
    %v759 = vld [vmem:[#allocation10 + $0x100] sm:$0xff]
    %v760 = vld [vmem:[#allocation10 + $0x108] sm:$0xff]
    %v761 = vld [vmem:[#allocation10 + $0x110] sm:$0xff]
    %v762 = vld [vmem:[#allocation10 + $0x118] sm:$0xff]
    %v763 = vld [vmem:[#allocation10 + $0x120] sm:$0xff]
    %v764 = vld [vmem:[#allocation10 + $0x128] sm:$0xff]
    %v765 = vld [vmem:[#allocation10 + $0x130] sm:$0xff]
    %v766 = vld [vmem:[#allocation10 + $0x138] sm:$0xff]
    %v767 = vld [vmem:[#allocation10 + $0x140] sm:$0xff]
    %v768 = vld [vmem:[#allocation10 + $0x148] sm:$0xff]
    %v769 = vld [vmem:[#allocation10 + $0x150] sm:$0xff]
    %v770 = vld [vmem:[#allocation10 + $0x158] sm:$0xff]
    %v771 = vld [vmem:[#allocation10 + $0x160] sm:$0xff]
    %v772 = vld [vmem:[#allocation10 + $0x168] sm:$0xff]
    %v773 = vld [vmem:[#allocation10 + $0x170] sm:$0xff]
    %v774 = vld [vmem:[#allocation10 + $0x178] sm:$0xff]
    %v775 = vld [vmem:[#allocation10 + $0x180] sm:$0xff]
    %v776 = vld [vmem:[#allocation10 + $0x188] sm:$0xff]
    %v777 = vld [vmem:[#allocation10 + $0x190] sm:$0xff]
    %v778 = vld [vmem:[#allocation10 + $0x198] sm:$0xff]
    %v779 = vld [vmem:[#allocation10 + $0x1a0] sm:$0xff]
    %v780 = vld [vmem:[#allocation10 + $0x1a8] sm:$0xff]
    %v781 = vld [vmem:[#allocation10 + $0x1b0] sm:$0xff]
    %v782 = vld [vmem:[#allocation10 + $0x1b8] sm:$0xff]
    %v783 = vld [vmem:[#allocation10 + $0x1c0] sm:$0xff]
    %v784 = vld [vmem:[#allocation10 + $0x1c8] sm:$0xff]
    %v785 = vld [vmem:[#allocation10 + $0x1d0] sm:$0xff]
    %v786 = vld [vmem:[#allocation10 + $0x1d8] sm:$0xff]
    %v787 = vld [vmem:[#allocation10 + $0x1e0] sm:$0xff]
    %v788 = vld [vmem:[#allocation10 + $0x1e8] sm:$0xff]
    %v789 = vld [vmem:[#allocation10 + $0x1f0] sm:$0xff]
    %v790 = vld [vmem:[#allocation10 + $0x1f8] sm:$0xff]
    %v791 = vld [vmem:[#allocation10 + $0x200] sm:$0xff]
    %v792 = vld [vmem:[#allocation10 + $0x208] sm:$0xff]
    %v793 = vld [vmem:[#allocation10 + $0x210] sm:$0xff]
    %v794 = vld [vmem:[#allocation10 + $0x218] sm:$0xff]
    %v795 = vld [vmem:[#allocation10 + $0x220] sm:$0xff]
    %v796 = vld [vmem:[#allocation10 + $0x228] sm:$0xff]
    %v797 = vld [vmem:[#allocation10 + $0x230] sm:$0xff]
    %v798 = vld [vmem:[#allocation10 + $0x238] sm:$0xff]
    %v799 = vld [vmem:[#allocation10 + $0x240] sm:$0xff]
    %v800 = vld [vmem:[#allocation10 + $0x248] sm:$0xff]
    %v801 = vld [vmem:[#allocation10 + $0x250] sm:$0xff]
    %v802 = vld [vmem:[#allocation10 + $0x258] sm:$0xff]
    %v803 = vld [vmem:[#allocation10 + $0x260] sm:$0xff]
    %v804 = vld [vmem:[#allocation10 + $0x268] sm:$0xff]
    %v805 = vld [vmem:[#allocation10 + $0x270] sm:$0xff]
    %v806 = vld [vmem:[#allocation10 + $0x278] sm:$0xff]
    %v807 = vld [vmem:[#allocation10 + $0x280] sm:$0xff]
    %v808 = vld [vmem:[#allocation10 + $0x288] sm:$0xff]
    %v809 = vld [vmem:[#allocation10 + $0x290] sm:$0xff]
    %v810 = vld [vmem:[#allocation10 + $0x298] sm:$0xff]
    %v811 = vld [vmem:[#allocation10 + $0x2a0] sm:$0xff]
    %v812 = vld [vmem:[#allocation10 + $0x2a8] sm:$0xff]
    %v813 = vld [vmem:[#allocation10 + $0x2b0] sm:$0xff]
    %v814 = vld [vmem:[#allocation10 + $0x2b8] sm:$0xff]
    %v815 = vld [vmem:[#allocation10 + $0x2c0] sm:$0xff]
    %v816 = vld [vmem:[#allocation10 + $0x2c8] sm:$0xff]
    %v817 = vld [vmem:[#allocation10 + $0x2d0] sm:$0xff]
    %v818 = vld [vmem:[#allocation10 + $0x2d8] sm:$0xff]
    %v819 = vld [vmem:[#allocation10 + $0x2e0] sm:$0xff]
    %v820 = vld [vmem:[#allocation10 + $0x2e8] sm:$0xff]
    %v821 = vld [vmem:[#allocation10 + $0x2f0] sm:$0xff]
    %v822 = vld [vmem:[#allocation10 + $0x2f8] sm:$0xff]
    %v823 = vld [vmem:[#allocation10 + $0x300] sm:$0xff]
    %v824 = vld [vmem:[#allocation10 + $0x308] sm:$0xff]
    %v825 = vld [vmem:[#allocation10 + $0x310] sm:$0xff]
    %v826 = vld [vmem:[#allocation10 + $0x318] sm:$0xff]
    %v827 = vld [vmem:[#allocation10 + $0x320] sm:$0xff]
    %v828 = vld [vmem:[#allocation10 + $0x328] sm:$0xff]
    %v829 = vld [vmem:[#allocation10 + $0x330] sm:$0xff]
    %v830 = vld [vmem:[#allocation10 + $0x338] sm:$0xff]
    %v831 = vld [vmem:[#allocation10 + $0x340] sm:$0xff]
    %v832 = vld [vmem:[#allocation10 + $0x348] sm:$0xff]
    %v833 = vld [vmem:[#allocation10 + $0x350] sm:$0xff]
    %v834 = vld [vmem:[#allocation10 + $0x358] sm:$0xff]
    %v835 = vld [vmem:[#allocation10 + $0x360] sm:$0xff]
    %v836 = vld [vmem:[#allocation10 + $0x368] sm:$0xff]
    %v837 = vld [vmem:[#allocation10 + $0x370] sm:$0xff]
    %v838 = vld [vmem:[#allocation10 + $0x378] sm:$0xff]
    %v839 = vld [vmem:[#allocation10 + $0x380] sm:$0xff]
    %v840 = vld [vmem:[#allocation10 + $0x388] sm:$0xff]
    %v841 = vld [vmem:[#allocation10 + $0x390] sm:$0xff]
    %v842 = vld [vmem:[#allocation10 + $0x398] sm:$0xff]
    %v843 = vld [vmem:[#allocation10 + $0x3a0] sm:$0xff]
    %v844 = vld [vmem:[#allocation10 + $0x3a8] sm:$0xff]
    %v845 = vld [vmem:[#allocation10 + $0x3b0] sm:$0xff]
    %v846 = vld [vmem:[#allocation10 + $0x3b8] sm:$0xff]
    %v847 = vld [vmem:[#allocation10 + $0x3c0] sm:$0xff]
    %v848 = vld [vmem:[#allocation10 + $0x3c8] sm:$0xff]
    %v849 = vld [vmem:[#allocation10 + $0x3d0] sm:$0xff]
    %v850 = vld [vmem:[#allocation10 + $0x3d8] sm:$0xff]
    %v851 = vld [vmem:[#allocation10 + $0x3e0] sm:$0xff]
    %v852 = vld [vmem:[#allocation10 + $0x3e8] sm:$0xff]
    %v853 = vld [vmem:[#allocation10 + $0x3f0] sm:$0xff]
    %v854 = vld [vmem:[#allocation10 + $0x3f8] sm:$0xff]
    %v855 = vld [vmem:[#allocation10 + $0x400] sm:$0xff]
    %v856 = vld [vmem:[#allocation10 + $0x408] sm:$0xff]
    %v857 = vld [vmem:[#allocation10 + $0x410] sm:$0xff]
    %v858 = vld [vmem:[#allocation10 + $0x418] sm:$0xff]
    %v859 = vld [vmem:[#allocation10 + $0x420] sm:$0xff]
    %v860 = vld [vmem:[#allocation10 + $0x428] sm:$0xff]
    %v861 = vld [vmem:[#allocation10 + $0x430] sm:$0xff]
    %v862 = vld [vmem:[#allocation10 + $0x438] sm:$0xff]
    %v863 = vld [vmem:[#allocation10 + $0x440] sm:$0xff]
    %v864 = vld [vmem:[#allocation10 + $0x448] sm:$0xff]
    %v865 = vld [vmem:[#allocation10 + $0x450] sm:$0xff]
    %v866 = vld [vmem:[#allocation10 + $0x458] sm:$0xff]
    %v867 = vld [vmem:[#allocation10 + $0x460] sm:$0xff]
    %v868 = vld [vmem:[#allocation10 + $0x468] sm:$0xff]
    %v869 = vld [vmem:[#allocation10 + $0x470] sm:$0xff]
    %v870 = vld [vmem:[#allocation10 + $0x478] sm:$0xff]
    %v871 = vld [vmem:[#allocation10 + $0x480] sm:$0xff]
    %v872 = vld [vmem:[#allocation10 + $0x488] sm:$0xff]
    %v873 = vld [vmem:[#allocation10 + $0x490] sm:$0xff]
    %v874 = vld [vmem:[#allocation10 + $0x498] sm:$0xff]
    %v875 = vld [vmem:[#allocation10 + $0x4a0] sm:$0xff]
    %v876 = vld [vmem:[#allocation10 + $0x4a8] sm:$0xff]
    %v877 = vld [vmem:[#allocation10 + $0x4b0] sm:$0xff]
    %v878 = vld [vmem:[#allocation10 + $0x4b8] sm:$0xff]
    %v879 = vld [vmem:[#allocation10 + $0x4c0] sm:$0xff]
    %v880 = vld [vmem:[#allocation10 + $0x4c8] sm:$0xff]
    %v881 = vld [vmem:[#allocation10 + $0x4d0] sm:$0xff]
    %v882 = vld [vmem:[#allocation10 + $0x4d8] sm:$0xff]
    %v883 = vld [vmem:[#allocation10 + $0x4e0] sm:$0xff]
    %v884 = vld [vmem:[#allocation10 + $0x4e8] sm:$0xff]
    %v885 = vld [vmem:[#allocation10 + $0x4f0] sm:$0xff]
    %v886 = vld [vmem:[#allocation10 + $0x4f8] sm:$0xff]
    %v887 = vld [vmem:[#allocation10 + $0x500] sm:$0xff]
    %v888 = vld [vmem:[#allocation10 + $0x508] sm:$0xff]
    %v889 = vld [vmem:[#allocation10 + $0x510] sm:$0xff]
    %v890 = vld [vmem:[#allocation10 + $0x518] sm:$0xff]
    %v891 = vld [vmem:[#allocation10 + $0x520] sm:$0xff]
    %v892 = vld [vmem:[#allocation10 + $0x528] sm:$0xff]
    %v893 = vld [vmem:[#allocation10 + $0x530] sm:$0xff]
    %v894 = vld [vmem:[#allocation10 + $0x538] sm:$0xff]
    %v895 = vld [vmem:[#allocation10 + $0x540] sm:$0xff]
    %v896 = vld [vmem:[#allocation10 + $0x548] sm:$0xff]
    %v897 = vld [vmem:[#allocation10 + $0x550] sm:$0xff]
    %v898 = vld [vmem:[#allocation10 + $0x558] sm:$0xff]
    %v899 = vld [vmem:[#allocation10 + $0x560] sm:$0xff]
    %v900 = vld [vmem:[#allocation10 + $0x568] sm:$0xff]
    %v901 = vld [vmem:[#allocation10 + $0x570] sm:$0xff]
    %v902 = vld [vmem:[#allocation10 + $0x578] sm:$0xff]
    %v903 = vld [vmem:[#allocation10 + $0x580] sm:$0xff]
    %v904 = vld [vmem:[#allocation10 + $0x588] sm:$0xff]
    %v905 = vld [vmem:[#allocation10 + $0x590] sm:$0xff]
    %v906 = vld [vmem:[#allocation10 + $0x598] sm:$0xff]
    %v907 = vld [vmem:[#allocation10 + $0x5a0] sm:$0xff]
    %v908 = vld [vmem:[#allocation10 + $0x5a8] sm:$0xff]
    %v909 = vld [vmem:[#allocation10 + $0x5b0] sm:$0xff]
    %v910 = vld [vmem:[#allocation10 + $0x5b8] sm:$0xff]
    %v911 = vld [vmem:[#allocation10 + $0x5c0] sm:$0xff]
    %v912 = vld [vmem:[#allocation10 + $0x5c8] sm:$0xff]
    %v913 = vld [vmem:[#allocation10 + $0x5d0] sm:$0xff]
    %v914 = vld [vmem:[#allocation10 + $0x5d8] sm:$0xff]
    %v915 = vld [vmem:[#allocation10 + $0x5e0] sm:$0xff]
    %v916 = vld [vmem:[#allocation10 + $0x5e8] sm:$0xff]
    %v917 = vld [vmem:[#allocation10 + $0x5f0] sm:$0xff]
    %v918 = vld [vmem:[#allocation10 + $0x5f8] sm:$0xff]
    %v919 = vld [vmem:[#allocation10 + $0x600] sm:$0xff]
    %v920 = vld [vmem:[#allocation10 + $0x608] sm:$0xff]
    %v921 = vld [vmem:[#allocation10 + $0x610] sm:$0xff]
    %v922 = vld [vmem:[#allocation10 + $0x618] sm:$0xff]
    %v923 = vld [vmem:[#allocation10 + $0x620] sm:$0xff]
    %v924 = vld [vmem:[#allocation10 + $0x628] sm:$0xff]
    %v925 = vld [vmem:[#allocation10 + $0x630] sm:$0xff]
    %v926 = vld [vmem:[#allocation10 + $0x638] sm:$0xff]
    %v927 = vld [vmem:[#allocation10 + $0x640] sm:$0xff]
    %v928 = vld [vmem:[#allocation10 + $0x648] sm:$0xff]
    %v929 = vld [vmem:[#allocation10 + $0x650] sm:$0xff]
    %v930 = vld [vmem:[#allocation10 + $0x658] sm:$0xff]
    %v931 = vld [vmem:[#allocation10 + $0x660] sm:$0xff]
    %v932 = vld [vmem:[#allocation10 + $0x668] sm:$0xff]
    %v933 = vld [vmem:[#allocation10 + $0x670] sm:$0xff]
    %v934 = vld [vmem:[#allocation10 + $0x678] sm:$0xff]
    %v935 = vld [vmem:[#allocation10 + $0x680] sm:$0xff]
    %v936 = vld [vmem:[#allocation10 + $0x688] sm:$0xff]
    %v937 = vld [vmem:[#allocation10 + $0x690] sm:$0xff]
    %v938 = vld [vmem:[#allocation10 + $0x698] sm:$0xff]
    %v939 = vld [vmem:[#allocation10 + $0x6a0] sm:$0xff]
    %v940 = vld [vmem:[#allocation10 + $0x6a8] sm:$0xff]
    %v941 = vld [vmem:[#allocation10 + $0x6b0] sm:$0xff]
    %v942 = vld [vmem:[#allocation10 + $0x6b8] sm:$0xff]
    %v943 = vld [vmem:[#allocation10 + $0x6c0] sm:$0xff]
    %v944 = vld [vmem:[#allocation10 + $0x6c8] sm:$0xff]
    %v945 = vld [vmem:[#allocation10 + $0x6d0] sm:$0xff]
    %v946 = vld [vmem:[#allocation10 + $0x6d8] sm:$0xff]
    %v947 = vld [vmem:[#allocation10 + $0x6e0] sm:$0xff]
    %v948 = vld [vmem:[#allocation10 + $0x6e8] sm:$0xff]
    %v949 = vld [vmem:[#allocation10 + $0x6f0] sm:$0xff]
    %v950 = vld [vmem:[#allocation10 + $0x6f8] sm:$0xff]
    %v951 = vld [vmem:[#allocation10 + $0x700] sm:$0xff]
    %v952 = vld [vmem:[#allocation10 + $0x708] sm:$0xff]
    %v953 = vld [vmem:[#allocation10 + $0x710] sm:$0xff]
    %v954 = vld [vmem:[#allocation10 + $0x718] sm:$0xff]
    %v955 = vld [vmem:[#allocation10 + $0x720] sm:$0xff]
    %v956 = vld [vmem:[#allocation10 + $0x728] sm:$0xff]
    %v957 = vld [vmem:[#allocation10 + $0x730] sm:$0xff]
    %v958 = vld [vmem:[#allocation10 + $0x738] sm:$0xff]
    %v959 = vld [vmem:[#allocation10 + $0x740] sm:$0xff]
    %v960 = vld [vmem:[#allocation10 + $0x748] sm:$0xff]
    %v961 = vld [vmem:[#allocation10 + $0x750] sm:$0xff]
    %v962 = vld [vmem:[#allocation10 + $0x758] sm:$0xff]
    %v963 = vld [vmem:[#allocation10 + $0x760] sm:$0xff]
    %v964 = vld [vmem:[#allocation10 + $0x768] sm:$0xff]
    %v965 = vld [vmem:[#allocation10 + $0x770] sm:$0xff]
    %v966 = vld [vmem:[#allocation10 + $0x778] sm:$0xff]
    %v967 = vld [vmem:[#allocation10 + $0x780] sm:$0xff]
    %v968 = vld [vmem:[#allocation10 + $0x788] sm:$0xff]
    %v969 = vld [vmem:[#allocation10 + $0x790] sm:$0xff]
    %v970 = vld [vmem:[#allocation10 + $0x798] sm:$0xff]
    %v971 = vld [vmem:[#allocation10 + $0x7a0] sm:$0xff]
    %v972 = vld [vmem:[#allocation10 + $0x7a8] sm:$0xff]
    %v973 = vld [vmem:[#allocation10 + $0x7b0] sm:$0xff]
    %v974 = vld [vmem:[#allocation10 + $0x7b8] sm:$0xff]
    %v975 = vld [vmem:[#allocation10 + $0x7c0] sm:$0xff]
    %v976 = vld [vmem:[#allocation10 + $0x7c8] sm:$0xff]
    %v977 = vld [vmem:[#allocation10 + $0x7d0] sm:$0xff]
    %v978 = vld [vmem:[#allocation10 + $0x7d8] sm:$0xff]
    %v979 = vld [vmem:[#allocation10 + $0x7e0] sm:$0xff]
    %v980 = vld [vmem:[#allocation10 + $0x7e8] sm:$0xff]
    %v981 = vld [vmem:[#allocation10 + $0x7f0] sm:$0xff]
    %v982 = vld [vmem:[#allocation10 + $0x7f8] sm:$0xff]
    %v983 = vld [vmem:[%s6] sm:$0xf]
    %v985 = vlaneseq
    %v986 = vshrl.u32 %v985, 7
    %v987 = vsub.s32 0, %v986
    %v988 = vrot.slane %v983, %v987
    %v989 = vlaneseq
    %v990 = vshrl.u32 %v989, 7
    %v991 = vsub.s32 1, %v990
    %v992 = vrot.slane %v983, %v991
    %v993 = vlaneseq
    %v994 = vshrl.u32 %v993, 7
    %v995 = vsub.s32 2, %v994
    %v996 = vrot.slane %v983, %v995
    %v997 = vlaneseq
    %v998 = vshrl.u32 %v997, 7
    %v999 = vsub.s32 3, %v998
    %v1000 = vrot.slane %v983, %v999
    %v1261 = vunpack.c.l.b16 %v727
    %v1262 = vunpack.c.h.b16 %v727
    %v1263 = vunpack.c.l.b16 %v728
    %v1264 = vunpack.c.h.b16 %v728
    %v1265 = vunpack.c.l.b16 %v729
    %v1266 = vunpack.c.h.b16 %v729
    %v1267 = vunpack.c.l.b16 %v730
    %v1268 = vunpack.c.h.b16 %v730
    %v1269 = vunpack.c.l.b16 %v731
    %v1270 = vunpack.c.h.b16 %v731
    %v1271 = vunpack.c.l.b16 %v732
    %v1272 = vunpack.c.h.b16 %v732
    %v1273 = vunpack.c.l.b16 %v733
    %v1274 = vunpack.c.h.b16 %v733
    %v1275 = vunpack.c.l.b16 %v734
    %v1276 = vunpack.c.h.b16 %v734
    %v1277 = vunpack.c.l.b16 %v735
    %v1278 = vunpack.c.h.b16 %v735
    %v1279 = vunpack.c.l.b16 %v736
    %v1280 = vunpack.c.h.b16 %v736
    %v1281 = vunpack.c.l.b16 %v737
    %v1282 = vunpack.c.h.b16 %v737
    %v1283 = vunpack.c.l.b16 %v738
    %v1284 = vunpack.c.h.b16 %v738
    %v1285 = vunpack.c.l.b16 %v739
    %v1286 = vunpack.c.h.b16 %v739
    %v1287 = vunpack.c.l.b16 %v740
    %v1288 = vunpack.c.h.b16 %v740
    %v1289 = vunpack.c.l.b16 %v741
    %v1290 = vunpack.c.h.b16 %v741
    %v1291 = vunpack.c.l.b16 %v742
    %v1292 = vunpack.c.h.b16 %v742
    %v1293 = vunpack.c.l.b16 %v743
    %v1294 = vunpack.c.h.b16 %v743
    %v1295 = vunpack.c.l.b16 %v744
    %v1296 = vunpack.c.h.b16 %v744
    %v1297 = vunpack.c.l.b16 %v745
    %v1298 = vunpack.c.h.b16 %v745
    %v1299 = vunpack.c.l.b16 %v746
    %v1300 = vunpack.c.h.b16 %v746
    %v1301 = vunpack.c.l.b16 %v747
    %v1302 = vunpack.c.h.b16 %v747
    %v1303 = vunpack.c.l.b16 %v748
    %v1304 = vunpack.c.h.b16 %v748
    %v1305 = vunpack.c.l.b16 %v749
    %v1306 = vunpack.c.h.b16 %v749
    %v1307 = vunpack.c.l.b16 %v750
    %v1308 = vunpack.c.h.b16 %v750
    %v1309 = vunpack.c.l.b16 %v751
    %v1310 = vunpack.c.h.b16 %v751
    %v1311 = vunpack.c.l.b16 %v752
    %v1312 = vunpack.c.h.b16 %v752
    %v1313 = vunpack.c.l.b16 %v753
    %v1314 = vunpack.c.h.b16 %v753
    %v1315 = vunpack.c.l.b16 %v754
    %v1316 = vunpack.c.h.b16 %v754
    %v1317 = vunpack.c.l.b16 %v755
    %v1318 = vunpack.c.h.b16 %v755
    %v1319 = vunpack.c.l.b16 %v756
    %v1320 = vunpack.c.h.b16 %v756
    %v1321 = vunpack.c.l.b16 %v757
    %v1322 = vunpack.c.h.b16 %v757
    %v1323 = vunpack.c.l.b16 %v758
    %v1324 = vunpack.c.h.b16 %v758
    %v1325 = vunpack.c.l.b16 %v759
    %v1326 = vunpack.c.h.b16 %v759
    %v1327 = vunpack.c.l.b16 %v760
    %v1328 = vunpack.c.h.b16 %v760
    %v1329 = vunpack.c.l.b16 %v761
    %v1330 = vunpack.c.h.b16 %v761
    %v1331 = vunpack.c.l.b16 %v762
    %v1332 = vunpack.c.h.b16 %v762
    %v1333 = vunpack.c.l.b16 %v763
    %v1334 = vunpack.c.h.b16 %v763
    %v1335 = vunpack.c.l.b16 %v764
    %v1336 = vunpack.c.h.b16 %v764
    %v1337 = vunpack.c.l.b16 %v765
    %v1338 = vunpack.c.h.b16 %v765
    %v1339 = vunpack.c.l.b16 %v766
    %v1340 = vunpack.c.h.b16 %v766
    %v1341 = vunpack.c.l.b16 %v767
    %v1342 = vunpack.c.h.b16 %v767
    %v1343 = vunpack.c.l.b16 %v768
    %v1344 = vunpack.c.h.b16 %v768
    %v1345 = vunpack.c.l.b16 %v769
    %v1346 = vunpack.c.h.b16 %v769
    %v1347 = vunpack.c.l.b16 %v770
    %v1348 = vunpack.c.h.b16 %v770
    %v1349 = vunpack.c.l.b16 %v771
    %v1350 = vunpack.c.h.b16 %v771
    %v1351 = vunpack.c.l.b16 %v772
    %v1352 = vunpack.c.h.b16 %v772
    %v1353 = vunpack.c.l.b16 %v773
    %v1354 = vunpack.c.h.b16 %v773
    %v1355 = vunpack.c.l.b16 %v774
    %v1356 = vunpack.c.h.b16 %v774
    %v1357 = vunpack.c.l.b16 %v775
    %v1358 = vunpack.c.h.b16 %v775
    %v1359 = vunpack.c.l.b16 %v776
    %v1360 = vunpack.c.h.b16 %v776
    %v1361 = vunpack.c.l.b16 %v777
    %v1362 = vunpack.c.h.b16 %v777
    %v1363 = vunpack.c.l.b16 %v778
    %v1364 = vunpack.c.h.b16 %v778
    %v1365 = vunpack.c.l.b16 %v779
    %v1366 = vunpack.c.h.b16 %v779
    %v1367 = vunpack.c.l.b16 %v780
    %v1368 = vunpack.c.h.b16 %v780
    %v1369 = vunpack.c.l.b16 %v781
    %v1370 = vunpack.c.h.b16 %v781
    %v1371 = vunpack.c.l.b16 %v782
    %v1372 = vunpack.c.h.b16 %v782
    %v1373 = vunpack.c.l.b16 %v783
    %v1374 = vunpack.c.h.b16 %v783
    %v1375 = vunpack.c.l.b16 %v784
    %v1376 = vunpack.c.h.b16 %v784
    %v1377 = vunpack.c.l.b16 %v785
    %v1378 = vunpack.c.h.b16 %v785
    %v1379 = vunpack.c.l.b16 %v786
    %v1380 = vunpack.c.h.b16 %v786
    %v1381 = vunpack.c.l.b16 %v787
    %v1382 = vunpack.c.h.b16 %v787
    %v1383 = vunpack.c.l.b16 %v788
    %v1384 = vunpack.c.h.b16 %v788
    %v1385 = vunpack.c.l.b16 %v789
    %v1386 = vunpack.c.h.b16 %v789
    %v1387 = vunpack.c.l.b16 %v790
    %v1388 = vunpack.c.h.b16 %v790
    %v1389 = vunpack.c.l.b16 %v791
    %v1390 = vunpack.c.h.b16 %v791
    %v1391 = vunpack.c.l.b16 %v792
    %v1392 = vunpack.c.h.b16 %v792
    %v1393 = vunpack.c.l.b16 %v793
    %v1394 = vunpack.c.h.b16 %v793
    %v1395 = vunpack.c.l.b16 %v794
    %v1396 = vunpack.c.h.b16 %v794
    %v1397 = vunpack.c.l.b16 %v795
    %v1398 = vunpack.c.h.b16 %v795
    %v1399 = vunpack.c.l.b16 %v796
    %v1400 = vunpack.c.h.b16 %v796
    %v1401 = vunpack.c.l.b16 %v797
    %v1402 = vunpack.c.h.b16 %v797
    %v1403 = vunpack.c.l.b16 %v798
    %v1404 = vunpack.c.h.b16 %v798
    %v1405 = vunpack.c.l.b16 %v799
    %v1406 = vunpack.c.h.b16 %v799
    %v1407 = vunpack.c.l.b16 %v800
    %v1408 = vunpack.c.h.b16 %v800
    %v1409 = vunpack.c.l.b16 %v801
    %v1410 = vunpack.c.h.b16 %v801
    %v1411 = vunpack.c.l.b16 %v802
    %v1412 = vunpack.c.h.b16 %v802
    %v1413 = vunpack.c.l.b16 %v803
    %v1414 = vunpack.c.h.b16 %v803
    %v1415 = vunpack.c.l.b16 %v804
    %v1416 = vunpack.c.h.b16 %v804
    %v1417 = vunpack.c.l.b16 %v805
    %v1418 = vunpack.c.h.b16 %v805
    %v1419 = vunpack.c.l.b16 %v806
    %v1420 = vunpack.c.h.b16 %v806
    %v1421 = vunpack.c.l.b16 %v807
    %v1422 = vunpack.c.h.b16 %v807
    %v1423 = vunpack.c.l.b16 %v808
    %v1424 = vunpack.c.h.b16 %v808
    %v1425 = vunpack.c.l.b16 %v809
    %v1426 = vunpack.c.h.b16 %v809
    %v1427 = vunpack.c.l.b16 %v810
    %v1428 = vunpack.c.h.b16 %v810
    %v1429 = vunpack.c.l.b16 %v811
    %v1430 = vunpack.c.h.b16 %v811
    %v1431 = vunpack.c.l.b16 %v812
    %v1432 = vunpack.c.h.b16 %v812
    %v1433 = vunpack.c.l.b16 %v813
    %v1434 = vunpack.c.h.b16 %v813
    %v1435 = vunpack.c.l.b16 %v814
    %v1436 = vunpack.c.h.b16 %v814
    %v1437 = vunpack.c.l.b16 %v815
    %v1438 = vunpack.c.h.b16 %v815
    %v1439 = vunpack.c.l.b16 %v816
    %v1440 = vunpack.c.h.b16 %v816
    %v1441 = vunpack.c.l.b16 %v817
    %v1442 = vunpack.c.h.b16 %v817
    %v1443 = vunpack.c.l.b16 %v818
    %v1444 = vunpack.c.h.b16 %v818
    %v1445 = vunpack.c.l.b16 %v819
    %v1446 = vunpack.c.h.b16 %v819
    %v1447 = vunpack.c.l.b16 %v820
    %v1448 = vunpack.c.h.b16 %v820
    %v1449 = vunpack.c.l.b16 %v821
    %v1450 = vunpack.c.h.b16 %v821
    %v1451 = vunpack.c.l.b16 %v822
    %v1452 = vunpack.c.h.b16 %v822
    %v1453 = vunpack.c.l.b16 %v823
    %v1454 = vunpack.c.h.b16 %v823
    %v1455 = vunpack.c.l.b16 %v824
    %v1456 = vunpack.c.h.b16 %v824
    %v1457 = vunpack.c.l.b16 %v825
    %v1458 = vunpack.c.h.b16 %v825
    %v1459 = vunpack.c.l.b16 %v826
    %v1460 = vunpack.c.h.b16 %v826
    %v1461 = vunpack.c.l.b16 %v827
    %v1462 = vunpack.c.h.b16 %v827
    %v1463 = vunpack.c.l.b16 %v828
    %v1464 = vunpack.c.h.b16 %v828
    %v1465 = vunpack.c.l.b16 %v829
    %v1466 = vunpack.c.h.b16 %v829
    %v1467 = vunpack.c.l.b16 %v830
    %v1468 = vunpack.c.h.b16 %v830
    %v1469 = vunpack.c.l.b16 %v831
    %v1470 = vunpack.c.h.b16 %v831
    %v1471 = vunpack.c.l.b16 %v832
    %v1472 = vunpack.c.h.b16 %v832
    %v1473 = vunpack.c.l.b16 %v833
    %v1474 = vunpack.c.h.b16 %v833
    %v1475 = vunpack.c.l.b16 %v834
    %v1476 = vunpack.c.h.b16 %v834
    %v1477 = vunpack.c.l.b16 %v835
    %v1478 = vunpack.c.h.b16 %v835
    %v1479 = vunpack.c.l.b16 %v836
    %v1480 = vunpack.c.h.b16 %v836
    %v1481 = vunpack.c.l.b16 %v837
    %v1482 = vunpack.c.h.b16 %v837
    %v1483 = vunpack.c.l.b16 %v838
    %v1484 = vunpack.c.h.b16 %v838
    %v1485 = vunpack.c.l.b16 %v839
    %v1486 = vunpack.c.h.b16 %v839
    %v1487 = vunpack.c.l.b16 %v840
    %v1488 = vunpack.c.h.b16 %v840
    %v1489 = vunpack.c.l.b16 %v841
    %v1490 = vunpack.c.h.b16 %v841
    %v1491 = vunpack.c.l.b16 %v842
    %v1492 = vunpack.c.h.b16 %v842
    %v1493 = vunpack.c.l.b16 %v843
    %v1494 = vunpack.c.h.b16 %v843
    %v1495 = vunpack.c.l.b16 %v844
    %v1496 = vunpack.c.h.b16 %v844
    %v1497 = vunpack.c.l.b16 %v845
    %v1498 = vunpack.c.h.b16 %v845
    %v1499 = vunpack.c.l.b16 %v846
    %v1500 = vunpack.c.h.b16 %v846
    %v1501 = vunpack.c.l.b16 %v847
    %v1502 = vunpack.c.h.b16 %v847
    %v1503 = vunpack.c.l.b16 %v848
    %v1504 = vunpack.c.h.b16 %v848
    %v1505 = vunpack.c.l.b16 %v849
    %v1506 = vunpack.c.h.b16 %v849
    %v1507 = vunpack.c.l.b16 %v850
    %v1508 = vunpack.c.h.b16 %v850
    %v1509 = vunpack.c.l.b16 %v851
    %v1510 = vunpack.c.h.b16 %v851
    %v1511 = vunpack.c.l.b16 %v852
    %v1512 = vunpack.c.h.b16 %v852
    %v1513 = vunpack.c.l.b16 %v853
    %v1514 = vunpack.c.h.b16 %v853
    %v1515 = vunpack.c.l.b16 %v854
    %v1516 = vunpack.c.h.b16 %v854
    %v1517 = vunpack.c.l.b16 %v855
    %v1518 = vunpack.c.h.b16 %v855
    %v1519 = vunpack.c.l.b16 %v856
    %v1520 = vunpack.c.h.b16 %v856
    %v1521 = vunpack.c.l.b16 %v857
    %v1522 = vunpack.c.h.b16 %v857
    %v1523 = vunpack.c.l.b16 %v858
    %v1524 = vunpack.c.h.b16 %v858
    %v1525 = vunpack.c.l.b16 %v859
    %v1526 = vunpack.c.h.b16 %v859
    %v1527 = vunpack.c.l.b16 %v860
    %v1528 = vunpack.c.h.b16 %v860
    %v1529 = vunpack.c.l.b16 %v861
    %v1530 = vunpack.c.h.b16 %v861
    %v1531 = vunpack.c.l.b16 %v862
    %v1532 = vunpack.c.h.b16 %v862
    %v1533 = vunpack.c.l.b16 %v863
    %v1534 = vunpack.c.h.b16 %v863
    %v1535 = vunpack.c.l.b16 %v864
    %v1536 = vunpack.c.h.b16 %v864
    %v1537 = vunpack.c.l.b16 %v865
    %v1538 = vunpack.c.h.b16 %v865
    %v1539 = vunpack.c.l.b16 %v866
    %v1540 = vunpack.c.h.b16 %v866
    %v1541 = vunpack.c.l.b16 %v867
    %v1542 = vunpack.c.h.b16 %v867
    %v1543 = vunpack.c.l.b16 %v868
    %v1544 = vunpack.c.h.b16 %v868
    %v1545 = vunpack.c.l.b16 %v869
    %v1546 = vunpack.c.h.b16 %v869
    %v1547 = vunpack.c.l.b16 %v870
    %v1548 = vunpack.c.h.b16 %v870
    %v1549 = vunpack.c.l.b16 %v871
    %v1550 = vunpack.c.h.b16 %v871
    %v1551 = vunpack.c.l.b16 %v872
    %v1552 = vunpack.c.h.b16 %v872
    %v1553 = vunpack.c.l.b16 %v873
    %v1554 = vunpack.c.h.b16 %v873
    %v1555 = vunpack.c.l.b16 %v874
    %v1556 = vunpack.c.h.b16 %v874
    %v1557 = vunpack.c.l.b16 %v875
    %v1558 = vunpack.c.h.b16 %v875
    %v1559 = vunpack.c.l.b16 %v876
    %v1560 = vunpack.c.h.b16 %v876
    %v1561 = vunpack.c.l.b16 %v877
    %v1562 = vunpack.c.h.b16 %v877
    %v1563 = vunpack.c.l.b16 %v878
    %v1564 = vunpack.c.h.b16 %v878
    %v1565 = vunpack.c.l.b16 %v879
    %v1566 = vunpack.c.h.b16 %v879
    %v1567 = vunpack.c.l.b16 %v880
    %v1568 = vunpack.c.h.b16 %v880
    %v1569 = vunpack.c.l.b16 %v881
    %v1570 = vunpack.c.h.b16 %v881
    %v1571 = vunpack.c.l.b16 %v882
    %v1572 = vunpack.c.h.b16 %v882
    %v1573 = vunpack.c.l.b16 %v883
    %v1574 = vunpack.c.h.b16 %v883
    %v1575 = vunpack.c.l.b16 %v884
    %v1576 = vunpack.c.h.b16 %v884
    %v1577 = vunpack.c.l.b16 %v885
    %v1578 = vunpack.c.h.b16 %v885
    %v1579 = vunpack.c.l.b16 %v886
    %v1580 = vunpack.c.h.b16 %v886
    %v1581 = vunpack.c.l.b16 %v887
    %v1582 = vunpack.c.h.b16 %v887
    %v1583 = vunpack.c.l.b16 %v888
    %v1584 = vunpack.c.h.b16 %v888
    %v1585 = vunpack.c.l.b16 %v889
    %v1586 = vunpack.c.h.b16 %v889
    %v1587 = vunpack.c.l.b16 %v890
    %v1588 = vunpack.c.h.b16 %v890
    %v1589 = vunpack.c.l.b16 %v891
    %v1590 = vunpack.c.h.b16 %v891
    %v1591 = vunpack.c.l.b16 %v892
    %v1592 = vunpack.c.h.b16 %v892
    %v1593 = vunpack.c.l.b16 %v893
    %v1594 = vunpack.c.h.b16 %v893
    %v1595 = vunpack.c.l.b16 %v894
    %v1596 = vunpack.c.h.b16 %v894
    %v1597 = vunpack.c.l.b16 %v895
    %v1598 = vunpack.c.h.b16 %v895
    %v1599 = vunpack.c.l.b16 %v896
    %v1600 = vunpack.c.h.b16 %v896
    %v1601 = vunpack.c.l.b16 %v897
    %v1602 = vunpack.c.h.b16 %v897
    %v1603 = vunpack.c.l.b16 %v898
    %v1604 = vunpack.c.h.b16 %v898
    %v1605 = vunpack.c.l.b16 %v899
    %v1606 = vunpack.c.h.b16 %v899
    %v1607 = vunpack.c.l.b16 %v900
    %v1608 = vunpack.c.h.b16 %v900
    %v1609 = vunpack.c.l.b16 %v901
    %v1610 = vunpack.c.h.b16 %v901
    %v1611 = vunpack.c.l.b16 %v902
    %v1612 = vunpack.c.h.b16 %v902
    %v1613 = vunpack.c.l.b16 %v903
    %v1614 = vunpack.c.h.b16 %v903
    %v1615 = vunpack.c.l.b16 %v904
    %v1616 = vunpack.c.h.b16 %v904
    %v1617 = vunpack.c.l.b16 %v905
    %v1618 = vunpack.c.h.b16 %v905
    %v1619 = vunpack.c.l.b16 %v906
    %v1620 = vunpack.c.h.b16 %v906
    %v1621 = vunpack.c.l.b16 %v907
    %v1622 = vunpack.c.h.b16 %v907
    %v1623 = vunpack.c.l.b16 %v908
    %v1624 = vunpack.c.h.b16 %v908
    %v1625 = vunpack.c.l.b16 %v909
    %v1626 = vunpack.c.h.b16 %v909
    %v1627 = vunpack.c.l.b16 %v910
    %v1628 = vunpack.c.h.b16 %v910
    %v1629 = vunpack.c.l.b16 %v911
    %v1630 = vunpack.c.h.b16 %v911
    %v1631 = vunpack.c.l.b16 %v912
    %v1632 = vunpack.c.h.b16 %v912
    %v1633 = vunpack.c.l.b16 %v913
    %v1634 = vunpack.c.h.b16 %v913
    %v1635 = vunpack.c.l.b16 %v914
    %v1636 = vunpack.c.h.b16 %v914
    %v1637 = vunpack.c.l.b16 %v915
    %v1638 = vunpack.c.h.b16 %v915
    %v1639 = vunpack.c.l.b16 %v916
    %v1640 = vunpack.c.h.b16 %v916
    %v1641 = vunpack.c.l.b16 %v917
    %v1642 = vunpack.c.h.b16 %v917
    %v1643 = vunpack.c.l.b16 %v918
    %v1644 = vunpack.c.h.b16 %v918
    %v1645 = vunpack.c.l.b16 %v919
    %v1646 = vunpack.c.h.b16 %v919
    %v1647 = vunpack.c.l.b16 %v920
    %v1648 = vunpack.c.h.b16 %v920
    %v1649 = vunpack.c.l.b16 %v921
    %v1650 = vunpack.c.h.b16 %v921
    %v1651 = vunpack.c.l.b16 %v922
    %v1652 = vunpack.c.h.b16 %v922
    %v1653 = vunpack.c.l.b16 %v923
    %v1654 = vunpack.c.h.b16 %v923
    %v1655 = vunpack.c.l.b16 %v924
    %v1656 = vunpack.c.h.b16 %v924
    %v1657 = vunpack.c.l.b16 %v925
    %v1658 = vunpack.c.h.b16 %v925
    %v1659 = vunpack.c.l.b16 %v926
    %v1660 = vunpack.c.h.b16 %v926
    %v1661 = vunpack.c.l.b16 %v927
    %v1662 = vunpack.c.h.b16 %v927
    %v1663 = vunpack.c.l.b16 %v928
    %v1664 = vunpack.c.h.b16 %v928
    %v1665 = vunpack.c.l.b16 %v929
    %v1666 = vunpack.c.h.b16 %v929
    %v1667 = vunpack.c.l.b16 %v930
    %v1668 = vunpack.c.h.b16 %v930
    %v1669 = vunpack.c.l.b16 %v931
    %v1670 = vunpack.c.h.b16 %v931
    %v1671 = vunpack.c.l.b16 %v932
    %v1672 = vunpack.c.h.b16 %v932
    %v1673 = vunpack.c.l.b16 %v933
    %v1674 = vunpack.c.h.b16 %v933
    %v1675 = vunpack.c.l.b16 %v934
    %v1676 = vunpack.c.h.b16 %v934
    %v1677 = vunpack.c.l.b16 %v935
    %v1678 = vunpack.c.h.b16 %v935
    %v1679 = vunpack.c.l.b16 %v936
    %v1680 = vunpack.c.h.b16 %v936
    %v1681 = vunpack.c.l.b16 %v937
    %v1682 = vunpack.c.h.b16 %v937
    %v1683 = vunpack.c.l.b16 %v938
    %v1684 = vunpack.c.h.b16 %v938
    %v1685 = vunpack.c.l.b16 %v939
    %v1686 = vunpack.c.h.b16 %v939
    %v1687 = vunpack.c.l.b16 %v940
    %v1688 = vunpack.c.h.b16 %v940
    %v1689 = vunpack.c.l.b16 %v941
    %v1690 = vunpack.c.h.b16 %v941
    %v1691 = vunpack.c.l.b16 %v942
    %v1692 = vunpack.c.h.b16 %v942
    %v1693 = vunpack.c.l.b16 %v943
    %v1694 = vunpack.c.h.b16 %v943
    %v1695 = vunpack.c.l.b16 %v944
    %v1696 = vunpack.c.h.b16 %v944
    %v1697 = vunpack.c.l.b16 %v945
    %v1698 = vunpack.c.h.b16 %v945
    %v1699 = vunpack.c.l.b16 %v946
    %v1700 = vunpack.c.h.b16 %v946
    %v1701 = vunpack.c.l.b16 %v947
    %v1702 = vunpack.c.h.b16 %v947
    %v1703 = vunpack.c.l.b16 %v948
    %v1704 = vunpack.c.h.b16 %v948
    %v1705 = vunpack.c.l.b16 %v949
    %v1706 = vunpack.c.h.b16 %v949
    %v1707 = vunpack.c.l.b16 %v950
    %v1708 = vunpack.c.h.b16 %v950
    %v1709 = vunpack.c.l.b16 %v951
    %v1710 = vunpack.c.h.b16 %v951
    %v1711 = vunpack.c.l.b16 %v952
    %v1712 = vunpack.c.h.b16 %v952
    %v1713 = vunpack.c.l.b16 %v953
    %v1714 = vunpack.c.h.b16 %v953
    %v1715 = vunpack.c.l.b16 %v954
    %v1716 = vunpack.c.h.b16 %v954
    %v1717 = vunpack.c.l.b16 %v955
    %v1718 = vunpack.c.h.b16 %v955
    %v1719 = vunpack.c.l.b16 %v956
    %v1720 = vunpack.c.h.b16 %v956
    %v1721 = vunpack.c.l.b16 %v957
    %v1722 = vunpack.c.h.b16 %v957
    %v1723 = vunpack.c.l.b16 %v958
    %v1724 = vunpack.c.h.b16 %v958
    %v1725 = vunpack.c.l.b16 %v959
    %v1726 = vunpack.c.h.b16 %v959
    %v1727 = vunpack.c.l.b16 %v960
    %v1728 = vunpack.c.h.b16 %v960
    %v1729 = vunpack.c.l.b16 %v961
    %v1730 = vunpack.c.h.b16 %v961
    %v1731 = vunpack.c.l.b16 %v962
    %v1732 = vunpack.c.h.b16 %v962
    %v1733 = vunpack.c.l.b16 %v963
    %v1734 = vunpack.c.h.b16 %v963
    %v1735 = vunpack.c.l.b16 %v964
    %v1736 = vunpack.c.h.b16 %v964
    %v1737 = vunpack.c.l.b16 %v965
    %v1738 = vunpack.c.h.b16 %v965
    %v1739 = vunpack.c.l.b16 %v966
    %v1740 = vunpack.c.h.b16 %v966
    %v1741 = vunpack.c.l.b16 %v967
    %v1742 = vunpack.c.h.b16 %v967
    %v1743 = vunpack.c.l.b16 %v968
    %v1744 = vunpack.c.h.b16 %v968
    %v1745 = vunpack.c.l.b16 %v969
    %v1746 = vunpack.c.h.b16 %v969
    %v1747 = vunpack.c.l.b16 %v970
    %v1748 = vunpack.c.h.b16 %v970
    %v1749 = vunpack.c.l.b16 %v971
    %v1750 = vunpack.c.h.b16 %v971
    %v1751 = vunpack.c.l.b16 %v972
    %v1752 = vunpack.c.h.b16 %v972
    %v1753 = vunpack.c.l.b16 %v973
    %v1754 = vunpack.c.h.b16 %v973
    %v1755 = vunpack.c.l.b16 %v974
    %v1756 = vunpack.c.h.b16 %v974
    %v1757 = vunpack.c.l.b16 %v975
    %v1758 = vunpack.c.h.b16 %v975
    %v1759 = vunpack.c.l.b16 %v976
    %v1760 = vunpack.c.h.b16 %v976
    %v1761 = vunpack.c.l.b16 %v977
    %v1762 = vunpack.c.h.b16 %v977
    %v1763 = vunpack.c.l.b16 %v978
    %v1764 = vunpack.c.h.b16 %v978
    %v1765 = vunpack.c.l.b16 %v979
    %v1766 = vunpack.c.h.b16 %v979
    %v1767 = vunpack.c.l.b16 %v980
    %v1768 = vunpack.c.h.b16 %v980
    %v1769 = vunpack.c.l.b16 %v981
    %v1770 = vunpack.c.h.b16 %v981
    %v1771 = vunpack.c.l.b16 %v982
    %v1772 = vunpack.c.h.b16 %v982
    %v1773 = vpack.c.b16 %v1265, %v1261
    %v1774 = vpack.c.b16 %v1266, %v1262
    %v1775 = vpack.c.b16 %v1267, %v1263
    %v1776 = vpack.c.b16 %v1268, %v1264
    %v1777 = vpack.c.b16 %v1273, %v1269
    %v1778 = vpack.c.b16 %v1274, %v1270
    %v1779 = vpack.c.b16 %v1275, %v1271
    %v1780 = vpack.c.b16 %v1276, %v1272
    %v1781 = vpack.c.b16 %v1281, %v1277
    %v1782 = vpack.c.b16 %v1282, %v1278
    %v1783 = vpack.c.b16 %v1283, %v1279
    %v1784 = vpack.c.b16 %v1284, %v1280
    %v1785 = vpack.c.b16 %v1289, %v1285
    %v1786 = vpack.c.b16 %v1290, %v1286
    %v1787 = vpack.c.b16 %v1291, %v1287
    %v1788 = vpack.c.b16 %v1292, %v1288
    %v1789 = vpack.c.b16 %v1297, %v1293
    %v1790 = vpack.c.b16 %v1298, %v1294
    %v1791 = vpack.c.b16 %v1299, %v1295
    %v1792 = vpack.c.b16 %v1300, %v1296
    %v1793 = vpack.c.b16 %v1305, %v1301
    %v1794 = vpack.c.b16 %v1306, %v1302
    %v1795 = vpack.c.b16 %v1307, %v1303
    %v1796 = vpack.c.b16 %v1308, %v1304
    %v1797 = vpack.c.b16 %v1313, %v1309
    %v1798 = vpack.c.b16 %v1314, %v1310
    %v1799 = vpack.c.b16 %v1315, %v1311
    %v1800 = vpack.c.b16 %v1316, %v1312
    %v1801 = vpack.c.b16 %v1321, %v1317
    %v1802 = vpack.c.b16 %v1322, %v1318
    %v1803 = vpack.c.b16 %v1323, %v1319
    %v1804 = vpack.c.b16 %v1324, %v1320
    %v1805 = vpack.c.b16 %v1329, %v1325
    %v1806 = vpack.c.b16 %v1330, %v1326
    %v1807 = vpack.c.b16 %v1331, %v1327
    %v1808 = vpack.c.b16 %v1332, %v1328
    %v1809 = vpack.c.b16 %v1337, %v1333
    %v1810 = vpack.c.b16 %v1338, %v1334
    %v1811 = vpack.c.b16 %v1339, %v1335
    %v1812 = vpack.c.b16 %v1340, %v1336
    %v1813 = vpack.c.b16 %v1345, %v1341
    %v1814 = vpack.c.b16 %v1346, %v1342
    %v1815 = vpack.c.b16 %v1347, %v1343
    %v1816 = vpack.c.b16 %v1348, %v1344
    %v1817 = vpack.c.b16 %v1353, %v1349
    %v1818 = vpack.c.b16 %v1354, %v1350
    %v1819 = vpack.c.b16 %v1355, %v1351
    %v1820 = vpack.c.b16 %v1356, %v1352
    %v1821 = vpack.c.b16 %v1361, %v1357
    %v1822 = vpack.c.b16 %v1362, %v1358
    %v1823 = vpack.c.b16 %v1363, %v1359
    %v1824 = vpack.c.b16 %v1364, %v1360
    %v1825 = vpack.c.b16 %v1369, %v1365
    %v1826 = vpack.c.b16 %v1370, %v1366
    %v1827 = vpack.c.b16 %v1371, %v1367
    %v1828 = vpack.c.b16 %v1372, %v1368
    %v1829 = vpack.c.b16 %v1377, %v1373
    %v1830 = vpack.c.b16 %v1378, %v1374
    %v1831 = vpack.c.b16 %v1379, %v1375
    %v1832 = vpack.c.b16 %v1380, %v1376
    %v1833 = vpack.c.b16 %v1385, %v1381
    %v1834 = vpack.c.b16 %v1386, %v1382
    %v1835 = vpack.c.b16 %v1387, %v1383
    %v1836 = vpack.c.b16 %v1388, %v1384
    %v1837 = vpack.c.b16 %v1393, %v1389
    %v1838 = vpack.c.b16 %v1394, %v1390
    %v1839 = vpack.c.b16 %v1395, %v1391
    %v1840 = vpack.c.b16 %v1396, %v1392
    %v1841 = vpack.c.b16 %v1401, %v1397
    %v1842 = vpack.c.b16 %v1402, %v1398
    %v1843 = vpack.c.b16 %v1403, %v1399
    %v1844 = vpack.c.b16 %v1404, %v1400
    %v1845 = vpack.c.b16 %v1409, %v1405
    %v1846 = vpack.c.b16 %v1410, %v1406
    %v1847 = vpack.c.b16 %v1411, %v1407
    %v1848 = vpack.c.b16 %v1412, %v1408
    %v1849 = vpack.c.b16 %v1417, %v1413
    %v1850 = vpack.c.b16 %v1418, %v1414
    %v1851 = vpack.c.b16 %v1419, %v1415
    %v1852 = vpack.c.b16 %v1420, %v1416
    %v1853 = vpack.c.b16 %v1425, %v1421
    %v1854 = vpack.c.b16 %v1426, %v1422
    %v1855 = vpack.c.b16 %v1427, %v1423
    %v1856 = vpack.c.b16 %v1428, %v1424
    %v1857 = vpack.c.b16 %v1433, %v1429
    %v1858 = vpack.c.b16 %v1434, %v1430
    %v1859 = vpack.c.b16 %v1435, %v1431
    %v1860 = vpack.c.b16 %v1436, %v1432
    %v1861 = vpack.c.b16 %v1441, %v1437
    %v1862 = vpack.c.b16 %v1442, %v1438
    %v1863 = vpack.c.b16 %v1443, %v1439
    %v1864 = vpack.c.b16 %v1444, %v1440
    %v1865 = vpack.c.b16 %v1449, %v1445
    %v1866 = vpack.c.b16 %v1450, %v1446
    %v1867 = vpack.c.b16 %v1451, %v1447
    %v1868 = vpack.c.b16 %v1452, %v1448
    %v1869 = vpack.c.b16 %v1457, %v1453
    %v1870 = vpack.c.b16 %v1458, %v1454
    %v1871 = vpack.c.b16 %v1459, %v1455
    %v1872 = vpack.c.b16 %v1460, %v1456
    %v1873 = vpack.c.b16 %v1465, %v1461
    %v1874 = vpack.c.b16 %v1466, %v1462
    %v1875 = vpack.c.b16 %v1467, %v1463
    %v1876 = vpack.c.b16 %v1468, %v1464
    %v1877 = vpack.c.b16 %v1473, %v1469
    %v1878 = vpack.c.b16 %v1474, %v1470
    %v1879 = vpack.c.b16 %v1475, %v1471
    %v1880 = vpack.c.b16 %v1476, %v1472
    %v1881 = vpack.c.b16 %v1481, %v1477
    %v1882 = vpack.c.b16 %v1482, %v1478
    %v1883 = vpack.c.b16 %v1483, %v1479
    %v1884 = vpack.c.b16 %v1484, %v1480
    %v1885 = vpack.c.b16 %v1489, %v1485
    %v1886 = vpack.c.b16 %v1490, %v1486
    %v1887 = vpack.c.b16 %v1491, %v1487
    %v1888 = vpack.c.b16 %v1492, %v1488
    %v1889 = vpack.c.b16 %v1497, %v1493
    %v1890 = vpack.c.b16 %v1498, %v1494
    %v1891 = vpack.c.b16 %v1499, %v1495
    %v1892 = vpack.c.b16 %v1500, %v1496
    %v1893 = vpack.c.b16 %v1505, %v1501
    %v1894 = vpack.c.b16 %v1506, %v1502
    %v1895 = vpack.c.b16 %v1507, %v1503
    %v1896 = vpack.c.b16 %v1508, %v1504
    %v1897 = vpack.c.b16 %v1513, %v1509
    %v1898 = vpack.c.b16 %v1514, %v1510
    %v1899 = vpack.c.b16 %v1515, %v1511
    %v1900 = vpack.c.b16 %v1516, %v1512
    %v1901 = vpack.c.b16 %v1521, %v1517
    %v1902 = vpack.c.b16 %v1522, %v1518
    %v1903 = vpack.c.b16 %v1523, %v1519
    %v1904 = vpack.c.b16 %v1524, %v1520
    %v1905 = vpack.c.b16 %v1529, %v1525
    %v1906 = vpack.c.b16 %v1530, %v1526
    %v1907 = vpack.c.b16 %v1531, %v1527
    %v1908 = vpack.c.b16 %v1532, %v1528
    %v1909 = vpack.c.b16 %v1537, %v1533
    %v1910 = vpack.c.b16 %v1538, %v1534
    %v1911 = vpack.c.b16 %v1539, %v1535
    %v1912 = vpack.c.b16 %v1540, %v1536
    %v1913 = vpack.c.b16 %v1545, %v1541
    %v1914 = vpack.c.b16 %v1546, %v1542
    %v1915 = vpack.c.b16 %v1547, %v1543
    %v1916 = vpack.c.b16 %v1548, %v1544
    %v1917 = vpack.c.b16 %v1553, %v1549
    %v1918 = vpack.c.b16 %v1554, %v1550
    %v1919 = vpack.c.b16 %v1555, %v1551
    %v1920 = vpack.c.b16 %v1556, %v1552
    %v1921 = vpack.c.b16 %v1561, %v1557
    %v1922 = vpack.c.b16 %v1562, %v1558
    %v1923 = vpack.c.b16 %v1563, %v1559
    %v1924 = vpack.c.b16 %v1564, %v1560
    %v1925 = vpack.c.b16 %v1569, %v1565
    %v1926 = vpack.c.b16 %v1570, %v1566
    %v1927 = vpack.c.b16 %v1571, %v1567
    %v1928 = vpack.c.b16 %v1572, %v1568
    %v1929 = vpack.c.b16 %v1577, %v1573
    %v1930 = vpack.c.b16 %v1578, %v1574
    %v1931 = vpack.c.b16 %v1579, %v1575
    %v1932 = vpack.c.b16 %v1580, %v1576
    %v1933 = vpack.c.b16 %v1585, %v1581
    %v1934 = vpack.c.b16 %v1586, %v1582
    %v1935 = vpack.c.b16 %v1587, %v1583
    %v1936 = vpack.c.b16 %v1588, %v1584
    %v1937 = vpack.c.b16 %v1593, %v1589
    %v1938 = vpack.c.b16 %v1594, %v1590
    %v1939 = vpack.c.b16 %v1595, %v1591
    %v1940 = vpack.c.b16 %v1596, %v1592
    %v1941 = vpack.c.b16 %v1601, %v1597
    %v1942 = vpack.c.b16 %v1602, %v1598
    %v1943 = vpack.c.b16 %v1603, %v1599
    %v1944 = vpack.c.b16 %v1604, %v1600
    %v1945 = vpack.c.b16 %v1609, %v1605
    %v1946 = vpack.c.b16 %v1610, %v1606
    %v1947 = vpack.c.b16 %v1611, %v1607
    %v1948 = vpack.c.b16 %v1612, %v1608
    %v1949 = vpack.c.b16 %v1617, %v1613
    %v1950 = vpack.c.b16 %v1618, %v1614
    %v1951 = vpack.c.b16 %v1619, %v1615
    %v1952 = vpack.c.b16 %v1620, %v1616
    %v1953 = vpack.c.b16 %v1625, %v1621
    %v1954 = vpack.c.b16 %v1626, %v1622
    %v1955 = vpack.c.b16 %v1627, %v1623
    %v1956 = vpack.c.b16 %v1628, %v1624
    %v1957 = vpack.c.b16 %v1633, %v1629
    %v1958 = vpack.c.b16 %v1634, %v1630
    %v1959 = vpack.c.b16 %v1635, %v1631
    %v1960 = vpack.c.b16 %v1636, %v1632
    %v1961 = vpack.c.b16 %v1641, %v1637
    %v1962 = vpack.c.b16 %v1642, %v1638
    %v1963 = vpack.c.b16 %v1643, %v1639
    %v1964 = vpack.c.b16 %v1644, %v1640
    %v1965 = vpack.c.b16 %v1649, %v1645
    %v1966 = vpack.c.b16 %v1650, %v1646
    %v1967 = vpack.c.b16 %v1651, %v1647
    %v1968 = vpack.c.b16 %v1652, %v1648
    %v1969 = vpack.c.b16 %v1657, %v1653
    %v1970 = vpack.c.b16 %v1658, %v1654
    %v1971 = vpack.c.b16 %v1659, %v1655
    %v1972 = vpack.c.b16 %v1660, %v1656
    %v1973 = vpack.c.b16 %v1665, %v1661
    %v1974 = vpack.c.b16 %v1666, %v1662
    %v1975 = vpack.c.b16 %v1667, %v1663
    %v1976 = vpack.c.b16 %v1668, %v1664
    %v1977 = vpack.c.b16 %v1673, %v1669
    %v1978 = vpack.c.b16 %v1674, %v1670
    %v1979 = vpack.c.b16 %v1675, %v1671
    %v1980 = vpack.c.b16 %v1676, %v1672
    %v1981 = vpack.c.b16 %v1681, %v1677
    %v1982 = vpack.c.b16 %v1682, %v1678
    %v1983 = vpack.c.b16 %v1683, %v1679
    %v1984 = vpack.c.b16 %v1684, %v1680
    %v1985 = vpack.c.b16 %v1689, %v1685
    %v1986 = vpack.c.b16 %v1690, %v1686
    %v1987 = vpack.c.b16 %v1691, %v1687
    %v1988 = vpack.c.b16 %v1692, %v1688
    %v1989 = vpack.c.b16 %v1697, %v1693
    %v1990 = vpack.c.b16 %v1698, %v1694
    %v1991 = vpack.c.b16 %v1699, %v1695
    %v1992 = vpack.c.b16 %v1700, %v1696
    %v1993 = vpack.c.b16 %v1705, %v1701
    %v1994 = vpack.c.b16 %v1706, %v1702
    %v1995 = vpack.c.b16 %v1707, %v1703
    %v1996 = vpack.c.b16 %v1708, %v1704
    %v1997 = vpack.c.b16 %v1713, %v1709
    %v1998 = vpack.c.b16 %v1714, %v1710
    %v1999 = vpack.c.b16 %v1715, %v1711
    %v2000 = vpack.c.b16 %v1716, %v1712
    %v2001 = vpack.c.b16 %v1721, %v1717
    %v2002 = vpack.c.b16 %v1722, %v1718
    %v2003 = vpack.c.b16 %v1723, %v1719
    %v2004 = vpack.c.b16 %v1724, %v1720
    %v2005 = vpack.c.b16 %v1729, %v1725
    %v2006 = vpack.c.b16 %v1730, %v1726
    %v2007 = vpack.c.b16 %v1731, %v1727
    %v2008 = vpack.c.b16 %v1732, %v1728
    %v2009 = vpack.c.b16 %v1737, %v1733
    %v2010 = vpack.c.b16 %v1738, %v1734
    %v2011 = vpack.c.b16 %v1739, %v1735
    %v2012 = vpack.c.b16 %v1740, %v1736
    %v2013 = vpack.c.b16 %v1745, %v1741
    %v2014 = vpack.c.b16 %v1746, %v1742
    %v2015 = vpack.c.b16 %v1747, %v1743
    %v2016 = vpack.c.b16 %v1748, %v1744
    %v2017 = vpack.c.b16 %v1753, %v1749
    %v2018 = vpack.c.b16 %v1754, %v1750
    %v2019 = vpack.c.b16 %v1755, %v1751
    %v2020 = vpack.c.b16 %v1756, %v1752
    %v2021 = vpack.c.b16 %v1761, %v1757
    %v2022 = vpack.c.b16 %v1762, %v1758
    %v2023 = vpack.c.b16 %v1763, %v1759
    %v2024 = vpack.c.b16 %v1764, %v1760
    %v2025 = vpack.c.b16 %v1769, %v1765
    %v2026 = vpack.c.b16 %v1770, %v1766
    %v2027 = vpack.c.b16 %v1771, %v1767
    %v2028 = vpack.c.b16 %v1772, %v1768
    %2285 = vmatprep.subr.bf16.mxu0 %v1774
    %2286 = vmatpush1.bf16.msra.mxu0 %v1773
    %2287 = vmatprep.subr.bf16.mxu0 %v1778
    %2288 = vmatpush1.bf16.msra.mxu0 %v1777
    %2289 = vmatprep.subr.bf16.mxu0 %v1782
    %2290 = vmatpush1.bf16.msra.mxu0 %v1781
    %2291 = vmatprep.subr.bf16.mxu0 %v1786
    %2292 = vmatpush1.bf16.msra.mxu0 %v1785
    %2293 = vmatprep.subr.bf16.mxu0 %v1790
    %2294 = vmatpush1.bf16.msra.mxu0 %v1789
    %2295 = vmatprep.subr.bf16.mxu0 %v1794
    %2296 = vmatpush1.bf16.msra.mxu0 %v1793
    %2297 = vmatprep.subr.bf16.mxu0 %v1798
    %2298 = vmatpush1.bf16.msra.mxu0 %v1797
    %2299 = vmatprep.subr.bf16.mxu0 %v1802
    %2300 = vmatpush1.bf16.msra.mxu0 %v1801
    %2301 = vmatprep.subr.bf16.mxu0 %v1806
    %2302 = vmatpush1.bf16.msra.mxu0 %v1805
    %2303 = vmatprep.subr.bf16.mxu0 %v1810
    %2304 = vmatpush1.bf16.msra.mxu0 %v1809
    %2305 = vmatprep.subr.bf16.mxu0 %v1814
    %2306 = vmatpush1.bf16.msra.mxu0 %v1813
    %2307 = vmatprep.subr.bf16.mxu0 %v1818
    %2308 = vmatpush1.bf16.msra.mxu0 %v1817
    %2309 = vmatprep.subr.bf16.mxu0 %v1822
    %2310 = vmatpush1.bf16.msra.mxu0 %v1821
    %2311 = vmatprep.subr.bf16.mxu0 %v1826
    %2312 = vmatpush1.bf16.msra.mxu0 %v1825
    %2313 = vmatprep.subr.bf16.mxu0 %v1830
    %2314 = vmatpush1.bf16.msra.mxu0 %v1829
    %2315 = vmatprep.subr.bf16.mxu0 %v1834
    %2316 = vmatpush1.bf16.msra.mxu0 %v1833
    %2317 = vmatprep.mubr.bf16.mxu0 %v720
    %2318 = vmatmul.mubr.bf16.gmra.mrb[0].mxu0 %v719
    %v2319 = vpop.f32.mrb[0].mxu0
    %v2320 = vadd.f32 %v988, %v2319
    %v2321 = vpop.f32.mrb[0].mxu0
    %v2322 = vadd.f32 %v992, %v2321
    %v2323 = vpop.f32.mrb[0].mxu0
    %v2324 = vpop.f32.mrb[0].mxu0
    %2325 = vdwg.mxu0
    %2326 = vmatprep.subr.bf16.mxu0 %v1838
    %2327 = vmatpush1.bf16.msra.mxu0 %v1837
    %2328 = vmatprep.subr.bf16.mxu0 %v1842
    %2329 = vmatpush1.bf16.msra.mxu0 %v1841
    %2330 = vmatprep.subr.bf16.mxu0 %v1846
    %2331 = vmatpush1.bf16.msra.mxu0 %v1845
    %2332 = vmatprep.subr.bf16.mxu0 %v1850
    %2333 = vmatpush1.bf16.msra.mxu0 %v1849
    %2334 = vmatprep.subr.bf16.mxu0 %v1854
    %2335 = vmatpush1.bf16.msra.mxu0 %v1853
    %2336 = vmatprep.subr.bf16.mxu0 %v1858
    %2337 = vmatpush1.bf16.msra.mxu0 %v1857
    %2338 = vmatprep.subr.bf16.mxu0 %v1862
    %2339 = vmatpush1.bf16.msra.mxu0 %v1861
    %2340 = vmatprep.subr.bf16.mxu0 %v1866
    %2341 = vmatpush1.bf16.msra.mxu0 %v1865
    %2342 = vmatprep.subr.bf16.mxu0 %v1870
    %2343 = vmatpush1.bf16.msra.mxu0 %v1869
    %2344 = vmatprep.subr.bf16.mxu0 %v1874
    %2345 = vmatpush1.bf16.msra.mxu0 %v1873
    %2346 = vmatprep.subr.bf16.mxu0 %v1878
    %2347 = vmatpush1.bf16.msra.mxu0 %v1877
    %2348 = vmatprep.subr.bf16.mxu0 %v1882
    %2349 = vmatpush1.bf16.msra.mxu0 %v1881
    %2350 = vmatprep.subr.bf16.mxu0 %v1886
    %2351 = vmatpush1.bf16.msra.mxu0 %v1885
    %2352 = vmatprep.subr.bf16.mxu0 %v1890
    %2353 = vmatpush1.bf16.msra.mxu0 %v1889
    %2354 = vmatprep.subr.bf16.mxu0 %v1894
    %2355 = vmatpush1.bf16.msra.mxu0 %v1893
    %2356 = vmatprep.subr.bf16.mxu0 %v1898
    %2357 = vmatpush1.bf16.msra.mxu0 %v1897
    %2358 = vmatprep.mubr.bf16.mxu0 %v722
    %2359 = vmatmul.mubr.bf16.gmra.mrb[0].mxu0 %v721
    %v2360 = vpop.f32.mrb[0].mxu0
    %v2361 = vadd.f32 %v2320, %v2360
    %v2362 = vpop.f32.mrb[0].mxu0
    %v2363 = vadd.f32 %v2322, %v2362
    %v2364 = vpop.f32.mrb[0].mxu0
    %v2365 = vpop.f32.mrb[0].mxu0
    %2366 = vdwg.mxu0
    %2367 = vmatprep.subr.bf16.mxu0 %v1902
    %2368 = vmatpush1.bf16.msra.mxu0 %v1901
    %2369 = vmatprep.subr.bf16.mxu0 %v1906
    %2370 = vmatpush1.bf16.msra.mxu0 %v1905
    %2371 = vmatprep.subr.bf16.mxu0 %v1910
    %2372 = vmatpush1.bf16.msra.mxu0 %v1909
    %2373 = vmatprep.subr.bf16.mxu0 %v1914
    %2374 = vmatpush1.bf16.msra.mxu0 %v1913
    %2375 = vmatprep.subr.bf16.mxu0 %v1918
    %2376 = vmatpush1.bf16.msra.mxu0 %v1917
    %2377 = vmatprep.subr.bf16.mxu0 %v1922
    %2378 = vmatpush1.bf16.msra.mxu0 %v1921
    %2379 = vmatprep.subr.bf16.mxu0 %v1926
    %2380 = vmatpush1.bf16.msra.mxu0 %v1925
    %2381 = vmatprep.subr.bf16.mxu0 %v1930
    %2382 = vmatpush1.bf16.msra.mxu0 %v1929
    %2383 = vmatprep.subr.bf16.mxu0 %v1934
    %2384 = vmatpush1.bf16.msra.mxu0 %v1933
    %2385 = vmatprep.subr.bf16.mxu0 %v1938
    %2386 = vmatpush1.bf16.msra.mxu0 %v1937
    %2387 = vmatprep.subr.bf16.mxu0 %v1942
    %2388 = vmatpush1.bf16.msra.mxu0 %v1941
    %2389 = vmatprep.subr.bf16.mxu0 %v1946
    %2390 = vmatpush1.bf16.msra.mxu0 %v1945
    %2391 = vmatprep.subr.bf16.mxu0 %v1950
    %2392 = vmatpush1.bf16.msra.mxu0 %v1949
    %2393 = vmatprep.subr.bf16.mxu0 %v1954
    %2394 = vmatpush1.bf16.msra.mxu0 %v1953
    %2395 = vmatprep.subr.bf16.mxu0 %v1958
    %2396 = vmatpush1.bf16.msra.mxu0 %v1957
    %2397 = vmatprep.subr.bf16.mxu0 %v1962
    %2398 = vmatpush1.bf16.msra.mxu0 %v1961
    %2399 = vmatprep.mubr.bf16.mxu0 %v724
    %2400 = vmatmul.mubr.bf16.gmra.mrb[0].mxu0 %v723
    %v2401 = vpop.f32.mrb[0].mxu0
    %v2402 = vadd.f32 %v2361, %v2401
    %v2403 = vpop.f32.mrb[0].mxu0
    %v2404 = vadd.f32 %v2363, %v2403
    %v2405 = vpop.f32.mrb[0].mxu0
    %v2406 = vpop.f32.mrb[0].mxu0
    %2407 = vdwg.mxu0
    %2408 = vmatprep.subr.bf16.mxu0 %v1966
    %2409 = vmatpush1.bf16.msra.mxu0 %v1965
    %2410 = vmatprep.subr.bf16.mxu0 %v1970
    %2411 = vmatpush1.bf16.msra.mxu0 %v1969
    %2412 = vmatprep.subr.bf16.mxu0 %v1974
    %2413 = vmatpush1.bf16.msra.mxu0 %v1973
    %2414 = vmatprep.subr.bf16.mxu0 %v1978
    %2415 = vmatpush1.bf16.msra.mxu0 %v1977
    %2416 = vmatprep.subr.bf16.mxu0 %v1982
    %2417 = vmatpush1.bf16.msra.mxu0 %v1981
    %2418 = vmatprep.subr.bf16.mxu0 %v1986
    %2419 = vmatpush1.bf16.msra.mxu0 %v1985
    %2420 = vmatprep.subr.bf16.mxu0 %v1990
    %2421 = vmatpush1.bf16.msra.mxu0 %v1989
    %2422 = vmatprep.subr.bf16.mxu0 %v1994
    %2423 = vmatpush1.bf16.msra.mxu0 %v1993
    %2424 = vmatprep.subr.bf16.mxu0 %v1998
    %2425 = vmatpush1.bf16.msra.mxu0 %v1997
    %2426 = vmatprep.subr.bf16.mxu0 %v2002
    %2427 = vmatpush1.bf16.msra.mxu0 %v2001
    %2428 = vmatprep.subr.bf16.mxu0 %v2006
    %2429 = vmatpush1.bf16.msra.mxu0 %v2005
    %2430 = vmatprep.subr.bf16.mxu0 %v2010
    %2431 = vmatpush1.bf16.msra.mxu0 %v2009
    %2432 = vmatprep.subr.bf16.mxu0 %v2014
    %2433 = vmatpush1.bf16.msra.mxu0 %v2013
    %2434 = vmatprep.subr.bf16.mxu0 %v2018
    %2435 = vmatpush1.bf16.msra.mxu0 %v2017
    %2436 = vmatprep.subr.bf16.mxu0 %v2022
    %2437 = vmatpush1.bf16.msra.mxu0 %v2021
    %2438 = vmatprep.subr.bf16.mxu0 %v2026
    %2439 = vmatpush1.bf16.msra.mxu0 %v2025
    %2440 = vmatprep.mubr.bf16.mxu0 %v726
    %2441 = vmatmul.mubr.bf16.gmra.mrb[0].mxu0 %v725
    %v2442 = vpop.f32.mrb[0].mxu0
    %v2443 = vadd.f32 %v2402, %v2442
    %v2444 = vpop.f32.mrb[0].mxu0
    %v2445 = vadd.f32 %v2404, %v2444
    %v2446 = vpop.f32.mrb[0].mxu0
    %v2447 = vpop.f32.mrb[0].mxu0
    %2448 = vdwg.mxu0
    %2449 = vmatprep.subr.bf16.mxu0 %v1776
    %2450 = vmatpush1.bf16.msra.mxu0 %v1775
    %2451 = vmatprep.subr.bf16.mxu0 %v1780
    %2452 = vmatpush1.bf16.msra.mxu0 %v1779
    %2453 = vmatprep.subr.bf16.mxu0 %v1784
    %2454 = vmatpush1.bf16.msra.mxu0 %v1783
    %2455 = vmatprep.subr.bf16.mxu0 %v1788
    %2456 = vmatpush1.bf16.msra.mxu0 %v1787
    %2457 = vmatprep.subr.bf16.mxu0 %v1792
    %2458 = vmatpush1.bf16.msra.mxu0 %v1791
    %2459 = vmatprep.subr.bf16.mxu0 %v1796
    %2460 = vmatpush1.bf16.msra.mxu0 %v1795
    %2461 = vmatprep.subr.bf16.mxu0 %v1800
    %2462 = vmatpush1.bf16.msra.mxu0 %v1799
    %2463 = vmatprep.subr.bf16.mxu0 %v1804
    %2464 = vmatpush1.bf16.msra.mxu0 %v1803
    %2465 = vmatprep.subr.bf16.mxu0 %v1808
    %2466 = vmatpush1.bf16.msra.mxu0 %v1807
    %2467 = vmatprep.subr.bf16.mxu0 %v1812
    %2468 = vmatpush1.bf16.msra.mxu0 %v1811
    %2469 = vmatprep.subr.bf16.mxu0 %v1816
    %2470 = vmatpush1.bf16.msra.mxu0 %v1815
    %2471 = vmatprep.subr.bf16.mxu0 %v1820
    %2472 = vmatpush1.bf16.msra.mxu0 %v1819
    %2473 = vmatprep.subr.bf16.mxu0 %v1824
    %2474 = vmatpush1.bf16.msra.mxu0 %v1823
    %2475 = vmatprep.subr.bf16.mxu0 %v1828
    %2476 = vmatpush1.bf16.msra.mxu0 %v1827
    %2477 = vmatprep.subr.bf16.mxu0 %v1832
    %2478 = vmatpush1.bf16.msra.mxu0 %v1831
    %2479 = vmatprep.subr.bf16.mxu0 %v1836
    %2480 = vmatpush1.bf16.msra.mxu0 %v1835
    %2481 = vmatprep.mubr.bf16.mxu0 %v720
    %2482 = vmatmul.mubr.bf16.gmra.mrb[0].mxu0 %v719
    %v2483 = vpop.f32.mrb[0].mxu0
    %v2484 = vadd.f32 %v996, %v2483
    %v2485 = vpop.f32.mrb[0].mxu0
    %v2486 = vadd.f32 %v1000, %v2485
    %v2487 = vpop.f32.mrb[0].mxu0
    %v2488 = vpop.f32.mrb[0].mxu0
    %2489 = vdwg.mxu0
    %2490 = vmatprep.subr.bf16.mxu0 %v1840
    %2491 = vmatpush1.bf16.msra.mxu0 %v1839
    %2492 = vmatprep.subr.bf16.mxu0 %v1844
    %2493 = vmatpush1.bf16.msra.mxu0 %v1843
    %2494 = vmatprep.subr.bf16.mxu0 %v1848
    %2495 = vmatpush1.bf16.msra.mxu0 %v1847
    %2496 = vmatprep.subr.bf16.mxu0 %v1852
    %2497 = vmatpush1.bf16.msra.mxu0 %v1851
    %2498 = vmatprep.subr.bf16.mxu0 %v1856
    %2499 = vmatpush1.bf16.msra.mxu0 %v1855
    %2500 = vmatprep.subr.bf16.mxu0 %v1860
    %2501 = vmatpush1.bf16.msra.mxu0 %v1859
    %2502 = vmatprep.subr.bf16.mxu0 %v1864
    %2503 = vmatpush1.bf16.msra.mxu0 %v1863
    %2504 = vmatprep.subr.bf16.mxu0 %v1868
    %2505 = vmatpush1.bf16.msra.mxu0 %v1867
    %2506 = vmatprep.subr.bf16.mxu0 %v1872
    %2507 = vmatpush1.bf16.msra.mxu0 %v1871
    %2508 = vmatprep.subr.bf16.mxu0 %v1876
    %2509 = vmatpush1.bf16.msra.mxu0 %v1875
    %2510 = vmatprep.subr.bf16.mxu0 %v1880
    %2511 = vmatpush1.bf16.msra.mxu0 %v1879
    %2512 = vmatprep.subr.bf16.mxu0 %v1884
    %2513 = vmatpush1.bf16.msra.mxu0 %v1883
    %2514 = vmatprep.subr.bf16.mxu0 %v1888
    %2515 = vmatpush1.bf16.msra.mxu0 %v1887
    %2516 = vmatprep.subr.bf16.mxu0 %v1892
    %2517 = vmatpush1.bf16.msra.mxu0 %v1891
    %2518 = vmatprep.subr.bf16.mxu0 %v1896
    %2519 = vmatpush1.bf16.msra.mxu0 %v1895
    %2520 = vmatprep.subr.bf16.mxu0 %v1900
    %2521 = vmatpush1.bf16.msra.mxu0 %v1899
    %2522 = vmatprep.mubr.bf16.mxu0 %v722
    %2523 = vmatmul.mubr.bf16.gmra.mrb[0].mxu0 %v721
    %v2524 = vpop.f32.mrb[0].mxu0
    %v2525 = vadd.f32 %v2484, %v2524
    %v2526 = vpop.f32.mrb[0].mxu0
    %v2527 = vadd.f32 %v2486, %v2526
    %v2528 = vpop.f32.mrb[0].mxu0
    %v2529 = vpop.f32.mrb[0].mxu0
    %2530 = vdwg.mxu0
    %2531 = vmatprep.subr.bf16.mxu0 %v1904
    %2532 = vmatpush1.bf16.msra.mxu0 %v1903
    %2533 = vmatprep.subr.bf16.mxu0 %v1908
    %2534 = vmatpush1.bf16.msra.mxu0 %v1907
    %2535 = vmatprep.subr.bf16.mxu0 %v1912
    %2536 = vmatpush1.bf16.msra.mxu0 %v1911
    %2537 = vmatprep.subr.bf16.mxu0 %v1916
    %2538 = vmatpush1.bf16.msra.mxu0 %v1915
    %2539 = vmatprep.subr.bf16.mxu0 %v1920
    %2540 = vmatpush1.bf16.msra.mxu0 %v1919
    %2541 = vmatprep.subr.bf16.mxu0 %v1924
    %2542 = vmatpush1.bf16.msra.mxu0 %v1923
    %2543 = vmatprep.subr.bf16.mxu0 %v1928
    %2544 = vmatpush1.bf16.msra.mxu0 %v1927
    %2545 = vmatprep.subr.bf16.mxu0 %v1932
    %2546 = vmatpush1.bf16.msra.mxu0 %v1931
    %2547 = vmatprep.subr.bf16.mxu0 %v1936
    %2548 = vmatpush1.bf16.msra.mxu0 %v1935
    %2549 = vmatprep.subr.bf16.mxu0 %v1940
    %2550 = vmatpush1.bf16.msra.mxu0 %v1939
    %2551 = vmatprep.subr.bf16.mxu0 %v1944
    %2552 = vmatpush1.bf16.msra.mxu0 %v1943
    %2553 = vmatprep.subr.bf16.mxu0 %v1948
    %2554 = vmatpush1.bf16.msra.mxu0 %v1947
    %2555 = vmatprep.subr.bf16.mxu0 %v1952
    %2556 = vmatpush1.bf16.msra.mxu0 %v1951
    %2557 = vmatprep.subr.bf16.mxu0 %v1956
    %2558 = vmatpush1.bf16.msra.mxu0 %v1955
    %2559 = vmatprep.subr.bf16.mxu0 %v1960
    %2560 = vmatpush1.bf16.msra.mxu0 %v1959
    %2561 = vmatprep.subr.bf16.mxu0 %v1964
    %2562 = vmatpush1.bf16.msra.mxu0 %v1963
    %2563 = vmatprep.mubr.bf16.mxu0 %v724
    %2564 = vmatmul.mubr.bf16.gmra.mrb[0].mxu0 %v723
    %v2565 = vpop.f32.mrb[0].mxu0
    %v2566 = vadd.f32 %v2525, %v2565
    %v2567 = vpop.f32.mrb[0].mxu0
    %v2568 = vadd.f32 %v2527, %v2567
    %v2569 = vpop.f32.mrb[0].mxu0
    %v2570 = vpop.f32.mrb[0].mxu0
    %2571 = vdwg.mxu0
    %2572 = vmatprep.subr.bf16.mxu0 %v1968
    %2573 = vmatpush1.bf16.msra.mxu0 %v1967
    %2574 = vmatprep.subr.bf16.mxu0 %v1972
    %2575 = vmatpush1.bf16.msra.mxu0 %v1971
    %2576 = vmatprep.subr.bf16.mxu0 %v1976
    %2577 = vmatpush1.bf16.msra.mxu0 %v1975
    %2578 = vmatprep.subr.bf16.mxu0 %v1980
    %2579 = vmatpush1.bf16.msra.mxu0 %v1979
    %2580 = vmatprep.subr.bf16.mxu0 %v1984
    %2581 = vmatpush1.bf16.msra.mxu0 %v1983
    %2582 = vmatprep.subr.bf16.mxu0 %v1988
    %2583 = vmatpush1.bf16.msra.mxu0 %v1987
    %2584 = vmatprep.subr.bf16.mxu0 %v1992
    %2585 = vmatpush1.bf16.msra.mxu0 %v1991
    %2586 = vmatprep.subr.bf16.mxu0 %v1996
    %2587 = vmatpush1.bf16.msra.mxu0 %v1995
    %2588 = vmatprep.subr.bf16.mxu0 %v2000
    %2589 = vmatpush1.bf16.msra.mxu0 %v1999
    %2590 = vmatprep.subr.bf16.mxu0 %v2004
    %2591 = vmatpush1.bf16.msra.mxu0 %v2003
    %2592 = vmatprep.subr.bf16.mxu0 %v2008
    %2593 = vmatpush1.bf16.msra.mxu0 %v2007
    %2594 = vmatprep.subr.bf16.mxu0 %v2012
    %2595 = vmatpush1.bf16.msra.mxu0 %v2011
    %2596 = vmatprep.subr.bf16.mxu0 %v2016
    %2597 = vmatpush1.bf16.msra.mxu0 %v2015
    %2598 = vmatprep.subr.bf16.mxu0 %v2020
    %2599 = vmatpush1.bf16.msra.mxu0 %v2019
    %2600 = vmatprep.subr.bf16.mxu0 %v2024
    %2601 = vmatpush1.bf16.msra.mxu0 %v2023
    %2602 = vmatprep.subr.bf16.mxu0 %v2028
    %2603 = vmatpush1.bf16.msra.mxu0 %v2027
    %2604 = vmatprep.mubr.bf16.mxu0 %v726
    %2605 = vmatmul.mubr.bf16.gmra.mrb[0].mxu0 %v725
    %v2606 = vpop.f32.mrb[0].mxu0
    %v2607 = vadd.f32 %v2566, %v2606
    %v2608 = vpop.f32.mrb[0].mxu0
    %v2609 = vadd.f32 %v2568, %v2608
    %v2610 = vpop.f32.mrb[0].mxu0
    %v2611 = vpop.f32.mrb[0].mxu0
    %2612 = vdwg.mxu0
    %v2613 = vmul.f32 %v2443, 0.01
    %v2614 = vmul.f32 %v2445, 0.01
    %v2615 = vmul.f32 %v2607, 0.01
    %v2616 = vmul.f32 %v2609, 0.01
    %v2617 = vmax.f32 %v2443, %v2613
    %v2618 = vmax.f32 %v2445, %v2614
    %v2619 = vmax.f32 %v2607, %v2615
    %v2620 = vmax.f32 %v2609, %v2616
    %v2621 = vpack.c.bf16 %v2617, %v2617
    %v2622 = vpack.c.bf16 %v2618, %v2618
    %v2623 = vpack.c.bf16 %v2619, %v2619
    %v2624 = vpack.c.bf16 %v2620, %v2620
    %v2625 = vld [vmem:[#allocation11] sm:$0xff]
    %v2626 = vld [vmem:[#allocation11 + $0x8] sm:$0xff]
    %v2627 = vld [vmem:[#allocation11 + $0x10] sm:$0xff]
    %v2628 = vld [vmem:[#allocation11 + $0x18] sm:$0xff]
    %v2629 = vld [vmem:[#allocation11 + $0x20] sm:$0xff]
    %v2630 = vld [vmem:[#allocation11 + $0x28] sm:$0xff]
    %v2631 = vld [vmem:[#allocation11 + $0x30] sm:$0xff]
    %v2632 = vld [vmem:[#allocation11 + $0x38] sm:$0xff]
    %v2633 = vld [vmem:[#allocation11 + $0x40] sm:$0xff]
    %v2634 = vld [vmem:[#allocation11 + $0x48] sm:$0xff]
    %v2635 = vld [vmem:[#allocation11 + $0x50] sm:$0xff]
    %v2636 = vld [vmem:[#allocation11 + $0x58] sm:$0xff]
    %v2637 = vld [vmem:[#allocation11 + $0x60] sm:$0xff]
    %v2638 = vld [vmem:[#allocation11 + $0x68] sm:$0xff]
    %v2639 = vld [vmem:[#allocation11 + $0x70] sm:$0xff]
    %v2640 = vld [vmem:[#allocation11 + $0x78] sm:$0xff]
    %v2641 = vld [vmem:[#allocation11 + $0x80] sm:$0xff]
    %v2642 = vld [vmem:[#allocation11 + $0x88] sm:$0xff]
    %v2643 = vld [vmem:[#allocation11 + $0x90] sm:$0xff]
    %v2644 = vld [vmem:[#allocation11 + $0x98] sm:$0xff]
    %v2645 = vld [vmem:[#allocation11 + $0xa0] sm:$0xff]
    %v2646 = vld [vmem:[#allocation11 + $0xa8] sm:$0xff]
    %v2647 = vld [vmem:[#allocation11 + $0xb0] sm:$0xff]
    %v2648 = vld [vmem:[#allocation11 + $0xb8] sm:$0xff]
    %v2649 = vld [vmem:[#allocation11 + $0xc0] sm:$0xff]
    %v2650 = vld [vmem:[#allocation11 + $0xc8] sm:$0xff]
    %v2651 = vld [vmem:[#allocation11 + $0xd0] sm:$0xff]
    %v2652 = vld [vmem:[#allocation11 + $0xd8] sm:$0xff]
    %v2653 = vld [vmem:[#allocation11 + $0xe0] sm:$0xff]
    %v2654 = vld [vmem:[#allocation11 + $0xe8] sm:$0xff]
    %v2655 = vld [vmem:[#allocation11 + $0xf0] sm:$0xff]
    %v2656 = vld [vmem:[#allocation11 + $0xf8] sm:$0xff]
    %v2657 = vld [vmem:[#allocation11 + $0x100] sm:$0xff]
    %v2658 = vld [vmem:[#allocation11 + $0x108] sm:$0xff]
    %v2659 = vld [vmem:[#allocation11 + $0x110] sm:$0xff]
    %v2660 = vld [vmem:[#allocation11 + $0x118] sm:$0xff]
    %v2661 = vld [vmem:[#allocation11 + $0x120] sm:$0xff]
    %v2662 = vld [vmem:[#allocation11 + $0x128] sm:$0xff]
    %v2663 = vld [vmem:[#allocation11 + $0x130] sm:$0xff]
    %v2664 = vld [vmem:[#allocation11 + $0x138] sm:$0xff]
    %v2665 = vld [vmem:[#allocation11 + $0x140] sm:$0xff]
    %v2666 = vld [vmem:[#allocation11 + $0x148] sm:$0xff]
    %v2667 = vld [vmem:[#allocation11 + $0x150] sm:$0xff]
    %v2668 = vld [vmem:[#allocation11 + $0x158] sm:$0xff]
    %v2669 = vld [vmem:[#allocation11 + $0x160] sm:$0xff]
    %v2670 = vld [vmem:[#allocation11 + $0x168] sm:$0xff]
    %v2671 = vld [vmem:[#allocation11 + $0x170] sm:$0xff]
    %v2672 = vld [vmem:[#allocation11 + $0x178] sm:$0xff]
    %v2673 = vld [vmem:[#allocation11 + $0x180] sm:$0xff]
    %v2674 = vld [vmem:[#allocation11 + $0x188] sm:$0xff]
    %v2675 = vld [vmem:[#allocation11 + $0x190] sm:$0xff]
    %v2676 = vld [vmem:[#allocation11 + $0x198] sm:$0xff]
    %v2677 = vld [vmem:[#allocation11 + $0x1a0] sm:$0xff]
    %v2678 = vld [vmem:[#allocation11 + $0x1a8] sm:$0xff]
    %v2679 = vld [vmem:[#allocation11 + $0x1b0] sm:$0xff]
    %v2680 = vld [vmem:[#allocation11 + $0x1b8] sm:$0xff]
    %v2681 = vld [vmem:[#allocation11 + $0x1c0] sm:$0xff]
    %v2682 = vld [vmem:[#allocation11 + $0x1c8] sm:$0xff]
    %v2683 = vld [vmem:[#allocation11 + $0x1d0] sm:$0xff]
    %v2684 = vld [vmem:[#allocation11 + $0x1d8] sm:$0xff]
    %v2685 = vld [vmem:[#allocation11 + $0x1e0] sm:$0xff]
    %v2686 = vld [vmem:[#allocation11 + $0x1e8] sm:$0xff]
    %v2687 = vld [vmem:[#allocation11 + $0x1f0] sm:$0xff]
    %v2688 = vld [vmem:[#allocation11 + $0x1f8] sm:$0xff]
    %v2689 = vld [vmem:[#allocation11 + $0x200] sm:$0xff]
    %v2690 = vld [vmem:[#allocation11 + $0x208] sm:$0xff]
    %v2691 = vld [vmem:[#allocation11 + $0x210] sm:$0xff]
    %v2692 = vld [vmem:[#allocation11 + $0x218] sm:$0xff]
    %v2693 = vld [vmem:[#allocation11 + $0x220] sm:$0xff]
    %v2694 = vld [vmem:[#allocation11 + $0x228] sm:$0xff]
    %v2695 = vld [vmem:[#allocation11 + $0x230] sm:$0xff]
    %v2696 = vld [vmem:[#allocation11 + $0x238] sm:$0xff]
    %v2697 = vld [vmem:[#allocation11 + $0x240] sm:$0xff]
    %v2698 = vld [vmem:[#allocation11 + $0x248] sm:$0xff]
    %v2699 = vld [vmem:[#allocation11 + $0x250] sm:$0xff]
    %v2700 = vld [vmem:[#allocation11 + $0x258] sm:$0xff]
    %v2701 = vld [vmem:[#allocation11 + $0x260] sm:$0xff]
    %v2702 = vld [vmem:[#allocation11 + $0x268] sm:$0xff]
    %v2703 = vld [vmem:[#allocation11 + $0x270] sm:$0xff]
    %v2704 = vld [vmem:[#allocation11 + $0x278] sm:$0xff]
    %v2705 = vld [vmem:[#allocation11 + $0x280] sm:$0xff]
    %v2706 = vld [vmem:[#allocation11 + $0x288] sm:$0xff]
    %v2707 = vld [vmem:[#allocation11 + $0x290] sm:$0xff]
    %v2708 = vld [vmem:[#allocation11 + $0x298] sm:$0xff]
    %v2709 = vld [vmem:[#allocation11 + $0x2a0] sm:$0xff]
    %v2710 = vld [vmem:[#allocation11 + $0x2a8] sm:$0xff]
    %v2711 = vld [vmem:[#allocation11 + $0x2b0] sm:$0xff]
    %v2712 = vld [vmem:[#allocation11 + $0x2b8] sm:$0xff]
    %v2713 = vld [vmem:[#allocation11 + $0x2c0] sm:$0xff]
    %v2714 = vld [vmem:[#allocation11 + $0x2c8] sm:$0xff]
    %v2715 = vld [vmem:[#allocation11 + $0x2d0] sm:$0xff]
    %v2716 = vld [vmem:[#allocation11 + $0x2d8] sm:$0xff]
    %v2717 = vld [vmem:[#allocation11 + $0x2e0] sm:$0xff]
    %v2718 = vld [vmem:[#allocation11 + $0x2e8] sm:$0xff]
    %v2719 = vld [vmem:[#allocation11 + $0x2f0] sm:$0xff]
    %v2720 = vld [vmem:[#allocation11 + $0x2f8] sm:$0xff]
    %v2721 = vld [vmem:[#allocation11 + $0x300] sm:$0xff]
    %v2722 = vld [vmem:[#allocation11 + $0x308] sm:$0xff]
    %v2723 = vld [vmem:[#allocation11 + $0x310] sm:$0xff]
    %v2724 = vld [vmem:[#allocation11 + $0x318] sm:$0xff]
    %v2725 = vld [vmem:[#allocation11 + $0x320] sm:$0xff]
    %v2726 = vld [vmem:[#allocation11 + $0x328] sm:$0xff]
    %v2727 = vld [vmem:[#allocation11 + $0x330] sm:$0xff]
    %v2728 = vld [vmem:[#allocation11 + $0x338] sm:$0xff]
    %v2729 = vld [vmem:[#allocation11 + $0x340] sm:$0xff]
    %v2730 = vld [vmem:[#allocation11 + $0x348] sm:$0xff]
    %v2731 = vld [vmem:[#allocation11 + $0x350] sm:$0xff]
    %v2732 = vld [vmem:[#allocation11 + $0x358] sm:$0xff]
    %v2733 = vld [vmem:[#allocation11 + $0x360] sm:$0xff]
    %v2734 = vld [vmem:[#allocation11 + $0x368] sm:$0xff]
    %v2735 = vld [vmem:[#allocation11 + $0x370] sm:$0xff]
    %v2736 = vld [vmem:[#allocation11 + $0x378] sm:$0xff]
    %v2737 = vld [vmem:[#allocation11 + $0x380] sm:$0xff]
    %v2738 = vld [vmem:[#allocation11 + $0x388] sm:$0xff]
    %v2739 = vld [vmem:[#allocation11 + $0x390] sm:$0xff]
    %v2740 = vld [vmem:[#allocation11 + $0x398] sm:$0xff]
    %v2741 = vld [vmem:[#allocation11 + $0x3a0] sm:$0xff]
    %v2742 = vld [vmem:[#allocation11 + $0x3a8] sm:$0xff]
    %v2743 = vld [vmem:[#allocation11 + $0x3b0] sm:$0xff]
    %v2744 = vld [vmem:[#allocation11 + $0x3b8] sm:$0xff]
    %v2745 = vld [vmem:[#allocation11 + $0x3c0] sm:$0xff]
    %v2746 = vld [vmem:[#allocation11 + $0x3c8] sm:$0xff]
    %v2747 = vld [vmem:[#allocation11 + $0x3d0] sm:$0xff]
    %v2748 = vld [vmem:[#allocation11 + $0x3d8] sm:$0xff]
    %v2749 = vld [vmem:[#allocation11 + $0x3e0] sm:$0xff]
    %v2750 = vld [vmem:[#allocation11 + $0x3e8] sm:$0xff]
    %v2751 = vld [vmem:[#allocation11 + $0x3f0] sm:$0xff]
    %v2752 = vld [vmem:[#allocation11 + $0x3f8] sm:$0xff]
    %v2753 = vld [vmem:[%s8] sm:$0xf]
    %v2755 = vlaneseq
    %v2756 = vshrl.u32 %v2755, 7
    %v2757 = vsub.s32 0, %v2756
    %v2758 = vrot.slane %v2753, %v2757
    %v2759 = vlaneseq
    %v2760 = vshrl.u32 %v2759, 7
    %v2761 = vsub.s32 1, %v2760
    %v2762 = vrot.slane %v2753, %v2761
    %v2763 = vlaneseq
    %v2764 = vshrl.u32 %v2763, 7
    %v2765 = vsub.s32 2, %v2764
    %v2766 = vrot.slane %v2753, %v2765
    %v2767 = vlaneseq
    %v2768 = vshrl.u32 %v2767, 7
    %v2769 = vsub.s32 3, %v2768
    %v2770 = vrot.slane %v2753, %v2769
    %v2903 = vunpack.c.l.b16 %v2625
    %v2904 = vunpack.c.h.b16 %v2625
    %v2905 = vunpack.c.l.b16 %v2626
    %v2906 = vunpack.c.h.b16 %v2626
    %v2907 = vunpack.c.l.b16 %v2627
    %v2908 = vunpack.c.h.b16 %v2627
    %v2909 = vunpack.c.l.b16 %v2628
    %v2910 = vunpack.c.h.b16 %v2628
    %v2911 = vunpack.c.l.b16 %v2629
    %v2912 = vunpack.c.h.b16 %v2629
    %v2913 = vunpack.c.l.b16 %v2630
    %v2914 = vunpack.c.h.b16 %v2630
    %v2915 = vunpack.c.l.b16 %v2631
    %v2916 = vunpack.c.h.b16 %v2631
    %v2917 = vunpack.c.l.b16 %v2632
    %v2918 = vunpack.c.h.b16 %v2632
    %v2919 = vunpack.c.l.b16 %v2633
    %v2920 = vunpack.c.h.b16 %v2633
    %v2921 = vunpack.c.l.b16 %v2634
    %v2922 = vunpack.c.h.b16 %v2634
    %v2923 = vunpack.c.l.b16 %v2635
    %v2924 = vunpack.c.h.b16 %v2635
    %v2925 = vunpack.c.l.b16 %v2636
    %v2926 = vunpack.c.h.b16 %v2636
    %v2927 = vunpack.c.l.b16 %v2637
    %v2928 = vunpack.c.h.b16 %v2637
    %v2929 = vunpack.c.l.b16 %v2638
    %v2930 = vunpack.c.h.b16 %v2638
    %v2931 = vunpack.c.l.b16 %v2639
    %v2932 = vunpack.c.h.b16 %v2639
    %v2933 = vunpack.c.l.b16 %v2640
    %v2934 = vunpack.c.h.b16 %v2640
    %v2935 = vunpack.c.l.b16 %v2641
    %v2936 = vunpack.c.h.b16 %v2641
    %v2937 = vunpack.c.l.b16 %v2642
    %v2938 = vunpack.c.h.b16 %v2642
    %v2939 = vunpack.c.l.b16 %v2643
    %v2940 = vunpack.c.h.b16 %v2643
    %v2941 = vunpack.c.l.b16 %v2644
    %v2942 = vunpack.c.h.b16 %v2644
    %v2943 = vunpack.c.l.b16 %v2645
    %v2944 = vunpack.c.h.b16 %v2645
    %v2945 = vunpack.c.l.b16 %v2646
    %v2946 = vunpack.c.h.b16 %v2646
    %v2947 = vunpack.c.l.b16 %v2647
    %v2948 = vunpack.c.h.b16 %v2647
    %v2949 = vunpack.c.l.b16 %v2648
    %v2950 = vunpack.c.h.b16 %v2648
    %v2951 = vunpack.c.l.b16 %v2649
    %v2952 = vunpack.c.h.b16 %v2649
    %v2953 = vunpack.c.l.b16 %v2650
    %v2954 = vunpack.c.h.b16 %v2650
    %v2955 = vunpack.c.l.b16 %v2651
    %v2956 = vunpack.c.h.b16 %v2651
    %v2957 = vunpack.c.l.b16 %v2652
    %v2958 = vunpack.c.h.b16 %v2652
    %v2959 = vunpack.c.l.b16 %v2653
    %v2960 = vunpack.c.h.b16 %v2653
    %v2961 = vunpack.c.l.b16 %v2654
    %v2962 = vunpack.c.h.b16 %v2654
    %v2963 = vunpack.c.l.b16 %v2655
    %v2964 = vunpack.c.h.b16 %v2655
    %v2965 = vunpack.c.l.b16 %v2656
    %v2966 = vunpack.c.h.b16 %v2656
    %v2967 = vunpack.c.l.b16 %v2657
    %v2968 = vunpack.c.h.b16 %v2657
    %v2969 = vunpack.c.l.b16 %v2658
    %v2970 = vunpack.c.h.b16 %v2658
    %v2971 = vunpack.c.l.b16 %v2659
    %v2972 = vunpack.c.h.b16 %v2659
    %v2973 = vunpack.c.l.b16 %v2660
    %v2974 = vunpack.c.h.b16 %v2660
    %v2975 = vunpack.c.l.b16 %v2661
    %v2976 = vunpack.c.h.b16 %v2661
    %v2977 = vunpack.c.l.b16 %v2662
    %v2978 = vunpack.c.h.b16 %v2662
    %v2979 = vunpack.c.l.b16 %v2663
    %v2980 = vunpack.c.h.b16 %v2663
    %v2981 = vunpack.c.l.b16 %v2664
    %v2982 = vunpack.c.h.b16 %v2664
    %v2983 = vunpack.c.l.b16 %v2665
    %v2984 = vunpack.c.h.b16 %v2665
    %v2985 = vunpack.c.l.b16 %v2666
    %v2986 = vunpack.c.h.b16 %v2666
    %v2987 = vunpack.c.l.b16 %v2667
    %v2988 = vunpack.c.h.b16 %v2667
    %v2989 = vunpack.c.l.b16 %v2668
    %v2990 = vunpack.c.h.b16 %v2668
    %v2991 = vunpack.c.l.b16 %v2669
    %v2992 = vunpack.c.h.b16 %v2669
    %v2993 = vunpack.c.l.b16 %v2670
    %v2994 = vunpack.c.h.b16 %v2670
    %v2995 = vunpack.c.l.b16 %v2671
    %v2996 = vunpack.c.h.b16 %v2671
    %v2997 = vunpack.c.l.b16 %v2672
    %v2998 = vunpack.c.h.b16 %v2672
    %v2999 = vunpack.c.l.b16 %v2673
    %v3000 = vunpack.c.h.b16 %v2673
    %v3001 = vunpack.c.l.b16 %v2674
    %v3002 = vunpack.c.h.b16 %v2674
    %v3003 = vunpack.c.l.b16 %v2675
    %v3004 = vunpack.c.h.b16 %v2675
    %v3005 = vunpack.c.l.b16 %v2676
    %v3006 = vunpack.c.h.b16 %v2676
    %v3007 = vunpack.c.l.b16 %v2677
    %v3008 = vunpack.c.h.b16 %v2677
    %v3009 = vunpack.c.l.b16 %v2678
    %v3010 = vunpack.c.h.b16 %v2678
    %v3011 = vunpack.c.l.b16 %v2679
    %v3012 = vunpack.c.h.b16 %v2679
    %v3013 = vunpack.c.l.b16 %v2680
    %v3014 = vunpack.c.h.b16 %v2680
    %v3015 = vunpack.c.l.b16 %v2681
    %v3016 = vunpack.c.h.b16 %v2681
    %v3017 = vunpack.c.l.b16 %v2682
    %v3018 = vunpack.c.h.b16 %v2682
    %v3019 = vunpack.c.l.b16 %v2683
    %v3020 = vunpack.c.h.b16 %v2683
    %v3021 = vunpack.c.l.b16 %v2684
    %v3022 = vunpack.c.h.b16 %v2684
    %v3023 = vunpack.c.l.b16 %v2685
    %v3024 = vunpack.c.h.b16 %v2685
    %v3025 = vunpack.c.l.b16 %v2686
    %v3026 = vunpack.c.h.b16 %v2686
    %v3027 = vunpack.c.l.b16 %v2687
    %v3028 = vunpack.c.h.b16 %v2687
    %v3029 = vunpack.c.l.b16 %v2688
    %v3030 = vunpack.c.h.b16 %v2688
    %v3031 = vunpack.c.l.b16 %v2689
    %v3032 = vunpack.c.h.b16 %v2689
    %v3033 = vunpack.c.l.b16 %v2690
    %v3034 = vunpack.c.h.b16 %v2690
    %v3035 = vunpack.c.l.b16 %v2691
    %v3036 = vunpack.c.h.b16 %v2691
    %v3037 = vunpack.c.l.b16 %v2692
    %v3038 = vunpack.c.h.b16 %v2692
    %v3039 = vunpack.c.l.b16 %v2693
    %v3040 = vunpack.c.h.b16 %v2693
    %v3041 = vunpack.c.l.b16 %v2694
    %v3042 = vunpack.c.h.b16 %v2694
    %v3043 = vunpack.c.l.b16 %v2695
    %v3044 = vunpack.c.h.b16 %v2695
    %v3045 = vunpack.c.l.b16 %v2696
    %v3046 = vunpack.c.h.b16 %v2696
    %v3047 = vunpack.c.l.b16 %v2697
    %v3048 = vunpack.c.h.b16 %v2697
    %v3049 = vunpack.c.l.b16 %v2698
    %v3050 = vunpack.c.h.b16 %v2698
    %v3051 = vunpack.c.l.b16 %v2699
    %v3052 = vunpack.c.h.b16 %v2699
    %v3053 = vunpack.c.l.b16 %v2700
    %v3054 = vunpack.c.h.b16 %v2700
    %v3055 = vunpack.c.l.b16 %v2701
    %v3056 = vunpack.c.h.b16 %v2701
    %v3057 = vunpack.c.l.b16 %v2702
    %v3058 = vunpack.c.h.b16 %v2702
    %v3059 = vunpack.c.l.b16 %v2703
    %v3060 = vunpack.c.h.b16 %v2703
    %v3061 = vunpack.c.l.b16 %v2704
    %v3062 = vunpack.c.h.b16 %v2704
    %v3063 = vunpack.c.l.b16 %v2705
    %v3064 = vunpack.c.h.b16 %v2705
    %v3065 = vunpack.c.l.b16 %v2706
    %v3066 = vunpack.c.h.b16 %v2706
    %v3067 = vunpack.c.l.b16 %v2707
    %v3068 = vunpack.c.h.b16 %v2707
    %v3069 = vunpack.c.l.b16 %v2708
    %v3070 = vunpack.c.h.b16 %v2708
    %v3071 = vunpack.c.l.b16 %v2709
    %v3072 = vunpack.c.h.b16 %v2709
    %v3073 = vunpack.c.l.b16 %v2710
    %v3074 = vunpack.c.h.b16 %v2710
    %v3075 = vunpack.c.l.b16 %v2711
    %v3076 = vunpack.c.h.b16 %v2711
    %v3077 = vunpack.c.l.b16 %v2712
    %v3078 = vunpack.c.h.b16 %v2712
    %v3079 = vunpack.c.l.b16 %v2713
    %v3080 = vunpack.c.h.b16 %v2713
    %v3081 = vunpack.c.l.b16 %v2714
    %v3082 = vunpack.c.h.b16 %v2714
    %v3083 = vunpack.c.l.b16 %v2715
    %v3084 = vunpack.c.h.b16 %v2715
    %v3085 = vunpack.c.l.b16 %v2716
    %v3086 = vunpack.c.h.b16 %v2716
    %v3087 = vunpack.c.l.b16 %v2717
    %v3088 = vunpack.c.h.b16 %v2717
    %v3089 = vunpack.c.l.b16 %v2718
    %v3090 = vunpack.c.h.b16 %v2718
    %v3091 = vunpack.c.l.b16 %v2719
    %v3092 = vunpack.c.h.b16 %v2719
    %v3093 = vunpack.c.l.b16 %v2720
    %v3094 = vunpack.c.h.b16 %v2720
    %v3095 = vunpack.c.l.b16 %v2721
    %v3096 = vunpack.c.h.b16 %v2721
    %v3097 = vunpack.c.l.b16 %v2722
    %v3098 = vunpack.c.h.b16 %v2722
    %v3099 = vunpack.c.l.b16 %v2723
    %v3100 = vunpack.c.h.b16 %v2723
    %v3101 = vunpack.c.l.b16 %v2724
    %v3102 = vunpack.c.h.b16 %v2724
    %v3103 = vunpack.c.l.b16 %v2725
    %v3104 = vunpack.c.h.b16 %v2725
    %v3105 = vunpack.c.l.b16 %v2726
    %v3106 = vunpack.c.h.b16 %v2726
    %v3107 = vunpack.c.l.b16 %v2727
    %v3108 = vunpack.c.h.b16 %v2727
    %v3109 = vunpack.c.l.b16 %v2728
    %v3110 = vunpack.c.h.b16 %v2728
    %v3111 = vunpack.c.l.b16 %v2729
    %v3112 = vunpack.c.h.b16 %v2729
    %v3113 = vunpack.c.l.b16 %v2730
    %v3114 = vunpack.c.h.b16 %v2730
    %v3115 = vunpack.c.l.b16 %v2731
    %v3116 = vunpack.c.h.b16 %v2731
    %v3117 = vunpack.c.l.b16 %v2732
    %v3118 = vunpack.c.h.b16 %v2732
    %v3119 = vunpack.c.l.b16 %v2733
    %v3120 = vunpack.c.h.b16 %v2733
    %v3121 = vunpack.c.l.b16 %v2734
    %v3122 = vunpack.c.h.b16 %v2734
    %v3123 = vunpack.c.l.b16 %v2735
    %v3124 = vunpack.c.h.b16 %v2735
    %v3125 = vunpack.c.l.b16 %v2736
    %v3126 = vunpack.c.h.b16 %v2736
    %v3127 = vunpack.c.l.b16 %v2737
    %v3128 = vunpack.c.h.b16 %v2737
    %v3129 = vunpack.c.l.b16 %v2738
    %v3130 = vunpack.c.h.b16 %v2738
    %v3131 = vunpack.c.l.b16 %v2739
    %v3132 = vunpack.c.h.b16 %v2739
    %v3133 = vunpack.c.l.b16 %v2740
    %v3134 = vunpack.c.h.b16 %v2740
    %v3135 = vunpack.c.l.b16 %v2741
    %v3136 = vunpack.c.h.b16 %v2741
    %v3137 = vunpack.c.l.b16 %v2742
    %v3138 = vunpack.c.h.b16 %v2742
    %v3139 = vunpack.c.l.b16 %v2743
    %v3140 = vunpack.c.h.b16 %v2743
    %v3141 = vunpack.c.l.b16 %v2744
    %v3142 = vunpack.c.h.b16 %v2744
    %v3143 = vunpack.c.l.b16 %v2745
    %v3144 = vunpack.c.h.b16 %v2745
    %v3145 = vunpack.c.l.b16 %v2746
    %v3146 = vunpack.c.h.b16 %v2746
    %v3147 = vunpack.c.l.b16 %v2747
    %v3148 = vunpack.c.h.b16 %v2747
    %v3149 = vunpack.c.l.b16 %v2748
    %v3150 = vunpack.c.h.b16 %v2748
    %v3151 = vunpack.c.l.b16 %v2749
    %v3152 = vunpack.c.h.b16 %v2749
    %v3153 = vunpack.c.l.b16 %v2750
    %v3154 = vunpack.c.h.b16 %v2750
    %v3155 = vunpack.c.l.b16 %v2751
    %v3156 = vunpack.c.h.b16 %v2751
    %v3157 = vunpack.c.l.b16 %v2752
    %v3158 = vunpack.c.h.b16 %v2752
    %v3159 = vpack.c.b16 %v2907, %v2903
    %v3160 = vpack.c.b16 %v2908, %v2904
    %v3161 = vpack.c.b16 %v2909, %v2905
    %v3162 = vpack.c.b16 %v2910, %v2906
    %v3163 = vpack.c.b16 %v2915, %v2911
    %v3164 = vpack.c.b16 %v2916, %v2912
    %v3165 = vpack.c.b16 %v2917, %v2913
    %v3166 = vpack.c.b16 %v2918, %v2914
    %v3167 = vpack.c.b16 %v2923, %v2919
    %v3168 = vpack.c.b16 %v2924, %v2920
    %v3169 = vpack.c.b16 %v2925, %v2921
    %v3170 = vpack.c.b16 %v2926, %v2922
    %v3171 = vpack.c.b16 %v2931, %v2927
    %v3172 = vpack.c.b16 %v2932, %v2928
    %v3173 = vpack.c.b16 %v2933, %v2929
    %v3174 = vpack.c.b16 %v2934, %v2930
    %v3175 = vpack.c.b16 %v2939, %v2935
    %v3176 = vpack.c.b16 %v2940, %v2936
    %v3177 = vpack.c.b16 %v2941, %v2937
    %v3178 = vpack.c.b16 %v2942, %v2938
    %v3179 = vpack.c.b16 %v2947, %v2943
    %v3180 = vpack.c.b16 %v2948, %v2944
    %v3181 = vpack.c.b16 %v2949, %v2945
    %v3182 = vpack.c.b16 %v2950, %v2946
    %v3183 = vpack.c.b16 %v2955, %v2951
    %v3184 = vpack.c.b16 %v2956, %v2952
    %v3185 = vpack.c.b16 %v2957, %v2953
    %v3186 = vpack.c.b16 %v2958, %v2954
    %v3187 = vpack.c.b16 %v2963, %v2959
    %v3188 = vpack.c.b16 %v2964, %v2960
    %v3189 = vpack.c.b16 %v2965, %v2961
    %v3190 = vpack.c.b16 %v2966, %v2962
    %v3191 = vpack.c.b16 %v2971, %v2967
    %v3192 = vpack.c.b16 %v2972, %v2968
    %v3193 = vpack.c.b16 %v2973, %v2969
    %v3194 = vpack.c.b16 %v2974, %v2970
    %v3195 = vpack.c.b16 %v2979, %v2975
    %v3196 = vpack.c.b16 %v2980, %v2976
    %v3197 = vpack.c.b16 %v2981, %v2977
    %v3198 = vpack.c.b16 %v2982, %v2978
    %v3199 = vpack.c.b16 %v2987, %v2983
    %v3200 = vpack.c.b16 %v2988, %v2984
    %v3201 = vpack.c.b16 %v2989, %v2985
    %v3202 = vpack.c.b16 %v2990, %v2986
    %v3203 = vpack.c.b16 %v2995, %v2991
    %v3204 = vpack.c.b16 %v2996, %v2992
    %v3205 = vpack.c.b16 %v2997, %v2993
    %v3206 = vpack.c.b16 %v2998, %v2994
    %v3207 = vpack.c.b16 %v3003, %v2999
    %v3208 = vpack.c.b16 %v3004, %v3000
    %v3209 = vpack.c.b16 %v3005, %v3001
    %v3210 = vpack.c.b16 %v3006, %v3002
    %v3211 = vpack.c.b16 %v3011, %v3007
    %v3212 = vpack.c.b16 %v3012, %v3008
    %v3213 = vpack.c.b16 %v3013, %v3009
    %v3214 = vpack.c.b16 %v3014, %v3010
    %v3215 = vpack.c.b16 %v3019, %v3015
    %v3216 = vpack.c.b16 %v3020, %v3016
    %v3217 = vpack.c.b16 %v3021, %v3017
    %v3218 = vpack.c.b16 %v3022, %v3018
    %v3219 = vpack.c.b16 %v3027, %v3023
    %v3220 = vpack.c.b16 %v3028, %v3024
    %v3221 = vpack.c.b16 %v3029, %v3025
    %v3222 = vpack.c.b16 %v3030, %v3026
    %v3223 = vpack.c.b16 %v3035, %v3031
    %v3224 = vpack.c.b16 %v3036, %v3032
    %v3225 = vpack.c.b16 %v3037, %v3033
    %v3226 = vpack.c.b16 %v3038, %v3034
    %v3227 = vpack.c.b16 %v3043, %v3039
    %v3228 = vpack.c.b16 %v3044, %v3040
    %v3229 = vpack.c.b16 %v3045, %v3041
    %v3230 = vpack.c.b16 %v3046, %v3042
    %v3231 = vpack.c.b16 %v3051, %v3047
    %v3232 = vpack.c.b16 %v3052, %v3048
    %v3233 = vpack.c.b16 %v3053, %v3049
    %v3234 = vpack.c.b16 %v3054, %v3050
    %v3235 = vpack.c.b16 %v3059, %v3055
    %v3236 = vpack.c.b16 %v3060, %v3056
    %v3237 = vpack.c.b16 %v3061, %v3057
    %v3238 = vpack.c.b16 %v3062, %v3058
    %v3239 = vpack.c.b16 %v3067, %v3063
    %v3240 = vpack.c.b16 %v3068, %v3064
    %v3241 = vpack.c.b16 %v3069, %v3065
    %v3242 = vpack.c.b16 %v3070, %v3066
    %v3243 = vpack.c.b16 %v3075, %v3071
    %v3244 = vpack.c.b16 %v3076, %v3072
    %v3245 = vpack.c.b16 %v3077, %v3073
    %v3246 = vpack.c.b16 %v3078, %v3074
    %v3247 = vpack.c.b16 %v3083, %v3079
    %v3248 = vpack.c.b16 %v3084, %v3080
    %v3249 = vpack.c.b16 %v3085, %v3081
    %v3250 = vpack.c.b16 %v3086, %v3082
    %v3251 = vpack.c.b16 %v3091, %v3087
    %v3252 = vpack.c.b16 %v3092, %v3088
    %v3253 = vpack.c.b16 %v3093, %v3089
    %v3254 = vpack.c.b16 %v3094, %v3090
    %v3255 = vpack.c.b16 %v3099, %v3095
    %v3256 = vpack.c.b16 %v3100, %v3096
    %v3257 = vpack.c.b16 %v3101, %v3097
    %v3258 = vpack.c.b16 %v3102, %v3098
    %v3259 = vpack.c.b16 %v3107, %v3103
    %v3260 = vpack.c.b16 %v3108, %v3104
    %v3261 = vpack.c.b16 %v3109, %v3105
    %v3262 = vpack.c.b16 %v3110, %v3106
    %v3263 = vpack.c.b16 %v3115, %v3111
    %v3264 = vpack.c.b16 %v3116, %v3112
    %v3265 = vpack.c.b16 %v3117, %v3113
    %v3266 = vpack.c.b16 %v3118, %v3114
    %v3267 = vpack.c.b16 %v3123, %v3119
    %v3268 = vpack.c.b16 %v3124, %v3120
    %v3269 = vpack.c.b16 %v3125, %v3121
    %v3270 = vpack.c.b16 %v3126, %v3122
    %v3271 = vpack.c.b16 %v3131, %v3127
    %v3272 = vpack.c.b16 %v3132, %v3128
    %v3273 = vpack.c.b16 %v3133, %v3129
    %v3274 = vpack.c.b16 %v3134, %v3130
    %v3275 = vpack.c.b16 %v3139, %v3135
    %v3276 = vpack.c.b16 %v3140, %v3136
    %v3277 = vpack.c.b16 %v3141, %v3137
    %v3278 = vpack.c.b16 %v3142, %v3138
    %v3279 = vpack.c.b16 %v3147, %v3143
    %v3280 = vpack.c.b16 %v3148, %v3144
    %v3281 = vpack.c.b16 %v3149, %v3145
    %v3282 = vpack.c.b16 %v3150, %v3146
    %v3283 = vpack.c.b16 %v3155, %v3151
    %v3284 = vpack.c.b16 %v3156, %v3152
    %v3285 = vpack.c.b16 %v3157, %v3153
    %v3286 = vpack.c.b16 %v3158, %v3154
    %3415 = vmatprep.subr.bf16.mxu0 %v3160
    %3416 = vmatpush1.bf16.msra.mxu0 %v3159
    %3417 = vmatprep.subr.bf16.mxu0 %v3164
    %3418 = vmatpush1.bf16.msra.mxu0 %v3163
    %3419 = vmatprep.subr.bf16.mxu0 %v3168
    %3420 = vmatpush1.bf16.msra.mxu0 %v3167
    %3421 = vmatprep.subr.bf16.mxu0 %v3172
    %3422 = vmatpush1.bf16.msra.mxu0 %v3171
    %3423 = vmatprep.subr.bf16.mxu0 %v3176
    %3424 = vmatpush1.bf16.msra.mxu0 %v3175
    %3425 = vmatprep.subr.bf16.mxu0 %v3180
    %3426 = vmatpush1.bf16.msra.mxu0 %v3179
    %3427 = vmatprep.subr.bf16.mxu0 %v3184
    %3428 = vmatpush1.bf16.msra.mxu0 %v3183
    %3429 = vmatprep.subr.bf16.mxu0 %v3188
    %3430 = vmatpush1.bf16.msra.mxu0 %v3187
    %3431 = vmatprep.subr.bf16.mxu0 %v3192
    %3432 = vmatpush1.bf16.msra.mxu0 %v3191
    %3433 = vmatprep.subr.bf16.mxu0 %v3196
    %3434 = vmatpush1.bf16.msra.mxu0 %v3195
    %3435 = vmatprep.subr.bf16.mxu0 %v3200
    %3436 = vmatpush1.bf16.msra.mxu0 %v3199
    %3437 = vmatprep.subr.bf16.mxu0 %v3204
    %3438 = vmatpush1.bf16.msra.mxu0 %v3203
    %3439 = vmatprep.subr.bf16.mxu0 %v3208
    %3440 = vmatpush1.bf16.msra.mxu0 %v3207
    %3441 = vmatprep.subr.bf16.mxu0 %v3212
    %3442 = vmatpush1.bf16.msra.mxu0 %v3211
    %3443 = vmatprep.subr.bf16.mxu0 %v3216
    %3444 = vmatpush1.bf16.msra.mxu0 %v3215
    %3445 = vmatprep.subr.bf16.mxu0 %v3220
    %3446 = vmatpush1.bf16.msra.mxu0 %v3219
    %3447 = vmatprep.mubr.bf16.mxu0 %v2622
    %3448 = vmatmul.mubr.bf16.gmra.mrb[0].mxu0 %v2621
    %v3449 = vpop.f32.mrb[0].mxu0
    %v3450 = vadd.f32 %v2758, %v3449
    %v3451 = vpop.f32.mrb[0].mxu0
    %v3452 = vadd.f32 %v2762, %v3451
    %v3453 = vpop.f32.mrb[0].mxu0
    %v3454 = vpop.f32.mrb[0].mxu0
    %3455 = vdwg.mxu0
    %3456 = vmatprep.subr.bf16.mxu0 %v3224
    %3457 = vmatpush1.bf16.msra.mxu0 %v3223
    %3458 = vmatprep.subr.bf16.mxu0 %v3228
    %3459 = vmatpush1.bf16.msra.mxu0 %v3227
    %3460 = vmatprep.subr.bf16.mxu0 %v3232
    %3461 = vmatpush1.bf16.msra.mxu0 %v3231
    %3462 = vmatprep.subr.bf16.mxu0 %v3236
    %3463 = vmatpush1.bf16.msra.mxu0 %v3235
    %3464 = vmatprep.subr.bf16.mxu0 %v3240
    %3465 = vmatpush1.bf16.msra.mxu0 %v3239
    %3466 = vmatprep.subr.bf16.mxu0 %v3244
    %3467 = vmatpush1.bf16.msra.mxu0 %v3243
    %3468 = vmatprep.subr.bf16.mxu0 %v3248
    %3469 = vmatpush1.bf16.msra.mxu0 %v3247
    %3470 = vmatprep.subr.bf16.mxu0 %v3252
    %3471 = vmatpush1.bf16.msra.mxu0 %v3251
    %3472 = vmatprep.subr.bf16.mxu0 %v3256
    %3473 = vmatpush1.bf16.msra.mxu0 %v3255
    %3474 = vmatprep.subr.bf16.mxu0 %v3260
    %3475 = vmatpush1.bf16.msra.mxu0 %v3259
    %3476 = vmatprep.subr.bf16.mxu0 %v3264
    %3477 = vmatpush1.bf16.msra.mxu0 %v3263
    %3478 = vmatprep.subr.bf16.mxu0 %v3268
    %3479 = vmatpush1.bf16.msra.mxu0 %v3267
    %3480 = vmatprep.subr.bf16.mxu0 %v3272
    %3481 = vmatpush1.bf16.msra.mxu0 %v3271
    %3482 = vmatprep.subr.bf16.mxu0 %v3276
    %3483 = vmatpush1.bf16.msra.mxu0 %v3275
    %3484 = vmatprep.subr.bf16.mxu0 %v3280
    %3485 = vmatpush1.bf16.msra.mxu0 %v3279
    %3486 = vmatprep.subr.bf16.mxu0 %v3284
    %3487 = vmatpush1.bf16.msra.mxu0 %v3283
    %3488 = vmatprep.mubr.bf16.mxu0 %v2624
    %3489 = vmatmul.mubr.bf16.gmra.mrb[0].mxu0 %v2623
    %v3490 = vpop.f32.mrb[0].mxu0
    %v3491 = vadd.f32 %v3450, %v3490
    %v3492 = vpop.f32.mrb[0].mxu0
    %v3493 = vadd.f32 %v3452, %v3492
    %v3494 = vpop.f32.mrb[0].mxu0
    %v3495 = vpop.f32.mrb[0].mxu0
    %3496 = vdwg.mxu0
    %3497 = vmatprep.subr.bf16.mxu0 %v3162
    %3498 = vmatpush1.bf16.msra.mxu0 %v3161
    %3499 = vmatprep.subr.bf16.mxu0 %v3166
    %3500 = vmatpush1.bf16.msra.mxu0 %v3165
    %3501 = vmatprep.subr.bf16.mxu0 %v3170
    %3502 = vmatpush1.bf16.msra.mxu0 %v3169
    %3503 = vmatprep.subr.bf16.mxu0 %v3174
    %3504 = vmatpush1.bf16.msra.mxu0 %v3173
    %3505 = vmatprep.subr.bf16.mxu0 %v3178
    %3506 = vmatpush1.bf16.msra.mxu0 %v3177
    %3507 = vmatprep.subr.bf16.mxu0 %v3182
    %3508 = vmatpush1.bf16.msra.mxu0 %v3181
    %3509 = vmatprep.subr.bf16.mxu0 %v3186
    %3510 = vmatpush1.bf16.msra.mxu0 %v3185
    %3511 = vmatprep.subr.bf16.mxu0 %v3190
    %3512 = vmatpush1.bf16.msra.mxu0 %v3189
    %3513 = vmatprep.subr.bf16.mxu0 %v3194
    %3514 = vmatpush1.bf16.msra.mxu0 %v3193
    %3515 = vmatprep.subr.bf16.mxu0 %v3198
    %3516 = vmatpush1.bf16.msra.mxu0 %v3197
    %3517 = vmatprep.subr.bf16.mxu0 %v3202
    %3518 = vmatpush1.bf16.msra.mxu0 %v3201
    %3519 = vmatprep.subr.bf16.mxu0 %v3206
    %3520 = vmatpush1.bf16.msra.mxu0 %v3205
    %3521 = vmatprep.subr.bf16.mxu0 %v3210
    %3522 = vmatpush1.bf16.msra.mxu0 %v3209
    %3523 = vmatprep.subr.bf16.mxu0 %v3214
    %3524 = vmatpush1.bf16.msra.mxu0 %v3213
    %3525 = vmatprep.subr.bf16.mxu0 %v3218
    %3526 = vmatpush1.bf16.msra.mxu0 %v3217
    %3527 = vmatprep.subr.bf16.mxu0 %v3222
    %3528 = vmatpush1.bf16.msra.mxu0 %v3221
    %3529 = vmatprep.mubr.bf16.mxu0 %v2622
    %3530 = vmatmul.mubr.bf16.gmra.mrb[0].mxu0 %v2621
    %v3531 = vpop.f32.mrb[0].mxu0
    %v3532 = vadd.f32 %v2766, %v3531
    %v3533 = vpop.f32.mrb[0].mxu0
    %v3534 = vadd.f32 %v2770, %v3533
    %v3535 = vpop.f32.mrb[0].mxu0
    %v3536 = vpop.f32.mrb[0].mxu0
    %3537 = vdwg.mxu0
    %3538 = vmatprep.subr.bf16.mxu0 %v3226
    %3539 = vmatpush1.bf16.msra.mxu0 %v3225
    %3540 = vmatprep.subr.bf16.mxu0 %v3230
    %3541 = vmatpush1.bf16.msra.mxu0 %v3229
    %3542 = vmatprep.subr.bf16.mxu0 %v3234
    %3543 = vmatpush1.bf16.msra.mxu0 %v3233
    %3544 = vmatprep.subr.bf16.mxu0 %v3238
    %3545 = vmatpush1.bf16.msra.mxu0 %v3237
    %3546 = vmatprep.subr.bf16.mxu0 %v3242
    %3547 = vmatpush1.bf16.msra.mxu0 %v3241
    %3548 = vmatprep.subr.bf16.mxu0 %v3246
    %3549 = vmatpush1.bf16.msra.mxu0 %v3245
    %3550 = vmatprep.subr.bf16.mxu0 %v3250
    %3551 = vmatpush1.bf16.msra.mxu0 %v3249
    %3552 = vmatprep.subr.bf16.mxu0 %v3254
    %3553 = vmatpush1.bf16.msra.mxu0 %v3253
    %3554 = vmatprep.subr.bf16.mxu0 %v3258
    %3555 = vmatpush1.bf16.msra.mxu0 %v3257
    %3556 = vmatprep.subr.bf16.mxu0 %v3262
    %3557 = vmatpush1.bf16.msra.mxu0 %v3261
    %3558 = vmatprep.subr.bf16.mxu0 %v3266
    %3559 = vmatpush1.bf16.msra.mxu0 %v3265
    %3560 = vmatprep.subr.bf16.mxu0 %v3270
    %3561 = vmatpush1.bf16.msra.mxu0 %v3269
    %3562 = vmatprep.subr.bf16.mxu0 %v3274
    %3563 = vmatpush1.bf16.msra.mxu0 %v3273
    %3564 = vmatprep.subr.bf16.mxu0 %v3278
    %3565 = vmatpush1.bf16.msra.mxu0 %v3277
    %3566 = vmatprep.subr.bf16.mxu0 %v3282
    %3567 = vmatpush1.bf16.msra.mxu0 %v3281
    %3568 = vmatprep.subr.bf16.mxu0 %v3286
    %3569 = vmatpush1.bf16.msra.mxu0 %v3285
    %3570 = vmatprep.mubr.bf16.mxu0 %v2624
    %3571 = vmatmul.mubr.bf16.gmra.mrb[0].mxu0 %v2623
    %v3572 = vpop.f32.mrb[0].mxu0
    %v3573 = vadd.f32 %v3532, %v3572
    %v3574 = vpop.f32.mrb[0].mxu0
    %v3575 = vadd.f32 %v3534, %v3574
    %v3576 = vpop.f32.mrb[0].mxu0
    %v3577 = vpop.f32.mrb[0].mxu0
    %3578 = vdwg.mxu0
    %v3579 = vmul.f32 %v3491, 0.01
    %v3580 = vmul.f32 %v3493, 0.01
    %v3581 = vmul.f32 %v3573, 0.01
    %v3582 = vmul.f32 %v3575, 0.01
    %v3583 = vmax.f32 %v3491, %v3579
    %v3584 = vmax.f32 %v3493, %v3580
    %v3585 = vmax.f32 %v3573, %v3581
    %v3586 = vmax.f32 %v3575, %v3582
    %v3587 = vpack.c.bf16 %v3583, %v3583
    %v3588 = vpack.c.bf16 %v3584, %v3584
    %v3589 = vpack.c.bf16 %v3585, %v3585
    %v3590 = vpack.c.bf16 %v3586, %v3586
    %v3591 = vld [vmem:[#allocation13] sm:$0xff]
    %v3592 = vld [vmem:[#allocation13 + $0x8] sm:$0xff]
    %v3593 = vld [vmem:[#allocation13 + $0x10] sm:$0xff]
    %v3594 = vld [vmem:[#allocation13 + $0x18] sm:$0xff]
    %v3595 = vld [vmem:[#allocation13 + $0x20] sm:$0xff]
    %v3596 = vld [vmem:[#allocation13 + $0x28] sm:$0xff]
    %v3597 = vld [vmem:[#allocation13 + $0x30] sm:$0xff]
    %v3598 = vld [vmem:[#allocation13 + $0x38] sm:$0xff]
    %v3599 = vld [vmem:[#allocation13 + $0x40] sm:$0xff]
    %v3600 = vld [vmem:[#allocation13 + $0x48] sm:$0xff]
    %v3601 = vld [vmem:[#allocation13 + $0x50] sm:$0xff]
    %v3602 = vld [vmem:[#allocation13 + $0x58] sm:$0xff]
    %v3603 = vld [vmem:[#allocation13 + $0x60] sm:$0xff]
    %v3604 = vld [vmem:[#allocation13 + $0x68] sm:$0xff]
    %v3605 = vld [vmem:[#allocation13 + $0x70] sm:$0xff]
    %v3606 = vld [vmem:[#allocation13 + $0x78] sm:$0xff]
    %v3607 = vld [vmem:[#allocation13 + $0x80] sm:$0xff]
    %v3608 = vld [vmem:[#allocation13 + $0x88] sm:$0xff]
    %v3609 = vld [vmem:[#allocation13 + $0x90] sm:$0xff]
    %v3610 = vld [vmem:[#allocation13 + $0x98] sm:$0xff]
    %v3611 = vld [vmem:[#allocation13 + $0xa0] sm:$0xff]
    %v3612 = vld [vmem:[#allocation13 + $0xa8] sm:$0xff]
    %v3613 = vld [vmem:[#allocation13 + $0xb0] sm:$0xff]
    %v3614 = vld [vmem:[#allocation13 + $0xb8] sm:$0xff]
    %v3615 = vld [vmem:[#allocation13 + $0xc0] sm:$0xff]
    %v3616 = vld [vmem:[#allocation13 + $0xc8] sm:$0xff]
    %v3617 = vld [vmem:[#allocation13 + $0xd0] sm:$0xff]
    %v3618 = vld [vmem:[#allocation13 + $0xd8] sm:$0xff]
    %v3619 = vld [vmem:[#allocation13 + $0xe0] sm:$0xff]
    %v3620 = vld [vmem:[#allocation13 + $0xe8] sm:$0xff]
    %v3621 = vld [vmem:[#allocation13 + $0xf0] sm:$0xff]
    %v3622 = vld [vmem:[#allocation13 + $0xf8] sm:$0xff]
    %v3623 = vld [vmem:[#allocation13 + $0x100] sm:$0xff]
    %v3624 = vld [vmem:[#allocation13 + $0x108] sm:$0xff]
    %v3625 = vld [vmem:[#allocation13 + $0x110] sm:$0xff]
    %v3626 = vld [vmem:[#allocation13 + $0x118] sm:$0xff]
    %v3627 = vld [vmem:[#allocation13 + $0x120] sm:$0xff]
    %v3628 = vld [vmem:[#allocation13 + $0x128] sm:$0xff]
    %v3629 = vld [vmem:[#allocation13 + $0x130] sm:$0xff]
    %v3630 = vld [vmem:[#allocation13 + $0x138] sm:$0xff]
    %v3631 = vld [vmem:[#allocation13 + $0x140] sm:$0xff]
    %v3632 = vld [vmem:[#allocation13 + $0x148] sm:$0xff]
    %v3633 = vld [vmem:[#allocation13 + $0x150] sm:$0xff]
    %v3634 = vld [vmem:[#allocation13 + $0x158] sm:$0xff]
    %v3635 = vld [vmem:[#allocation13 + $0x160] sm:$0xff]
    %v3636 = vld [vmem:[#allocation13 + $0x168] sm:$0xff]
    %v3637 = vld [vmem:[#allocation13 + $0x170] sm:$0xff]
    %v3638 = vld [vmem:[#allocation13 + $0x178] sm:$0xff]
    %v3639 = vld [vmem:[#allocation13 + $0x180] sm:$0xff]
    %v3640 = vld [vmem:[#allocation13 + $0x188] sm:$0xff]
    %v3641 = vld [vmem:[#allocation13 + $0x190] sm:$0xff]
    %v3642 = vld [vmem:[#allocation13 + $0x198] sm:$0xff]
    %v3643 = vld [vmem:[#allocation13 + $0x1a0] sm:$0xff]
    %v3644 = vld [vmem:[#allocation13 + $0x1a8] sm:$0xff]
    %v3645 = vld [vmem:[#allocation13 + $0x1b0] sm:$0xff]
    %v3646 = vld [vmem:[#allocation13 + $0x1b8] sm:$0xff]
    %v3647 = vld [vmem:[#allocation13 + $0x1c0] sm:$0xff]
    %v3648 = vld [vmem:[#allocation13 + $0x1c8] sm:$0xff]
    %v3649 = vld [vmem:[#allocation13 + $0x1d0] sm:$0xff]
    %v3650 = vld [vmem:[#allocation13 + $0x1d8] sm:$0xff]
    %v3651 = vld [vmem:[#allocation13 + $0x1e0] sm:$0xff]
    %v3652 = vld [vmem:[#allocation13 + $0x1e8] sm:$0xff]
    %v3653 = vld [vmem:[#allocation13 + $0x1f0] sm:$0xff]
    %v3654 = vld [vmem:[#allocation13 + $0x1f8] sm:$0xff]
    %v3655 = vld [vmem:[#allocation13 + $0x200] sm:$0xff]
    %v3656 = vld [vmem:[#allocation13 + $0x208] sm:$0xff]
    %v3657 = vld [vmem:[#allocation13 + $0x210] sm:$0xff]
    %v3658 = vld [vmem:[#allocation13 + $0x218] sm:$0xff]
    %v3659 = vld [vmem:[#allocation13 + $0x220] sm:$0xff]
    %v3660 = vld [vmem:[#allocation13 + $0x228] sm:$0xff]
    %v3661 = vld [vmem:[#allocation13 + $0x230] sm:$0xff]
    %v3662 = vld [vmem:[#allocation13 + $0x238] sm:$0xff]
    %v3663 = vld [vmem:[#allocation13 + $0x240] sm:$0xff]
    %v3664 = vld [vmem:[#allocation13 + $0x248] sm:$0xff]
    %v3665 = vld [vmem:[#allocation13 + $0x250] sm:$0xff]
    %v3666 = vld [vmem:[#allocation13 + $0x258] sm:$0xff]
    %v3667 = vld [vmem:[#allocation13 + $0x260] sm:$0xff]
    %v3668 = vld [vmem:[#allocation13 + $0x268] sm:$0xff]
    %v3669 = vld [vmem:[#allocation13 + $0x270] sm:$0xff]
    %v3670 = vld [vmem:[#allocation13 + $0x278] sm:$0xff]
    %v3671 = vld [vmem:[#allocation13 + $0x280] sm:$0xff]
    %v3672 = vld [vmem:[#allocation13 + $0x288] sm:$0xff]
    %v3673 = vld [vmem:[#allocation13 + $0x290] sm:$0xff]
    %v3674 = vld [vmem:[#allocation13 + $0x298] sm:$0xff]
    %v3675 = vld [vmem:[#allocation13 + $0x2a0] sm:$0xff]
    %v3676 = vld [vmem:[#allocation13 + $0x2a8] sm:$0xff]
    %v3677 = vld [vmem:[#allocation13 + $0x2b0] sm:$0xff]
    %v3678 = vld [vmem:[#allocation13 + $0x2b8] sm:$0xff]
    %v3679 = vld [vmem:[#allocation13 + $0x2c0] sm:$0xff]
    %v3680 = vld [vmem:[#allocation13 + $0x2c8] sm:$0xff]
    %v3681 = vld [vmem:[#allocation13 + $0x2d0] sm:$0xff]
    %v3682 = vld [vmem:[#allocation13 + $0x2d8] sm:$0xff]
    %v3683 = vld [vmem:[#allocation13 + $0x2e0] sm:$0xff]
    %v3684 = vld [vmem:[#allocation13 + $0x2e8] sm:$0xff]
    %v3685 = vld [vmem:[#allocation13 + $0x2f0] sm:$0xff]
    %v3686 = vld [vmem:[#allocation13 + $0x2f8] sm:$0xff]
    %v3687 = vld [vmem:[#allocation13 + $0x300] sm:$0xff]
    %v3688 = vld [vmem:[#allocation13 + $0x308] sm:$0xff]
    %v3689 = vld [vmem:[#allocation13 + $0x310] sm:$0xff]
    %v3690 = vld [vmem:[#allocation13 + $0x318] sm:$0xff]
    %v3691 = vld [vmem:[#allocation13 + $0x320] sm:$0xff]
    %v3692 = vld [vmem:[#allocation13 + $0x328] sm:$0xff]
    %v3693 = vld [vmem:[#allocation13 + $0x330] sm:$0xff]
    %v3694 = vld [vmem:[#allocation13 + $0x338] sm:$0xff]
    %v3695 = vld [vmem:[#allocation13 + $0x340] sm:$0xff]
    %v3696 = vld [vmem:[#allocation13 + $0x348] sm:$0xff]
    %v3697 = vld [vmem:[#allocation13 + $0x350] sm:$0xff]
    %v3698 = vld [vmem:[#allocation13 + $0x358] sm:$0xff]
    %v3699 = vld [vmem:[#allocation13 + $0x360] sm:$0xff]
    %v3700 = vld [vmem:[#allocation13 + $0x368] sm:$0xff]
    %v3701 = vld [vmem:[#allocation13 + $0x370] sm:$0xff]
    %v3702 = vld [vmem:[#allocation13 + $0x378] sm:$0xff]
    %v3703 = vld [vmem:[#allocation13 + $0x380] sm:$0xff]
    %v3704 = vld [vmem:[#allocation13 + $0x388] sm:$0xff]
    %v3705 = vld [vmem:[#allocation13 + $0x390] sm:$0xff]
    %v3706 = vld [vmem:[#allocation13 + $0x398] sm:$0xff]
    %v3707 = vld [vmem:[#allocation13 + $0x3a0] sm:$0xff]
    %v3708 = vld [vmem:[#allocation13 + $0x3a8] sm:$0xff]
    %v3709 = vld [vmem:[#allocation13 + $0x3b0] sm:$0xff]
    %v3710 = vld [vmem:[#allocation13 + $0x3b8] sm:$0xff]
    %v3711 = vld [vmem:[#allocation13 + $0x3c0] sm:$0xff]
    %v3712 = vld [vmem:[#allocation13 + $0x3c8] sm:$0xff]
    %v3713 = vld [vmem:[#allocation13 + $0x3d0] sm:$0xff]
    %v3714 = vld [vmem:[#allocation13 + $0x3d8] sm:$0xff]
    %v3715 = vld [vmem:[#allocation13 + $0x3e0] sm:$0xff]
    %v3716 = vld [vmem:[#allocation13 + $0x3e8] sm:$0xff]
    %v3717 = vld [vmem:[#allocation13 + $0x3f0] sm:$0xff]
    %v3718 = vld [vmem:[#allocation13 + $0x3f8] sm:$0xff]
    %v3719 = vld [vmem:[%s10] sm:$0xf]
    %v3721 = vlaneseq
    %v3722 = vshrl.u32 %v3721, 7
    %v3723 = vsub.s32 0, %v3722
    %v3724 = vrot.slane %v3719, %v3723
    %v3725 = vlaneseq
    %v3726 = vshrl.u32 %v3725, 7
    %v3727 = vsub.s32 1, %v3726
    %v3728 = vrot.slane %v3719, %v3727
    %v3729 = vlaneseq
    %v3730 = vshrl.u32 %v3729, 7
    %v3731 = vsub.s32 2, %v3730
    %v3732 = vrot.slane %v3719, %v3731
    %v3733 = vlaneseq
    %v3734 = vshrl.u32 %v3733, 7
    %v3735 = vsub.s32 3, %v3734
    %v3736 = vrot.slane %v3719, %v3735
    %v3869 = vunpack.c.l.b16 %v3591
    %v3870 = vunpack.c.h.b16 %v3591
    %v3871 = vunpack.c.l.b16 %v3592
    %v3872 = vunpack.c.h.b16 %v3592
    %v3873 = vunpack.c.l.b16 %v3593
    %v3874 = vunpack.c.h.b16 %v3593
    %v3875 = vunpack.c.l.b16 %v3594
    %v3876 = vunpack.c.h.b16 %v3594
    %v3877 = vunpack.c.l.b16 %v3595
    %v3878 = vunpack.c.h.b16 %v3595
    %v3879 = vunpack.c.l.b16 %v3596
    %v3880 = vunpack.c.h.b16 %v3596
    %v3881 = vunpack.c.l.b16 %v3597
    %v3882 = vunpack.c.h.b16 %v3597
    %v3883 = vunpack.c.l.b16 %v3598
    %v3884 = vunpack.c.h.b16 %v3598
    %v3885 = vunpack.c.l.b16 %v3599
    %v3886 = vunpack.c.h.b16 %v3599
    %v3887 = vunpack.c.l.b16 %v3600
    %v3888 = vunpack.c.h.b16 %v3600
    %v3889 = vunpack.c.l.b16 %v3601
    %v3890 = vunpack.c.h.b16 %v3601
    %v3891 = vunpack.c.l.b16 %v3602
    %v3892 = vunpack.c.h.b16 %v3602
    %v3893 = vunpack.c.l.b16 %v3603
    %v3894 = vunpack.c.h.b16 %v3603
    %v3895 = vunpack.c.l.b16 %v3604
    %v3896 = vunpack.c.h.b16 %v3604
    %v3897 = vunpack.c.l.b16 %v3605
    %v3898 = vunpack.c.h.b16 %v3605
    %v3899 = vunpack.c.l.b16 %v3606
    %v3900 = vunpack.c.h.b16 %v3606
    %v3901 = vunpack.c.l.b16 %v3607
    %v3902 = vunpack.c.h.b16 %v3607
    %v3903 = vunpack.c.l.b16 %v3608
    %v3904 = vunpack.c.h.b16 %v3608
    %v3905 = vunpack.c.l.b16 %v3609
    %v3906 = vunpack.c.h.b16 %v3609
    %v3907 = vunpack.c.l.b16 %v3610
    %v3908 = vunpack.c.h.b16 %v3610
    %v3909 = vunpack.c.l.b16 %v3611
    %v3910 = vunpack.c.h.b16 %v3611
    %v3911 = vunpack.c.l.b16 %v3612
    %v3912 = vunpack.c.h.b16 %v3612
    %v3913 = vunpack.c.l.b16 %v3613
    %v3914 = vunpack.c.h.b16 %v3613
    %v3915 = vunpack.c.l.b16 %v3614
    %v3916 = vunpack.c.h.b16 %v3614
    %v3917 = vunpack.c.l.b16 %v3615
    %v3918 = vunpack.c.h.b16 %v3615
    %v3919 = vunpack.c.l.b16 %v3616
    %v3920 = vunpack.c.h.b16 %v3616
    %v3921 = vunpack.c.l.b16 %v3617
    %v3922 = vunpack.c.h.b16 %v3617
    %v3923 = vunpack.c.l.b16 %v3618
    %v3924 = vunpack.c.h.b16 %v3618
    %v3925 = vunpack.c.l.b16 %v3619
    %v3926 = vunpack.c.h.b16 %v3619
    %v3927 = vunpack.c.l.b16 %v3620
    %v3928 = vunpack.c.h.b16 %v3620
    %v3929 = vunpack.c.l.b16 %v3621
    %v3930 = vunpack.c.h.b16 %v3621
    %v3931 = vunpack.c.l.b16 %v3622
    %v3932 = vunpack.c.h.b16 %v3622
    %v3933 = vunpack.c.l.b16 %v3623
    %v3934 = vunpack.c.h.b16 %v3623
    %v3935 = vunpack.c.l.b16 %v3624
    %v3936 = vunpack.c.h.b16 %v3624
    %v3937 = vunpack.c.l.b16 %v3625
    %v3938 = vunpack.c.h.b16 %v3625
    %v3939 = vunpack.c.l.b16 %v3626
    %v3940 = vunpack.c.h.b16 %v3626
    %v3941 = vunpack.c.l.b16 %v3627
    %v3942 = vunpack.c.h.b16 %v3627
    %v3943 = vunpack.c.l.b16 %v3628
    %v3944 = vunpack.c.h.b16 %v3628
    %v3945 = vunpack.c.l.b16 %v3629
    %v3946 = vunpack.c.h.b16 %v3629
    %v3947 = vunpack.c.l.b16 %v3630
    %v3948 = vunpack.c.h.b16 %v3630
    %v3949 = vunpack.c.l.b16 %v3631
    %v3950 = vunpack.c.h.b16 %v3631
    %v3951 = vunpack.c.l.b16 %v3632
    %v3952 = vunpack.c.h.b16 %v3632
    %v3953 = vunpack.c.l.b16 %v3633
    %v3954 = vunpack.c.h.b16 %v3633
    %v3955 = vunpack.c.l.b16 %v3634
    %v3956 = vunpack.c.h.b16 %v3634
    %v3957 = vunpack.c.l.b16 %v3635
    %v3958 = vunpack.c.h.b16 %v3635
    %v3959 = vunpack.c.l.b16 %v3636
    %v3960 = vunpack.c.h.b16 %v3636
    %v3961 = vunpack.c.l.b16 %v3637
    %v3962 = vunpack.c.h.b16 %v3637
    %v3963 = vunpack.c.l.b16 %v3638
    %v3964 = vunpack.c.h.b16 %v3638
    %v3965 = vunpack.c.l.b16 %v3639
    %v3966 = vunpack.c.h.b16 %v3639
    %v3967 = vunpack.c.l.b16 %v3640
    %v3968 = vunpack.c.h.b16 %v3640
    %v3969 = vunpack.c.l.b16 %v3641
    %v3970 = vunpack.c.h.b16 %v3641
    %v3971 = vunpack.c.l.b16 %v3642
    %v3972 = vunpack.c.h.b16 %v3642
    %v3973 = vunpack.c.l.b16 %v3643
    %v3974 = vunpack.c.h.b16 %v3643
    %v3975 = vunpack.c.l.b16 %v3644
    %v3976 = vunpack.c.h.b16 %v3644
    %v3977 = vunpack.c.l.b16 %v3645
    %v3978 = vunpack.c.h.b16 %v3645
    %v3979 = vunpack.c.l.b16 %v3646
    %v3980 = vunpack.c.h.b16 %v3646
    %v3981 = vunpack.c.l.b16 %v3647
    %v3982 = vunpack.c.h.b16 %v3647
    %v3983 = vunpack.c.l.b16 %v3648
    %v3984 = vunpack.c.h.b16 %v3648
    %v3985 = vunpack.c.l.b16 %v3649
    %v3986 = vunpack.c.h.b16 %v3649
    %v3987 = vunpack.c.l.b16 %v3650
    %v3988 = vunpack.c.h.b16 %v3650
    %v3989 = vunpack.c.l.b16 %v3651
    %v3990 = vunpack.c.h.b16 %v3651
    %v3991 = vunpack.c.l.b16 %v3652
    %v3992 = vunpack.c.h.b16 %v3652
    %v3993 = vunpack.c.l.b16 %v3653
    %v3994 = vunpack.c.h.b16 %v3653
    %v3995 = vunpack.c.l.b16 %v3654
    %v3996 = vunpack.c.h.b16 %v3654
    %v3997 = vunpack.c.l.b16 %v3655
    %v3998 = vunpack.c.h.b16 %v3655
    %v3999 = vunpack.c.l.b16 %v3656
    %v4000 = vunpack.c.h.b16 %v3656
    %v4001 = vunpack.c.l.b16 %v3657
    %v4002 = vunpack.c.h.b16 %v3657
    %v4003 = vunpack.c.l.b16 %v3658
    %v4004 = vunpack.c.h.b16 %v3658
    %v4005 = vunpack.c.l.b16 %v3659
    %v4006 = vunpack.c.h.b16 %v3659
    %v4007 = vunpack.c.l.b16 %v3660
    %v4008 = vunpack.c.h.b16 %v3660
    %v4009 = vunpack.c.l.b16 %v3661
    %v4010 = vunpack.c.h.b16 %v3661
    %v4011 = vunpack.c.l.b16 %v3662
    %v4012 = vunpack.c.h.b16 %v3662
    %v4013 = vunpack.c.l.b16 %v3663
    %v4014 = vunpack.c.h.b16 %v3663
    %v4015 = vunpack.c.l.b16 %v3664
    %v4016 = vunpack.c.h.b16 %v3664
    %v4017 = vunpack.c.l.b16 %v3665
    %v4018 = vunpack.c.h.b16 %v3665
    %v4019 = vunpack.c.l.b16 %v3666
    %v4020 = vunpack.c.h.b16 %v3666
    %v4021 = vunpack.c.l.b16 %v3667
    %v4022 = vunpack.c.h.b16 %v3667
    %v4023 = vunpack.c.l.b16 %v3668
    %v4024 = vunpack.c.h.b16 %v3668
    %v4025 = vunpack.c.l.b16 %v3669
    %v4026 = vunpack.c.h.b16 %v3669
    %v4027 = vunpack.c.l.b16 %v3670
    %v4028 = vunpack.c.h.b16 %v3670
    %v4029 = vunpack.c.l.b16 %v3671
    %v4030 = vunpack.c.h.b16 %v3671
    %v4031 = vunpack.c.l.b16 %v3672
    %v4032 = vunpack.c.h.b16 %v3672
    %v4033 = vunpack.c.l.b16 %v3673
    %v4034 = vunpack.c.h.b16 %v3673
    %v4035 = vunpack.c.l.b16 %v3674
    %v4036 = vunpack.c.h.b16 %v3674
    %v4037 = vunpack.c.l.b16 %v3675
    %v4038 = vunpack.c.h.b16 %v3675
    %v4039 = vunpack.c.l.b16 %v3676
    %v4040 = vunpack.c.h.b16 %v3676
    %v4041 = vunpack.c.l.b16 %v3677
    %v4042 = vunpack.c.h.b16 %v3677
    %v4043 = vunpack.c.l.b16 %v3678
    %v4044 = vunpack.c.h.b16 %v3678
    %v4045 = vunpack.c.l.b16 %v3679
    %v4046 = vunpack.c.h.b16 %v3679
    %v4047 = vunpack.c.l.b16 %v3680
    %v4048 = vunpack.c.h.b16 %v3680
    %v4049 = vunpack.c.l.b16 %v3681
    %v4050 = vunpack.c.h.b16 %v3681
    %v4051 = vunpack.c.l.b16 %v3682
    %v4052 = vunpack.c.h.b16 %v3682
    %v4053 = vunpack.c.l.b16 %v3683
    %v4054 = vunpack.c.h.b16 %v3683
    %v4055 = vunpack.c.l.b16 %v3684
    %v4056 = vunpack.c.h.b16 %v3684
    %v4057 = vunpack.c.l.b16 %v3685
    %v4058 = vunpack.c.h.b16 %v3685
    %v4059 = vunpack.c.l.b16 %v3686
    %v4060 = vunpack.c.h.b16 %v3686
    %v4061 = vunpack.c.l.b16 %v3687
    %v4062 = vunpack.c.h.b16 %v3687
    %v4063 = vunpack.c.l.b16 %v3688
    %v4064 = vunpack.c.h.b16 %v3688
    %v4065 = vunpack.c.l.b16 %v3689
    %v4066 = vunpack.c.h.b16 %v3689
    %v4067 = vunpack.c.l.b16 %v3690
    %v4068 = vunpack.c.h.b16 %v3690
    %v4069 = vunpack.c.l.b16 %v3691
    %v4070 = vunpack.c.h.b16 %v3691
    %v4071 = vunpack.c.l.b16 %v3692
    %v4072 = vunpack.c.h.b16 %v3692
    %v4073 = vunpack.c.l.b16 %v3693
    %v4074 = vunpack.c.h.b16 %v3693
    %v4075 = vunpack.c.l.b16 %v3694
    %v4076 = vunpack.c.h.b16 %v3694
    %v4077 = vunpack.c.l.b16 %v3695
    %v4078 = vunpack.c.h.b16 %v3695
    %v4079 = vunpack.c.l.b16 %v3696
    %v4080 = vunpack.c.h.b16 %v3696
    %v4081 = vunpack.c.l.b16 %v3697
    %v4082 = vunpack.c.h.b16 %v3697
    %v4083 = vunpack.c.l.b16 %v3698
    %v4084 = vunpack.c.h.b16 %v3698
    %v4085 = vunpack.c.l.b16 %v3699
    %v4086 = vunpack.c.h.b16 %v3699
    %v4087 = vunpack.c.l.b16 %v3700
    %v4088 = vunpack.c.h.b16 %v3700
    %v4089 = vunpack.c.l.b16 %v3701
    %v4090 = vunpack.c.h.b16 %v3701
    %v4091 = vunpack.c.l.b16 %v3702
    %v4092 = vunpack.c.h.b16 %v3702
    %v4093 = vunpack.c.l.b16 %v3703
    %v4094 = vunpack.c.h.b16 %v3703
    %v4095 = vunpack.c.l.b16 %v3704
    %v4096 = vunpack.c.h.b16 %v3704
    %v4097 = vunpack.c.l.b16 %v3705
    %v4098 = vunpack.c.h.b16 %v3705
    %v4099 = vunpack.c.l.b16 %v3706
    %v4100 = vunpack.c.h.b16 %v3706
    %v4101 = vunpack.c.l.b16 %v3707
    %v4102 = vunpack.c.h.b16 %v3707
    %v4103 = vunpack.c.l.b16 %v3708
    %v4104 = vunpack.c.h.b16 %v3708
    %v4105 = vunpack.c.l.b16 %v3709
    %v4106 = vunpack.c.h.b16 %v3709
    %v4107 = vunpack.c.l.b16 %v3710
    %v4108 = vunpack.c.h.b16 %v3710
    %v4109 = vunpack.c.l.b16 %v3711
    %v4110 = vunpack.c.h.b16 %v3711
    %v4111 = vunpack.c.l.b16 %v3712
    %v4112 = vunpack.c.h.b16 %v3712
    %v4113 = vunpack.c.l.b16 %v3713
    %v4114 = vunpack.c.h.b16 %v3713
    %v4115 = vunpack.c.l.b16 %v3714
    %v4116 = vunpack.c.h.b16 %v3714
    %v4117 = vunpack.c.l.b16 %v3715
    %v4118 = vunpack.c.h.b16 %v3715
    %v4119 = vunpack.c.l.b16 %v3716
    %v4120 = vunpack.c.h.b16 %v3716
    %v4121 = vunpack.c.l.b16 %v3717
    %v4122 = vunpack.c.h.b16 %v3717
    %v4123 = vunpack.c.l.b16 %v3718
    %v4124 = vunpack.c.h.b16 %v3718
    %v4125 = vpack.c.b16 %v3873, %v3869
    %v4126 = vpack.c.b16 %v3874, %v3870
    %v4127 = vpack.c.b16 %v3875, %v3871
    %v4128 = vpack.c.b16 %v3876, %v3872
    %v4129 = vpack.c.b16 %v3881, %v3877
    %v4130 = vpack.c.b16 %v3882, %v3878
    %v4131 = vpack.c.b16 %v3883, %v3879
    %v4132 = vpack.c.b16 %v3884, %v3880
    %v4133 = vpack.c.b16 %v3889, %v3885
    %v4134 = vpack.c.b16 %v3890, %v3886
    %v4135 = vpack.c.b16 %v3891, %v3887
    %v4136 = vpack.c.b16 %v3892, %v3888
    %v4137 = vpack.c.b16 %v3897, %v3893
    %v4138 = vpack.c.b16 %v3898, %v3894
    %v4139 = vpack.c.b16 %v3899, %v3895
    %v4140 = vpack.c.b16 %v3900, %v3896
    %v4141 = vpack.c.b16 %v3905, %v3901
    %v4142 = vpack.c.b16 %v3906, %v3902
    %v4143 = vpack.c.b16 %v3907, %v3903
    %v4144 = vpack.c.b16 %v3908, %v3904
    %v4145 = vpack.c.b16 %v3913, %v3909
    %v4146 = vpack.c.b16 %v3914, %v3910
    %v4147 = vpack.c.b16 %v3915, %v3911
    %v4148 = vpack.c.b16 %v3916, %v3912
    %v4149 = vpack.c.b16 %v3921, %v3917
    %v4150 = vpack.c.b16 %v3922, %v3918
    %v4151 = vpack.c.b16 %v3923, %v3919
    %v4152 = vpack.c.b16 %v3924, %v3920
    %v4153 = vpack.c.b16 %v3929, %v3925
    %v4154 = vpack.c.b16 %v3930, %v3926
    %v4155 = vpack.c.b16 %v3931, %v3927
    %v4156 = vpack.c.b16 %v3932, %v3928
    %v4157 = vpack.c.b16 %v3937, %v3933
    %v4158 = vpack.c.b16 %v3938, %v3934
    %v4159 = vpack.c.b16 %v3939, %v3935
    %v4160 = vpack.c.b16 %v3940, %v3936
    %v4161 = vpack.c.b16 %v3945, %v3941
    %v4162 = vpack.c.b16 %v3946, %v3942
    %v4163 = vpack.c.b16 %v3947, %v3943
    %v4164 = vpack.c.b16 %v3948, %v3944
    %v4165 = vpack.c.b16 %v3953, %v3949
    %v4166 = vpack.c.b16 %v3954, %v3950
    %v4167 = vpack.c.b16 %v3955, %v3951
    %v4168 = vpack.c.b16 %v3956, %v3952
    %v4169 = vpack.c.b16 %v3961, %v3957
    %v4170 = vpack.c.b16 %v3962, %v3958
    %v4171 = vpack.c.b16 %v3963, %v3959
    %v4172 = vpack.c.b16 %v3964, %v3960
    %v4173 = vpack.c.b16 %v3969, %v3965
    %v4174 = vpack.c.b16 %v3970, %v3966
    %v4175 = vpack.c.b16 %v3971, %v3967
    %v4176 = vpack.c.b16 %v3972, %v3968
    %v4177 = vpack.c.b16 %v3977, %v3973
    %v4178 = vpack.c.b16 %v3978, %v3974
    %v4179 = vpack.c.b16 %v3979, %v3975
    %v4180 = vpack.c.b16 %v3980, %v3976
    %v4181 = vpack.c.b16 %v3985, %v3981
    %v4182 = vpack.c.b16 %v3986, %v3982
    %v4183 = vpack.c.b16 %v3987, %v3983
    %v4184 = vpack.c.b16 %v3988, %v3984
    %v4185 = vpack.c.b16 %v3993, %v3989
    %v4186 = vpack.c.b16 %v3994, %v3990
    %v4187 = vpack.c.b16 %v3995, %v3991
    %v4188 = vpack.c.b16 %v3996, %v3992
    %v4189 = vpack.c.b16 %v4001, %v3997
    %v4190 = vpack.c.b16 %v4002, %v3998
    %v4191 = vpack.c.b16 %v4003, %v3999
    %v4192 = vpack.c.b16 %v4004, %v4000
    %v4193 = vpack.c.b16 %v4009, %v4005
    %v4194 = vpack.c.b16 %v4010, %v4006
    %v4195 = vpack.c.b16 %v4011, %v4007
    %v4196 = vpack.c.b16 %v4012, %v4008
    %v4197 = vpack.c.b16 %v4017, %v4013
    %v4198 = vpack.c.b16 %v4018, %v4014
    %v4199 = vpack.c.b16 %v4019, %v4015
    %v4200 = vpack.c.b16 %v4020, %v4016
    %v4201 = vpack.c.b16 %v4025, %v4021
    %v4202 = vpack.c.b16 %v4026, %v4022
    %v4203 = vpack.c.b16 %v4027, %v4023
    %v4204 = vpack.c.b16 %v4028, %v4024
    %v4205 = vpack.c.b16 %v4033, %v4029
    %v4206 = vpack.c.b16 %v4034, %v4030
    %v4207 = vpack.c.b16 %v4035, %v4031
    %v4208 = vpack.c.b16 %v4036, %v4032
    %v4209 = vpack.c.b16 %v4041, %v4037
    %v4210 = vpack.c.b16 %v4042, %v4038
    %v4211 = vpack.c.b16 %v4043, %v4039
    %v4212 = vpack.c.b16 %v4044, %v4040
    %v4213 = vpack.c.b16 %v4049, %v4045
    %v4214 = vpack.c.b16 %v4050, %v4046
    %v4215 = vpack.c.b16 %v4051, %v4047
    %v4216 = vpack.c.b16 %v4052, %v4048
    %v4217 = vpack.c.b16 %v4057, %v4053
    %v4218 = vpack.c.b16 %v4058, %v4054
    %v4219 = vpack.c.b16 %v4059, %v4055
    %v4220 = vpack.c.b16 %v4060, %v4056
    %v4221 = vpack.c.b16 %v4065, %v4061
    %v4222 = vpack.c.b16 %v4066, %v4062
    %v4223 = vpack.c.b16 %v4067, %v4063
    %v4224 = vpack.c.b16 %v4068, %v4064
    %v4225 = vpack.c.b16 %v4073, %v4069
    %v4226 = vpack.c.b16 %v4074, %v4070
    %v4227 = vpack.c.b16 %v4075, %v4071
    %v4228 = vpack.c.b16 %v4076, %v4072
    %v4229 = vpack.c.b16 %v4081, %v4077
    %v4230 = vpack.c.b16 %v4082, %v4078
    %v4231 = vpack.c.b16 %v4083, %v4079
    %v4232 = vpack.c.b16 %v4084, %v4080
    %v4233 = vpack.c.b16 %v4089, %v4085
    %v4234 = vpack.c.b16 %v4090, %v4086
    %v4235 = vpack.c.b16 %v4091, %v4087
    %v4236 = vpack.c.b16 %v4092, %v4088
    %v4237 = vpack.c.b16 %v4097, %v4093
    %v4238 = vpack.c.b16 %v4098, %v4094
    %v4239 = vpack.c.b16 %v4099, %v4095
    %v4240 = vpack.c.b16 %v4100, %v4096
    %v4241 = vpack.c.b16 %v4105, %v4101
    %v4242 = vpack.c.b16 %v4106, %v4102
    %v4243 = vpack.c.b16 %v4107, %v4103
    %v4244 = vpack.c.b16 %v4108, %v4104
    %v4245 = vpack.c.b16 %v4113, %v4109
    %v4246 = vpack.c.b16 %v4114, %v4110
    %v4247 = vpack.c.b16 %v4115, %v4111
    %v4248 = vpack.c.b16 %v4116, %v4112
    %v4249 = vpack.c.b16 %v4121, %v4117
    %v4250 = vpack.c.b16 %v4122, %v4118
    %v4251 = vpack.c.b16 %v4123, %v4119
    %v4252 = vpack.c.b16 %v4124, %v4120
    %4381 = vmatprep.subr.bf16.mxu0 %v4126
    %4382 = vmatpush1.bf16.msra.mxu0 %v4125
    %4383 = vmatprep.subr.bf16.mxu0 %v4130
    %4384 = vmatpush1.bf16.msra.mxu0 %v4129
    %4385 = vmatprep.subr.bf16.mxu0 %v4134
    %4386 = vmatpush1.bf16.msra.mxu0 %v4133
    %4387 = vmatprep.subr.bf16.mxu0 %v4138
    %4388 = vmatpush1.bf16.msra.mxu0 %v4137
    %4389 = vmatprep.subr.bf16.mxu0 %v4142
    %4390 = vmatpush1.bf16.msra.mxu0 %v4141
    %4391 = vmatprep.subr.bf16.mxu0 %v4146
    %4392 = vmatpush1.bf16.msra.mxu0 %v4145
    %4393 = vmatprep.subr.bf16.mxu0 %v4150
    %4394 = vmatpush1.bf16.msra.mxu0 %v4149
    %4395 = vmatprep.subr.bf16.mxu0 %v4154
    %4396 = vmatpush1.bf16.msra.mxu0 %v4153
    %4397 = vmatprep.subr.bf16.mxu0 %v4158
    %4398 = vmatpush1.bf16.msra.mxu0 %v4157
    %4399 = vmatprep.subr.bf16.mxu0 %v4162
    %4400 = vmatpush1.bf16.msra.mxu0 %v4161
    %4401 = vmatprep.subr.bf16.mxu0 %v4166
    %4402 = vmatpush1.bf16.msra.mxu0 %v4165
    %4403 = vmatprep.subr.bf16.mxu0 %v4170
    %4404 = vmatpush1.bf16.msra.mxu0 %v4169
    %4405 = vmatprep.subr.bf16.mxu0 %v4174
    %4406 = vmatpush1.bf16.msra.mxu0 %v4173
    %4407 = vmatprep.subr.bf16.mxu0 %v4178
    %4408 = vmatpush1.bf16.msra.mxu0 %v4177
    %4409 = vmatprep.subr.bf16.mxu0 %v4182
    %4410 = vmatpush1.bf16.msra.mxu0 %v4181
    %4411 = vmatprep.subr.bf16.mxu0 %v4186
    %4412 = vmatpush1.bf16.msra.mxu0 %v4185
    %4413 = vmatprep.mubr.bf16.mxu0 %v3588
    %4414 = vmatmul.mubr.bf16.gmra.mrb[0].mxu0 %v3587
    %v4415 = vpop.f32.mrb[0].mxu0
    %v4416 = vadd.f32 %v3724, %v4415
    %v4417 = vpop.f32.mrb[0].mxu0
    %v4418 = vadd.f32 %v3728, %v4417
    %v4419 = vpop.f32.mrb[0].mxu0
    %v4420 = vpop.f32.mrb[0].mxu0
    %4421 = vdwg.mxu0
    %4422 = vmatprep.subr.bf16.mxu0 %v4190
    %4423 = vmatpush1.bf16.msra.mxu0 %v4189
    %4424 = vmatprep.subr.bf16.mxu0 %v4194
    %4425 = vmatpush1.bf16.msra.mxu0 %v4193
    %4426 = vmatprep.subr.bf16.mxu0 %v4198
    %4427 = vmatpush1.bf16.msra.mxu0 %v4197
    %4428 = vmatprep.subr.bf16.mxu0 %v4202
    %4429 = vmatpush1.bf16.msra.mxu0 %v4201
    %4430 = vmatprep.subr.bf16.mxu0 %v4206
    %4431 = vmatpush1.bf16.msra.mxu0 %v4205
    %4432 = vmatprep.subr.bf16.mxu0 %v4210
    %4433 = vmatpush1.bf16.msra.mxu0 %v4209
    %4434 = vmatprep.subr.bf16.mxu0 %v4214
    %4435 = vmatpush1.bf16.msra.mxu0 %v4213
    %4436 = vmatprep.subr.bf16.mxu0 %v4218
    %4437 = vmatpush1.bf16.msra.mxu0 %v4217
    %4438 = vmatprep.subr.bf16.mxu0 %v4222
    %4439 = vmatpush1.bf16.msra.mxu0 %v4221
    %4440 = vmatprep.subr.bf16.mxu0 %v4226
    %4441 = vmatpush1.bf16.msra.mxu0 %v4225
    %4442 = vmatprep.subr.bf16.mxu0 %v4230
    %4443 = vmatpush1.bf16.msra.mxu0 %v4229
    %4444 = vmatprep.subr.bf16.mxu0 %v4234
    %4445 = vmatpush1.bf16.msra.mxu0 %v4233
    %4446 = vmatprep.subr.bf16.mxu0 %v4238
    %4447 = vmatpush1.bf16.msra.mxu0 %v4237
    %4448 = vmatprep.subr.bf16.mxu0 %v4242
    %4449 = vmatpush1.bf16.msra.mxu0 %v4241
    %4450 = vmatprep.subr.bf16.mxu0 %v4246
    %4451 = vmatpush1.bf16.msra.mxu0 %v4245
    %4452 = vmatprep.subr.bf16.mxu0 %v4250
    %4453 = vmatpush1.bf16.msra.mxu0 %v4249
    %4454 = vmatprep.mubr.bf16.mxu0 %v3590
    %4455 = vmatmul.mubr.bf16.gmra.mrb[0].mxu0 %v3589
    %v4456 = vpop.f32.mrb[0].mxu0
    %v4457 = vadd.f32 %v4416, %v4456
    %v4458 = vpop.f32.mrb[0].mxu0
    %v4459 = vadd.f32 %v4418, %v4458
    %v4460 = vpop.f32.mrb[0].mxu0
    %v4461 = vpop.f32.mrb[0].mxu0
    %4462 = vdwg.mxu0
    %4463 = vmatprep.subr.bf16.mxu0 %v4128
    %4464 = vmatpush1.bf16.msra.mxu0 %v4127
    %4465 = vmatprep.subr.bf16.mxu0 %v4132
    %4466 = vmatpush1.bf16.msra.mxu0 %v4131
    %4467 = vmatprep.subr.bf16.mxu0 %v4136
    %4468 = vmatpush1.bf16.msra.mxu0 %v4135
    %4469 = vmatprep.subr.bf16.mxu0 %v4140
    %4470 = vmatpush1.bf16.msra.mxu0 %v4139
    %4471 = vmatprep.subr.bf16.mxu0 %v4144
    %4472 = vmatpush1.bf16.msra.mxu0 %v4143
    %4473 = vmatprep.subr.bf16.mxu0 %v4148
    %4474 = vmatpush1.bf16.msra.mxu0 %v4147
    %4475 = vmatprep.subr.bf16.mxu0 %v4152
    %4476 = vmatpush1.bf16.msra.mxu0 %v4151
    %4477 = vmatprep.subr.bf16.mxu0 %v4156
    %4478 = vmatpush1.bf16.msra.mxu0 %v4155
    %4479 = vmatprep.subr.bf16.mxu0 %v4160
    %4480 = vmatpush1.bf16.msra.mxu0 %v4159
    %4481 = vmatprep.subr.bf16.mxu0 %v4164
    %4482 = vmatpush1.bf16.msra.mxu0 %v4163
    %4483 = vmatprep.subr.bf16.mxu0 %v4168
    %4484 = vmatpush1.bf16.msra.mxu0 %v4167
    %4485 = vmatprep.subr.bf16.mxu0 %v4172
    %4486 = vmatpush1.bf16.msra.mxu0 %v4171
    %4487 = vmatprep.subr.bf16.mxu0 %v4176
    %4488 = vmatpush1.bf16.msra.mxu0 %v4175
    %4489 = vmatprep.subr.bf16.mxu0 %v4180
    %4490 = vmatpush1.bf16.msra.mxu0 %v4179
    %4491 = vmatprep.subr.bf16.mxu0 %v4184
    %4492 = vmatpush1.bf16.msra.mxu0 %v4183
    %4493 = vmatprep.subr.bf16.mxu0 %v4188
    %4494 = vmatpush1.bf16.msra.mxu0 %v4187
    %4495 = vmatprep.mubr.bf16.mxu0 %v3588
    %4496 = vmatmul.mubr.bf16.gmra.mrb[0].mxu0 %v3587
    %v4497 = vpop.f32.mrb[0].mxu0
    %v4498 = vadd.f32 %v3732, %v4497
    %v4499 = vpop.f32.mrb[0].mxu0
    %v4500 = vadd.f32 %v3736, %v4499
    %v4501 = vpop.f32.mrb[0].mxu0
    %v4502 = vpop.f32.mrb[0].mxu0
    %4503 = vdwg.mxu0
    %4504 = vmatprep.subr.bf16.mxu0 %v4192
    %4505 = vmatpush1.bf16.msra.mxu0 %v4191
    %4506 = vmatprep.subr.bf16.mxu0 %v4196
    %4507 = vmatpush1.bf16.msra.mxu0 %v4195
    %4508 = vmatprep.subr.bf16.mxu0 %v4200
    %4509 = vmatpush1.bf16.msra.mxu0 %v4199
    %4510 = vmatprep.subr.bf16.mxu0 %v4204
    %4511 = vmatpush1.bf16.msra.mxu0 %v4203
    %4512 = vmatprep.subr.bf16.mxu0 %v4208
    %4513 = vmatpush1.bf16.msra.mxu0 %v4207
    %4514 = vmatprep.subr.bf16.mxu0 %v4212
    %4515 = vmatpush1.bf16.msra.mxu0 %v4211
    %4516 = vmatprep.subr.bf16.mxu0 %v4216
    %4517 = vmatpush1.bf16.msra.mxu0 %v4215
    %4518 = vmatprep.subr.bf16.mxu0 %v4220
    %4519 = vmatpush1.bf16.msra.mxu0 %v4219
    %4520 = vmatprep.subr.bf16.mxu0 %v4224
    %4521 = vmatpush1.bf16.msra.mxu0 %v4223
    %4522 = vmatprep.subr.bf16.mxu0 %v4228
    %4523 = vmatpush1.bf16.msra.mxu0 %v4227
    %4524 = vmatprep.subr.bf16.mxu0 %v4232
    %4525 = vmatpush1.bf16.msra.mxu0 %v4231
    %4526 = vmatprep.subr.bf16.mxu0 %v4236
    %4527 = vmatpush1.bf16.msra.mxu0 %v4235
    %4528 = vmatprep.subr.bf16.mxu0 %v4240
    %4529 = vmatpush1.bf16.msra.mxu0 %v4239
    %4530 = vmatprep.subr.bf16.mxu0 %v4244
    %4531 = vmatpush1.bf16.msra.mxu0 %v4243
    %4532 = vmatprep.subr.bf16.mxu0 %v4248
    %4533 = vmatpush1.bf16.msra.mxu0 %v4247
    %4534 = vmatprep.subr.bf16.mxu0 %v4252
    %4535 = vmatpush1.bf16.msra.mxu0 %v4251
    %4536 = vmatprep.mubr.bf16.mxu0 %v3590
    %4537 = vmatmul.mubr.bf16.gmra.mrb[0].mxu0 %v3589
    %v4538 = vpop.f32.mrb[0].mxu0
    %v4539 = vadd.f32 %v4498, %v4538
    %v4540 = vpop.f32.mrb[0].mxu0
    %v4541 = vadd.f32 %v4500, %v4540
    %v4542 = vpop.f32.mrb[0].mxu0
    %v4543 = vpop.f32.mrb[0].mxu0
    %4544 = vdwg.mxu0
    %v4545 = vmul.f32 %v4457, 0.01
    %v4546 = vmul.f32 %v4459, 0.01
    %v4547 = vmul.f32 %v4539, 0.01
    %v4548 = vmul.f32 %v4541, 0.01
    %v4549 = vmax.f32 %v4457, %v4545
    %v4550 = vmax.f32 %v4459, %v4546
    %v4551 = vmax.f32 %v4539, %v4547
    %v4552 = vmax.f32 %v4541, %v4548
    %v4553 = vpack.c.bf16 %v4549, %v4549
    %v4554 = vpack.c.bf16 %v4550, %v4550
    %v4555 = vpack.c.bf16 %v4551, %v4551
    %v4556 = vpack.c.bf16 %v4552, %v4552
    %v4557 = vld [vmem:[#allocation14] sm:$0xff]
    %v4558 = vld [vmem:[#allocation14 + $0x8] sm:$0xff]
    %v4559 = vld [vmem:[#allocation14 + $0x10] sm:$0xff]
    %v4560 = vld [vmem:[#allocation14 + $0x18] sm:$0xff]
    %v4561 = vld [vmem:[#allocation14 + $0x20] sm:$0xff]
    %v4562 = vld [vmem:[#allocation14 + $0x28] sm:$0xff]
    %v4563 = vld [vmem:[#allocation14 + $0x30] sm:$0xff]
    %v4564 = vld [vmem:[#allocation14 + $0x38] sm:$0xff]
    %v4565 = vld [vmem:[#allocation14 + $0x40] sm:$0xff]
    %v4566 = vld [vmem:[#allocation14 + $0x48] sm:$0xff]
    %v4567 = vld [vmem:[#allocation14 + $0x50] sm:$0xff]
    %v4568 = vld [vmem:[#allocation14 + $0x58] sm:$0xff]
    %v4569 = vld [vmem:[#allocation14 + $0x60] sm:$0xff]
    %v4570 = vld [vmem:[#allocation14 + $0x68] sm:$0xff]
    %v4571 = vld [vmem:[#allocation14 + $0x70] sm:$0xff]
    %v4572 = vld [vmem:[#allocation14 + $0x78] sm:$0xff]
    %v4573 = vld [vmem:[#allocation14 + $0x80] sm:$0xff]
    %v4574 = vld [vmem:[#allocation14 + $0x88] sm:$0xff]
    %v4575 = vld [vmem:[#allocation14 + $0x90] sm:$0xff]
    %v4576 = vld [vmem:[#allocation14 + $0x98] sm:$0xff]
    %v4577 = vld [vmem:[#allocation14 + $0xa0] sm:$0xff]
    %v4578 = vld [vmem:[#allocation14 + $0xa8] sm:$0xff]
    %v4579 = vld [vmem:[#allocation14 + $0xb0] sm:$0xff]
    %v4580 = vld [vmem:[#allocation14 + $0xb8] sm:$0xff]
    %v4581 = vld [vmem:[#allocation14 + $0xc0] sm:$0xff]
    %v4582 = vld [vmem:[#allocation14 + $0xc8] sm:$0xff]
    %v4583 = vld [vmem:[#allocation14 + $0xd0] sm:$0xff]
    %v4584 = vld [vmem:[#allocation14 + $0xd8] sm:$0xff]
    %v4585 = vld [vmem:[#allocation14 + $0xe0] sm:$0xff]
    %v4586 = vld [vmem:[#allocation14 + $0xe8] sm:$0xff]
    %v4587 = vld [vmem:[#allocation14 + $0xf0] sm:$0xff]
    %v4588 = vld [vmem:[#allocation14 + $0xf8] sm:$0xff]
    %v4589 = vld [vmem:[#allocation14 + $0x100] sm:$0xff]
    %v4590 = vld [vmem:[#allocation14 + $0x108] sm:$0xff]
    %v4591 = vld [vmem:[#allocation14 + $0x110] sm:$0xff]
    %v4592 = vld [vmem:[#allocation14 + $0x118] sm:$0xff]
    %v4593 = vld [vmem:[#allocation14 + $0x120] sm:$0xff]
    %v4594 = vld [vmem:[#allocation14 + $0x128] sm:$0xff]
    %v4595 = vld [vmem:[#allocation14 + $0x130] sm:$0xff]
    %v4596 = vld [vmem:[#allocation14 + $0x138] sm:$0xff]
    %v4597 = vld [vmem:[#allocation14 + $0x140] sm:$0xff]
    %v4598 = vld [vmem:[#allocation14 + $0x148] sm:$0xff]
    %v4599 = vld [vmem:[#allocation14 + $0x150] sm:$0xff]
    %v4600 = vld [vmem:[#allocation14 + $0x158] sm:$0xff]
    %v4601 = vld [vmem:[#allocation14 + $0x160] sm:$0xff]
    %v4602 = vld [vmem:[#allocation14 + $0x168] sm:$0xff]
    %v4603 = vld [vmem:[#allocation14 + $0x170] sm:$0xff]
    %v4604 = vld [vmem:[#allocation14 + $0x178] sm:$0xff]
    %v4605 = vld [vmem:[#allocation14 + $0x180] sm:$0xff]
    %v4606 = vld [vmem:[#allocation14 + $0x188] sm:$0xff]
    %v4607 = vld [vmem:[#allocation14 + $0x190] sm:$0xff]
    %v4608 = vld [vmem:[#allocation14 + $0x198] sm:$0xff]
    %v4609 = vld [vmem:[#allocation14 + $0x1a0] sm:$0xff]
    %v4610 = vld [vmem:[#allocation14 + $0x1a8] sm:$0xff]
    %v4611 = vld [vmem:[#allocation14 + $0x1b0] sm:$0xff]
    %v4612 = vld [vmem:[#allocation14 + $0x1b8] sm:$0xff]
    %v4613 = vld [vmem:[#allocation14 + $0x1c0] sm:$0xff]
    %v4614 = vld [vmem:[#allocation14 + $0x1c8] sm:$0xff]
    %v4615 = vld [vmem:[#allocation14 + $0x1d0] sm:$0xff]
    %v4616 = vld [vmem:[#allocation14 + $0x1d8] sm:$0xff]
    %v4617 = vld [vmem:[#allocation14 + $0x1e0] sm:$0xff]
    %v4618 = vld [vmem:[#allocation14 + $0x1e8] sm:$0xff]
    %v4619 = vld [vmem:[#allocation14 + $0x1f0] sm:$0xff]
    %v4620 = vld [vmem:[#allocation14 + $0x1f8] sm:$0xff]
    %v4621 = vld [vmem:[#allocation14 + $0x200] sm:$0xff]
    %v4622 = vld [vmem:[#allocation14 + $0x208] sm:$0xff]
    %v4623 = vld [vmem:[#allocation14 + $0x210] sm:$0xff]
    %v4624 = vld [vmem:[#allocation14 + $0x218] sm:$0xff]
    %v4625 = vld [vmem:[#allocation14 + $0x220] sm:$0xff]
    %v4626 = vld [vmem:[#allocation14 + $0x228] sm:$0xff]
    %v4627 = vld [vmem:[#allocation14 + $0x230] sm:$0xff]
    %v4628 = vld [vmem:[#allocation14 + $0x238] sm:$0xff]
    %v4629 = vld [vmem:[#allocation14 + $0x240] sm:$0xff]
    %v4630 = vld [vmem:[#allocation14 + $0x248] sm:$0xff]
    %v4631 = vld [vmem:[#allocation14 + $0x250] sm:$0xff]
    %v4632 = vld [vmem:[#allocation14 + $0x258] sm:$0xff]
    %v4633 = vld [vmem:[#allocation14 + $0x260] sm:$0xff]
    %v4634 = vld [vmem:[#allocation14 + $0x268] sm:$0xff]
    %v4635 = vld [vmem:[#allocation14 + $0x270] sm:$0xff]
    %v4636 = vld [vmem:[#allocation14 + $0x278] sm:$0xff]
    %v4637 = vld [vmem:[#allocation14 + $0x280] sm:$0xff]
    %v4638 = vld [vmem:[#allocation14 + $0x288] sm:$0xff]
    %v4639 = vld [vmem:[#allocation14 + $0x290] sm:$0xff]
    %v4640 = vld [vmem:[#allocation14 + $0x298] sm:$0xff]
    %v4641 = vld [vmem:[#allocation14 + $0x2a0] sm:$0xff]
    %v4642 = vld [vmem:[#allocation14 + $0x2a8] sm:$0xff]
    %v4643 = vld [vmem:[#allocation14 + $0x2b0] sm:$0xff]
    %v4644 = vld [vmem:[#allocation14 + $0x2b8] sm:$0xff]
    %v4645 = vld [vmem:[#allocation14 + $0x2c0] sm:$0xff]
    %v4646 = vld [vmem:[#allocation14 + $0x2c8] sm:$0xff]
    %v4647 = vld [vmem:[#allocation14 + $0x2d0] sm:$0xff]
    %v4648 = vld [vmem:[#allocation14 + $0x2d8] sm:$0xff]
    %v4649 = vld [vmem:[#allocation14 + $0x2e0] sm:$0xff]
    %v4650 = vld [vmem:[#allocation14 + $0x2e8] sm:$0xff]
    %v4651 = vld [vmem:[#allocation14 + $0x2f0] sm:$0xff]
    %v4652 = vld [vmem:[#allocation14 + $0x2f8] sm:$0xff]
    %v4653 = vld [vmem:[#allocation14 + $0x300] sm:$0xff]
    %v4654 = vld [vmem:[#allocation14 + $0x308] sm:$0xff]
    %v4655 = vld [vmem:[#allocation14 + $0x310] sm:$0xff]
    %v4656 = vld [vmem:[#allocation14 + $0x318] sm:$0xff]
    %v4657 = vld [vmem:[#allocation14 + $0x320] sm:$0xff]
    %v4658 = vld [vmem:[#allocation14 + $0x328] sm:$0xff]
    %v4659 = vld [vmem:[#allocation14 + $0x330] sm:$0xff]
    %v4660 = vld [vmem:[#allocation14 + $0x338] sm:$0xff]
    %v4661 = vld [vmem:[#allocation14 + $0x340] sm:$0xff]
    %v4662 = vld [vmem:[#allocation14 + $0x348] sm:$0xff]
    %v4663 = vld [vmem:[#allocation14 + $0x350] sm:$0xff]
    %v4664 = vld [vmem:[#allocation14 + $0x358] sm:$0xff]
    %v4665 = vld [vmem:[#allocation14 + $0x360] sm:$0xff]
    %v4666 = vld [vmem:[#allocation14 + $0x368] sm:$0xff]
    %v4667 = vld [vmem:[#allocation14 + $0x370] sm:$0xff]
    %v4668 = vld [vmem:[#allocation14 + $0x378] sm:$0xff]
    %v4669 = vld [vmem:[#allocation14 + $0x380] sm:$0xff]
    %v4670 = vld [vmem:[#allocation14 + $0x388] sm:$0xff]
    %v4671 = vld [vmem:[#allocation14 + $0x390] sm:$0xff]
    %v4672 = vld [vmem:[#allocation14 + $0x398] sm:$0xff]
    %v4673 = vld [vmem:[#allocation14 + $0x3a0] sm:$0xff]
    %v4674 = vld [vmem:[#allocation14 + $0x3a8] sm:$0xff]
    %v4675 = vld [vmem:[#allocation14 + $0x3b0] sm:$0xff]
    %v4676 = vld [vmem:[#allocation14 + $0x3b8] sm:$0xff]
    %v4677 = vld [vmem:[#allocation14 + $0x3c0] sm:$0xff]
    %v4678 = vld [vmem:[#allocation14 + $0x3c8] sm:$0xff]
    %v4679 = vld [vmem:[#allocation14 + $0x3d0] sm:$0xff]
    %v4680 = vld [vmem:[#allocation14 + $0x3d8] sm:$0xff]
    %v4681 = vld [vmem:[#allocation14 + $0x3e0] sm:$0xff]
    %v4682 = vld [vmem:[#allocation14 + $0x3e8] sm:$0xff]
    %v4683 = vld [vmem:[#allocation14 + $0x3f0] sm:$0xff]
    %v4684 = vld [vmem:[#allocation14 + $0x3f8] sm:$0xff]
    %v4685 = vld [vmem:[%s12] sm:$0xf]
    %v4687 = vlaneseq
    %v4688 = vshrl.u32 %v4687, 7
    %v4689 = vsub.s32 0, %v4688
    %v4690 = vrot.slane %v4685, %v4689
    %v4691 = vlaneseq
    %v4692 = vshrl.u32 %v4691, 7
    %v4693 = vsub.s32 1, %v4692
    %v4694 = vrot.slane %v4685, %v4693
    %v4695 = vlaneseq
    %v4696 = vshrl.u32 %v4695, 7
    %v4697 = vsub.s32 2, %v4696
    %v4698 = vrot.slane %v4685, %v4697
    %v4699 = vlaneseq
    %v4700 = vshrl.u32 %v4699, 7
    %v4701 = vsub.s32 3, %v4700
    %v4702 = vrot.slane %v4685, %v4701
    %v4835 = vunpack.c.l.b16 %v4557
    %v4836 = vunpack.c.h.b16 %v4557
    %v4837 = vunpack.c.l.b16 %v4558
    %v4838 = vunpack.c.h.b16 %v4558
    %v4839 = vunpack.c.l.b16 %v4559
    %v4840 = vunpack.c.h.b16 %v4559
    %v4841 = vunpack.c.l.b16 %v4560
    %v4842 = vunpack.c.h.b16 %v4560
    %v4843 = vunpack.c.l.b16 %v4561
    %v4844 = vunpack.c.h.b16 %v4561
    %v4845 = vunpack.c.l.b16 %v4562
    %v4846 = vunpack.c.h.b16 %v4562
    %v4847 = vunpack.c.l.b16 %v4563
    %v4848 = vunpack.c.h.b16 %v4563
    %v4849 = vunpack.c.l.b16 %v4564
    %v4850 = vunpack.c.h.b16 %v4564
    %v4851 = vunpack.c.l.b16 %v4565
    %v4852 = vunpack.c.h.b16 %v4565
    %v4853 = vunpack.c.l.b16 %v4566
    %v4854 = vunpack.c.h.b16 %v4566
    %v4855 = vunpack.c.l.b16 %v4567
    %v4856 = vunpack.c.h.b16 %v4567
    %v4857 = vunpack.c.l.b16 %v4568
    %v4858 = vunpack.c.h.b16 %v4568
    %v4859 = vunpack.c.l.b16 %v4569
    %v4860 = vunpack.c.h.b16 %v4569
    %v4861 = vunpack.c.l.b16 %v4570
    %v4862 = vunpack.c.h.b16 %v4570
    %v4863 = vunpack.c.l.b16 %v4571
    %v4864 = vunpack.c.h.b16 %v4571
    %v4865 = vunpack.c.l.b16 %v4572
    %v4866 = vunpack.c.h.b16 %v4572
    %v4867 = vunpack.c.l.b16 %v4573
    %v4868 = vunpack.c.h.b16 %v4573
    %v4869 = vunpack.c.l.b16 %v4574
    %v4870 = vunpack.c.h.b16 %v4574
    %v4871 = vunpack.c.l.b16 %v4575
    %v4872 = vunpack.c.h.b16 %v4575
    %v4873 = vunpack.c.l.b16 %v4576
    %v4874 = vunpack.c.h.b16 %v4576
    %v4875 = vunpack.c.l.b16 %v4577
    %v4876 = vunpack.c.h.b16 %v4577
    %v4877 = vunpack.c.l.b16 %v4578
    %v4878 = vunpack.c.h.b16 %v4578
    %v4879 = vunpack.c.l.b16 %v4579
    %v4880 = vunpack.c.h.b16 %v4579
    %v4881 = vunpack.c.l.b16 %v4580
    %v4882 = vunpack.c.h.b16 %v4580
    %v4883 = vunpack.c.l.b16 %v4581
    %v4884 = vunpack.c.h.b16 %v4581
    %v4885 = vunpack.c.l.b16 %v4582
    %v4886 = vunpack.c.h.b16 %v4582
    %v4887 = vunpack.c.l.b16 %v4583
    %v4888 = vunpack.c.h.b16 %v4583
    %v4889 = vunpack.c.l.b16 %v4584
    %v4890 = vunpack.c.h.b16 %v4584
    %v4891 = vunpack.c.l.b16 %v4585
    %v4892 = vunpack.c.h.b16 %v4585
    %v4893 = vunpack.c.l.b16 %v4586
    %v4894 = vunpack.c.h.b16 %v4586
    %v4895 = vunpack.c.l.b16 %v4587
    %v4896 = vunpack.c.h.b16 %v4587
    %v4897 = vunpack.c.l.b16 %v4588
    %v4898 = vunpack.c.h.b16 %v4588
    %v4899 = vunpack.c.l.b16 %v4589
    %v4900 = vunpack.c.h.b16 %v4589
    %v4901 = vunpack.c.l.b16 %v4590
    %v4902 = vunpack.c.h.b16 %v4590
    %v4903 = vunpack.c.l.b16 %v4591
    %v4904 = vunpack.c.h.b16 %v4591
    %v4905 = vunpack.c.l.b16 %v4592
    %v4906 = vunpack.c.h.b16 %v4592
    %v4907 = vunpack.c.l.b16 %v4593
    %v4908 = vunpack.c.h.b16 %v4593
    %v4909 = vunpack.c.l.b16 %v4594
    %v4910 = vunpack.c.h.b16 %v4594
    %v4911 = vunpack.c.l.b16 %v4595
    %v4912 = vunpack.c.h.b16 %v4595
    %v4913 = vunpack.c.l.b16 %v4596
    %v4914 = vunpack.c.h.b16 %v4596
    %v4915 = vunpack.c.l.b16 %v4597
    %v4916 = vunpack.c.h.b16 %v4597
    %v4917 = vunpack.c.l.b16 %v4598
    %v4918 = vunpack.c.h.b16 %v4598
    %v4919 = vunpack.c.l.b16 %v4599
    %v4920 = vunpack.c.h.b16 %v4599
    %v4921 = vunpack.c.l.b16 %v4600
    %v4922 = vunpack.c.h.b16 %v4600
    %v4923 = vunpack.c.l.b16 %v4601
    %v4924 = vunpack.c.h.b16 %v4601
    %v4925 = vunpack.c.l.b16 %v4602
    %v4926 = vunpack.c.h.b16 %v4602
    %v4927 = vunpack.c.l.b16 %v4603
    %v4928 = vunpack.c.h.b16 %v4603
    %v4929 = vunpack.c.l.b16 %v4604
    %v4930 = vunpack.c.h.b16 %v4604
    %v4931 = vunpack.c.l.b16 %v4605
    %v4932 = vunpack.c.h.b16 %v4605
    %v4933 = vunpack.c.l.b16 %v4606
    %v4934 = vunpack.c.h.b16 %v4606
    %v4935 = vunpack.c.l.b16 %v4607
    %v4936 = vunpack.c.h.b16 %v4607
    %v4937 = vunpack.c.l.b16 %v4608
    %v4938 = vunpack.c.h.b16 %v4608
    %v4939 = vunpack.c.l.b16 %v4609
    %v4940 = vunpack.c.h.b16 %v4609
    %v4941 = vunpack.c.l.b16 %v4610
    %v4942 = vunpack.c.h.b16 %v4610
    %v4943 = vunpack.c.l.b16 %v4611
    %v4944 = vunpack.c.h.b16 %v4611
    %v4945 = vunpack.c.l.b16 %v4612
    %v4946 = vunpack.c.h.b16 %v4612
    %v4947 = vunpack.c.l.b16 %v4613
    %v4948 = vunpack.c.h.b16 %v4613
    %v4949 = vunpack.c.l.b16 %v4614
    %v4950 = vunpack.c.h.b16 %v4614
    %v4951 = vunpack.c.l.b16 %v4615
    %v4952 = vunpack.c.h.b16 %v4615
    %v4953 = vunpack.c.l.b16 %v4616
    %v4954 = vunpack.c.h.b16 %v4616
    %v4955 = vunpack.c.l.b16 %v4617
    %v4956 = vunpack.c.h.b16 %v4617
    %v4957 = vunpack.c.l.b16 %v4618
    %v4958 = vunpack.c.h.b16 %v4618
    %v4959 = vunpack.c.l.b16 %v4619
    %v4960 = vunpack.c.h.b16 %v4619
    %v4961 = vunpack.c.l.b16 %v4620
    %v4962 = vunpack.c.h.b16 %v4620
    %v4963 = vunpack.c.l.b16 %v4621
    %v4964 = vunpack.c.h.b16 %v4621
    %v4965 = vunpack.c.l.b16 %v4622
    %v4966 = vunpack.c.h.b16 %v4622
    %v4967 = vunpack.c.l.b16 %v4623
    %v4968 = vunpack.c.h.b16 %v4623
    %v4969 = vunpack.c.l.b16 %v4624
    %v4970 = vunpack.c.h.b16 %v4624
    %v4971 = vunpack.c.l.b16 %v4625
    %v4972 = vunpack.c.h.b16 %v4625
    %v4973 = vunpack.c.l.b16 %v4626
    %v4974 = vunpack.c.h.b16 %v4626
    %v4975 = vunpack.c.l.b16 %v4627
    %v4976 = vunpack.c.h.b16 %v4627
    %v4977 = vunpack.c.l.b16 %v4628
    %v4978 = vunpack.c.h.b16 %v4628
    %v4979 = vunpack.c.l.b16 %v4629
    %v4980 = vunpack.c.h.b16 %v4629
    %v4981 = vunpack.c.l.b16 %v4630
    %v4982 = vunpack.c.h.b16 %v4630
    %v4983 = vunpack.c.l.b16 %v4631
    %v4984 = vunpack.c.h.b16 %v4631
    %v4985 = vunpack.c.l.b16 %v4632
    %v4986 = vunpack.c.h.b16 %v4632
    %v4987 = vunpack.c.l.b16 %v4633
    %v4988 = vunpack.c.h.b16 %v4633
    %v4989 = vunpack.c.l.b16 %v4634
    %v4990 = vunpack.c.h.b16 %v4634
    %v4991 = vunpack.c.l.b16 %v4635
    %v4992 = vunpack.c.h.b16 %v4635
    %v4993 = vunpack.c.l.b16 %v4636
    %v4994 = vunpack.c.h.b16 %v4636
    %v4995 = vunpack.c.l.b16 %v4637
    %v4996 = vunpack.c.h.b16 %v4637
    %v4997 = vunpack.c.l.b16 %v4638
    %v4998 = vunpack.c.h.b16 %v4638
    %v4999 = vunpack.c.l.b16 %v4639
    %v5000 = vunpack.c.h.b16 %v4639
    %v5001 = vunpack.c.l.b16 %v4640
    %v5002 = vunpack.c.h.b16 %v4640
    %v5003 = vunpack.c.l.b16 %v4641
    %v5004 = vunpack.c.h.b16 %v4641
    %v5005 = vunpack.c.l.b16 %v4642
    %v5006 = vunpack.c.h.b16 %v4642
    %v5007 = vunpack.c.l.b16 %v4643
    %v5008 = vunpack.c.h.b16 %v4643
    %v5009 = vunpack.c.l.b16 %v4644
    %v5010 = vunpack.c.h.b16 %v4644
    %v5011 = vunpack.c.l.b16 %v4645
    %v5012 = vunpack.c.h.b16 %v4645
    %v5013 = vunpack.c.l.b16 %v4646
    %v5014 = vunpack.c.h.b16 %v4646
    %v5015 = vunpack.c.l.b16 %v4647
    %v5016 = vunpack.c.h.b16 %v4647
    %v5017 = vunpack.c.l.b16 %v4648
    %v5018 = vunpack.c.h.b16 %v4648
    %v5019 = vunpack.c.l.b16 %v4649
    %v5020 = vunpack.c.h.b16 %v4649
    %v5021 = vunpack.c.l.b16 %v4650
    %v5022 = vunpack.c.h.b16 %v4650
    %v5023 = vunpack.c.l.b16 %v4651
    %v5024 = vunpack.c.h.b16 %v4651
    %v5025 = vunpack.c.l.b16 %v4652
    %v5026 = vunpack.c.h.b16 %v4652
    %v5027 = vunpack.c.l.b16 %v4653
    %v5028 = vunpack.c.h.b16 %v4653
    %v5029 = vunpack.c.l.b16 %v4654
    %v5030 = vunpack.c.h.b16 %v4654
    %v5031 = vunpack.c.l.b16 %v4655
    %v5032 = vunpack.c.h.b16 %v4655
    %v5033 = vunpack.c.l.b16 %v4656
    %v5034 = vunpack.c.h.b16 %v4656
    %v5035 = vunpack.c.l.b16 %v4657
    %v5036 = vunpack.c.h.b16 %v4657
    %v5037 = vunpack.c.l.b16 %v4658
    %v5038 = vunpack.c.h.b16 %v4658
    %v5039 = vunpack.c.l.b16 %v4659
    %v5040 = vunpack.c.h.b16 %v4659
    %v5041 = vunpack.c.l.b16 %v4660
    %v5042 = vunpack.c.h.b16 %v4660
    %v5043 = vunpack.c.l.b16 %v4661
    %v5044 = vunpack.c.h.b16 %v4661
    %v5045 = vunpack.c.l.b16 %v4662
    %v5046 = vunpack.c.h.b16 %v4662
    %v5047 = vunpack.c.l.b16 %v4663
    %v5048 = vunpack.c.h.b16 %v4663
    %v5049 = vunpack.c.l.b16 %v4664
    %v5050 = vunpack.c.h.b16 %v4664
    %v5051 = vunpack.c.l.b16 %v4665
    %v5052 = vunpack.c.h.b16 %v4665
    %v5053 = vunpack.c.l.b16 %v4666
    %v5054 = vunpack.c.h.b16 %v4666
    %v5055 = vunpack.c.l.b16 %v4667
    %v5056 = vunpack.c.h.b16 %v4667
    %v5057 = vunpack.c.l.b16 %v4668
    %v5058 = vunpack.c.h.b16 %v4668
    %v5059 = vunpack.c.l.b16 %v4669
    %v5060 = vunpack.c.h.b16 %v4669
    %v5061 = vunpack.c.l.b16 %v4670
    %v5062 = vunpack.c.h.b16 %v4670
    %v5063 = vunpack.c.l.b16 %v4671
    %v5064 = vunpack.c.h.b16 %v4671
    %v5065 = vunpack.c.l.b16 %v4672
    %v5066 = vunpack.c.h.b16 %v4672
    %v5067 = vunpack.c.l.b16 %v4673
    %v5068 = vunpack.c.h.b16 %v4673
    %v5069 = vunpack.c.l.b16 %v4674
    %v5070 = vunpack.c.h.b16 %v4674
    %v5071 = vunpack.c.l.b16 %v4675
    %v5072 = vunpack.c.h.b16 %v4675
    %v5073 = vunpack.c.l.b16 %v4676
    %v5074 = vunpack.c.h.b16 %v4676
    %v5075 = vunpack.c.l.b16 %v4677
    %v5076 = vunpack.c.h.b16 %v4677
    %v5077 = vunpack.c.l.b16 %v4678
    %v5078 = vunpack.c.h.b16 %v4678
    %v5079 = vunpack.c.l.b16 %v4679
    %v5080 = vunpack.c.h.b16 %v4679
    %v5081 = vunpack.c.l.b16 %v4680
    %v5082 = vunpack.c.h.b16 %v4680
    %v5083 = vunpack.c.l.b16 %v4681
    %v5084 = vunpack.c.h.b16 %v4681
    %v5085 = vunpack.c.l.b16 %v4682
    %v5086 = vunpack.c.h.b16 %v4682
    %v5087 = vunpack.c.l.b16 %v4683
    %v5088 = vunpack.c.h.b16 %v4683
    %v5089 = vunpack.c.l.b16 %v4684
    %v5090 = vunpack.c.h.b16 %v4684
    %v5091 = vpack.c.b16 %v4839, %v4835
    %v5092 = vpack.c.b16 %v4840, %v4836
    %v5093 = vpack.c.b16 %v4841, %v4837
    %v5094 = vpack.c.b16 %v4842, %v4838
    %v5095 = vpack.c.b16 %v4847, %v4843
    %v5096 = vpack.c.b16 %v4848, %v4844
    %v5097 = vpack.c.b16 %v4849, %v4845
    %v5098 = vpack.c.b16 %v4850, %v4846
    %v5099 = vpack.c.b16 %v4855, %v4851
    %v5100 = vpack.c.b16 %v4856, %v4852
    %v5101 = vpack.c.b16 %v4857, %v4853
    %v5102 = vpack.c.b16 %v4858, %v4854
    %v5103 = vpack.c.b16 %v4863, %v4859
    %v5104 = vpack.c.b16 %v4864, %v4860
    %v5105 = vpack.c.b16 %v4865, %v4861
    %v5106 = vpack.c.b16 %v4866, %v4862
    %v5107 = vpack.c.b16 %v4871, %v4867
    %v5108 = vpack.c.b16 %v4872, %v4868
    %v5109 = vpack.c.b16 %v4873, %v4869
    %v5110 = vpack.c.b16 %v4874, %v4870
    %v5111 = vpack.c.b16 %v4879, %v4875
    %v5112 = vpack.c.b16 %v4880, %v4876
    %v5113 = vpack.c.b16 %v4881, %v4877
    %v5114 = vpack.c.b16 %v4882, %v4878
    %v5115 = vpack.c.b16 %v4887, %v4883
    %v5116 = vpack.c.b16 %v4888, %v4884
    %v5117 = vpack.c.b16 %v4889, %v4885
    %v5118 = vpack.c.b16 %v4890, %v4886
    %v5119 = vpack.c.b16 %v4895, %v4891
    %v5120 = vpack.c.b16 %v4896, %v4892
    %v5121 = vpack.c.b16 %v4897, %v4893
    %v5122 = vpack.c.b16 %v4898, %v4894
    %v5123 = vpack.c.b16 %v4903, %v4899
    %v5124 = vpack.c.b16 %v4904, %v4900
    %v5125 = vpack.c.b16 %v4905, %v4901
    %v5126 = vpack.c.b16 %v4906, %v4902
    %v5127 = vpack.c.b16 %v4911, %v4907
    %v5128 = vpack.c.b16 %v4912, %v4908
    %v5129 = vpack.c.b16 %v4913, %v4909
    %v5130 = vpack.c.b16 %v4914, %v4910
    %v5131 = vpack.c.b16 %v4919, %v4915
    %v5132 = vpack.c.b16 %v4920, %v4916
    %v5133 = vpack.c.b16 %v4921, %v4917
    %v5134 = vpack.c.b16 %v4922, %v4918
    %v5135 = vpack.c.b16 %v4927, %v4923
    %v5136 = vpack.c.b16 %v4928, %v4924
    %v5137 = vpack.c.b16 %v4929, %v4925
    %v5138 = vpack.c.b16 %v4930, %v4926
    %v5139 = vpack.c.b16 %v4935, %v4931
    %v5140 = vpack.c.b16 %v4936, %v4932
    %v5141 = vpack.c.b16 %v4937, %v4933
    %v5142 = vpack.c.b16 %v4938, %v4934
    %v5143 = vpack.c.b16 %v4943, %v4939
    %v5144 = vpack.c.b16 %v4944, %v4940
    %v5145 = vpack.c.b16 %v4945, %v4941
    %v5146 = vpack.c.b16 %v4946, %v4942
    %v5147 = vpack.c.b16 %v4951, %v4947
    %v5148 = vpack.c.b16 %v4952, %v4948
    %v5149 = vpack.c.b16 %v4953, %v4949
    %v5150 = vpack.c.b16 %v4954, %v4950
    %v5151 = vpack.c.b16 %v4959, %v4955
    %v5152 = vpack.c.b16 %v4960, %v4956
    %v5153 = vpack.c.b16 %v4961, %v4957
    %v5154 = vpack.c.b16 %v4962, %v4958
    %v5155 = vpack.c.b16 %v4967, %v4963
    %v5156 = vpack.c.b16 %v4968, %v4964
    %v5157 = vpack.c.b16 %v4969, %v4965
    %v5158 = vpack.c.b16 %v4970, %v4966
    %v5159 = vpack.c.b16 %v4975, %v4971
    %v5160 = vpack.c.b16 %v4976, %v4972
    %v5161 = vpack.c.b16 %v4977, %v4973
    %v5162 = vpack.c.b16 %v4978, %v4974
    %v5163 = vpack.c.b16 %v4983, %v4979
    %v5164 = vpack.c.b16 %v4984, %v4980
    %v5165 = vpack.c.b16 %v4985, %v4981
    %v5166 = vpack.c.b16 %v4986, %v4982
    %v5167 = vpack.c.b16 %v4991, %v4987
    %v5168 = vpack.c.b16 %v4992, %v4988
    %v5169 = vpack.c.b16 %v4993, %v4989
    %v5170 = vpack.c.b16 %v4994, %v4990
    %v5171 = vpack.c.b16 %v4999, %v4995
    %v5172 = vpack.c.b16 %v5000, %v4996
    %v5173 = vpack.c.b16 %v5001, %v4997
    %v5174 = vpack.c.b16 %v5002, %v4998
    %v5175 = vpack.c.b16 %v5007, %v5003
    %v5176 = vpack.c.b16 %v5008, %v5004
    %v5177 = vpack.c.b16 %v5009, %v5005
    %v5178 = vpack.c.b16 %v5010, %v5006
    %v5179 = vpack.c.b16 %v5015, %v5011
    %v5180 = vpack.c.b16 %v5016, %v5012
    %v5181 = vpack.c.b16 %v5017, %v5013
    %v5182 = vpack.c.b16 %v5018, %v5014
    %v5183 = vpack.c.b16 %v5023, %v5019
    %v5184 = vpack.c.b16 %v5024, %v5020
    %v5185 = vpack.c.b16 %v5025, %v5021
    %v5186 = vpack.c.b16 %v5026, %v5022
    %v5187 = vpack.c.b16 %v5031, %v5027
    %v5188 = vpack.c.b16 %v5032, %v5028
    %v5189 = vpack.c.b16 %v5033, %v5029
    %v5190 = vpack.c.b16 %v5034, %v5030
    %v5191 = vpack.c.b16 %v5039, %v5035
    %v5192 = vpack.c.b16 %v5040, %v5036
    %v5193 = vpack.c.b16 %v5041, %v5037
    %v5194 = vpack.c.b16 %v5042, %v5038
    %v5195 = vpack.c.b16 %v5047, %v5043
    %v5196 = vpack.c.b16 %v5048, %v5044
    %v5197 = vpack.c.b16 %v5049, %v5045
    %v5198 = vpack.c.b16 %v5050, %v5046
    %v5199 = vpack.c.b16 %v5055, %v5051
    %v5200 = vpack.c.b16 %v5056, %v5052
    %v5201 = vpack.c.b16 %v5057, %v5053
    %v5202 = vpack.c.b16 %v5058, %v5054
    %v5203 = vpack.c.b16 %v5063, %v5059
    %v5204 = vpack.c.b16 %v5064, %v5060
    %v5205 = vpack.c.b16 %v5065, %v5061
    %v5206 = vpack.c.b16 %v5066, %v5062
    %v5207 = vpack.c.b16 %v5071, %v5067
    %v5208 = vpack.c.b16 %v5072, %v5068
    %v5209 = vpack.c.b16 %v5073, %v5069
    %v5210 = vpack.c.b16 %v5074, %v5070
    %v5211 = vpack.c.b16 %v5079, %v5075
    %v5212 = vpack.c.b16 %v5080, %v5076
    %v5213 = vpack.c.b16 %v5081, %v5077
    %v5214 = vpack.c.b16 %v5082, %v5078
    %v5215 = vpack.c.b16 %v5087, %v5083
    %v5216 = vpack.c.b16 %v5088, %v5084
    %v5217 = vpack.c.b16 %v5089, %v5085
    %v5218 = vpack.c.b16 %v5090, %v5086
    %5347 = vmatprep.subr.bf16.mxu0 %v5092
    %5348 = vmatpush1.bf16.msra.mxu0 %v5091
    %5349 = vmatprep.subr.bf16.mxu0 %v5096
    %5350 = vmatpush1.bf16.msra.mxu0 %v5095
    %5351 = vmatprep.subr.bf16.mxu0 %v5100
    %5352 = vmatpush1.bf16.msra.mxu0 %v5099
    %5353 = vmatprep.subr.bf16.mxu0 %v5104
    %5354 = vmatpush1.bf16.msra.mxu0 %v5103
    %5355 = vmatprep.subr.bf16.mxu0 %v5108
    %5356 = vmatpush1.bf16.msra.mxu0 %v5107
    %5357 = vmatprep.subr.bf16.mxu0 %v5112
    %5358 = vmatpush1.bf16.msra.mxu0 %v5111
    %5359 = vmatprep.subr.bf16.mxu0 %v5116
    %5360 = vmatpush1.bf16.msra.mxu0 %v5115
    %5361 = vmatprep.subr.bf16.mxu0 %v5120
    %5362 = vmatpush1.bf16.msra.mxu0 %v5119
    %5363 = vmatprep.subr.bf16.mxu0 %v5124
    %5364 = vmatpush1.bf16.msra.mxu0 %v5123
    %5365 = vmatprep.subr.bf16.mxu0 %v5128
    %5366 = vmatpush1.bf16.msra.mxu0 %v5127
    %5367 = vmatprep.subr.bf16.mxu0 %v5132
    %5368 = vmatpush1.bf16.msra.mxu0 %v5131
    %5369 = vmatprep.subr.bf16.mxu0 %v5136
    %5370 = vmatpush1.bf16.msra.mxu0 %v5135
    %5371 = vmatprep.subr.bf16.mxu0 %v5140
    %5372 = vmatpush1.bf16.msra.mxu0 %v5139
    %5373 = vmatprep.subr.bf16.mxu0 %v5144
    %5374 = vmatpush1.bf16.msra.mxu0 %v5143
    %5375 = vmatprep.subr.bf16.mxu0 %v5148
    %5376 = vmatpush1.bf16.msra.mxu0 %v5147
    %5377 = vmatprep.subr.bf16.mxu0 %v5152
    %5378 = vmatpush1.bf16.msra.mxu0 %v5151
    %5379 = vmatprep.mubr.bf16.mxu0 %v4554
    %5380 = vmatmul.mubr.bf16.gmra.mrb[0].mxu0 %v4553
    %v5381 = vpop.f32.mrb[0].mxu0
    %v5382 = vadd.f32 %v4690, %v5381
    %v5383 = vpop.f32.mrb[0].mxu0
    %v5384 = vadd.f32 %v4694, %v5383
    %v5385 = vpop.f32.mrb[0].mxu0
    %v5386 = vpop.f32.mrb[0].mxu0
    %5387 = vdwg.mxu0
    %5388 = vmatprep.subr.bf16.mxu0 %v5156
    %5389 = vmatpush1.bf16.msra.mxu0 %v5155
    %5390 = vmatprep.subr.bf16.mxu0 %v5160
    %5391 = vmatpush1.bf16.msra.mxu0 %v5159
    %5392 = vmatprep.subr.bf16.mxu0 %v5164
    %5393 = vmatpush1.bf16.msra.mxu0 %v5163
    %5394 = vmatprep.subr.bf16.mxu0 %v5168
    %5395 = vmatpush1.bf16.msra.mxu0 %v5167
    %5396 = vmatprep.subr.bf16.mxu0 %v5172
    %5397 = vmatpush1.bf16.msra.mxu0 %v5171
    %5398 = vmatprep.subr.bf16.mxu0 %v5176
    %5399 = vmatpush1.bf16.msra.mxu0 %v5175
    %5400 = vmatprep.subr.bf16.mxu0 %v5180
    %5401 = vmatpush1.bf16.msra.mxu0 %v5179
    %5402 = vmatprep.subr.bf16.mxu0 %v5184
    %5403 = vmatpush1.bf16.msra.mxu0 %v5183
    %5404 = vmatprep.subr.bf16.mxu0 %v5188
    %5405 = vmatpush1.bf16.msra.mxu0 %v5187
    %5406 = vmatprep.subr.bf16.mxu0 %v5192
    %5407 = vmatpush1.bf16.msra.mxu0 %v5191
    %5408 = vmatprep.subr.bf16.mxu0 %v5196
    %5409 = vmatpush1.bf16.msra.mxu0 %v5195
    %5410 = vmatprep.subr.bf16.mxu0 %v5200
    %5411 = vmatpush1.bf16.msra.mxu0 %v5199
    %5412 = vmatprep.subr.bf16.mxu0 %v5204
    %5413 = vmatpush1.bf16.msra.mxu0 %v5203
    %5414 = vmatprep.subr.bf16.mxu0 %v5208
    %5415 = vmatpush1.bf16.msra.mxu0 %v5207
    %5416 = vmatprep.subr.bf16.mxu0 %v5212
    %5417 = vmatpush1.bf16.msra.mxu0 %v5211
    %5418 = vmatprep.subr.bf16.mxu0 %v5216
    %5419 = vmatpush1.bf16.msra.mxu0 %v5215
    %5420 = vmatprep.mubr.bf16.mxu0 %v4556
    %5421 = vmatmul.mubr.bf16.gmra.mrb[0].mxu0 %v4555
    %v5422 = vpop.f32.mrb[0].mxu0
    %v5423 = vadd.f32 %v5382, %v5422
    %v5424 = vpop.f32.mrb[0].mxu0
    %v5425 = vadd.f32 %v5384, %v5424
    %v5426 = vpop.f32.mrb[0].mxu0
    %v5427 = vpop.f32.mrb[0].mxu0
    %5428 = vdwg.mxu0
    %5429 = vmatprep.subr.bf16.mxu0 %v5094
    %5430 = vmatpush1.bf16.msra.mxu0 %v5093
    %5431 = vmatprep.subr.bf16.mxu0 %v5098
    %5432 = vmatpush1.bf16.msra.mxu0 %v5097
    %5433 = vmatprep.subr.bf16.mxu0 %v5102
    %5434 = vmatpush1.bf16.msra.mxu0 %v5101
    %5435 = vmatprep.subr.bf16.mxu0 %v5106
    %5436 = vmatpush1.bf16.msra.mxu0 %v5105
    %5437 = vmatprep.subr.bf16.mxu0 %v5110
    %5438 = vmatpush1.bf16.msra.mxu0 %v5109
    %5439 = vmatprep.subr.bf16.mxu0 %v5114
    %5440 = vmatpush1.bf16.msra.mxu0 %v5113
    %5441 = vmatprep.subr.bf16.mxu0 %v5118
    %5442 = vmatpush1.bf16.msra.mxu0 %v5117
    %5443 = vmatprep.subr.bf16.mxu0 %v5122
    %5444 = vmatpush1.bf16.msra.mxu0 %v5121
    %5445 = vmatprep.subr.bf16.mxu0 %v5126
    %5446 = vmatpush1.bf16.msra.mxu0 %v5125
    %5447 = vmatprep.subr.bf16.mxu0 %v5130
    %5448 = vmatpush1.bf16.msra.mxu0 %v5129
    %5449 = vmatprep.subr.bf16.mxu0 %v5134
    %5450 = vmatpush1.bf16.msra.mxu0 %v5133
    %5451 = vmatprep.subr.bf16.mxu0 %v5138
    %5452 = vmatpush1.bf16.msra.mxu0 %v5137
    %5453 = vmatprep.subr.bf16.mxu0 %v5142
    %5454 = vmatpush1.bf16.msra.mxu0 %v5141
    %5455 = vmatprep.subr.bf16.mxu0 %v5146
    %5456 = vmatpush1.bf16.msra.mxu0 %v5145
    %5457 = vmatprep.subr.bf16.mxu0 %v5150
    %5458 = vmatpush1.bf16.msra.mxu0 %v5149
    %5459 = vmatprep.subr.bf16.mxu0 %v5154
    %5460 = vmatpush1.bf16.msra.mxu0 %v5153
    %5461 = vmatprep.mubr.bf16.mxu0 %v4554
    %5462 = vmatmul.mubr.bf16.gmra.mrb[0].mxu0 %v4553
    %v5463 = vpop.f32.mrb[0].mxu0
    %v5464 = vadd.f32 %v4698, %v5463
    %v5465 = vpop.f32.mrb[0].mxu0
    %v5466 = vadd.f32 %v4702, %v5465
    %v5467 = vpop.f32.mrb[0].mxu0
    %v5468 = vpop.f32.mrb[0].mxu0
    %5469 = vdwg.mxu0
    %5470 = vmatprep.subr.bf16.mxu0 %v5158
    %5471 = vmatpush1.bf16.msra.mxu0 %v5157
    %5472 = vmatprep.subr.bf16.mxu0 %v5162
    %5473 = vmatpush1.bf16.msra.mxu0 %v5161
    %5474 = vmatprep.subr.bf16.mxu0 %v5166
    %5475 = vmatpush1.bf16.msra.mxu0 %v5165
    %5476 = vmatprep.subr.bf16.mxu0 %v5170
    %5477 = vmatpush1.bf16.msra.mxu0 %v5169
    %5478 = vmatprep.subr.bf16.mxu0 %v5174
    %5479 = vmatpush1.bf16.msra.mxu0 %v5173
    %5480 = vmatprep.subr.bf16.mxu0 %v5178
    %5481 = vmatpush1.bf16.msra.mxu0 %v5177
    %5482 = vmatprep.subr.bf16.mxu0 %v5182
    %5483 = vmatpush1.bf16.msra.mxu0 %v5181
    %5484 = vmatprep.subr.bf16.mxu0 %v5186
    %5485 = vmatpush1.bf16.msra.mxu0 %v5185
    %5486 = vmatprep.subr.bf16.mxu0 %v5190
    %5487 = vmatpush1.bf16.msra.mxu0 %v5189
    %5488 = vmatprep.subr.bf16.mxu0 %v5194
    %5489 = vmatpush1.bf16.msra.mxu0 %v5193
    %5490 = vmatprep.subr.bf16.mxu0 %v5198
    %5491 = vmatpush1.bf16.msra.mxu0 %v5197
    %5492 = vmatprep.subr.bf16.mxu0 %v5202
    %5493 = vmatpush1.bf16.msra.mxu0 %v5201
    %5494 = vmatprep.subr.bf16.mxu0 %v5206
    %5495 = vmatpush1.bf16.msra.mxu0 %v5205
    %5496 = vmatprep.subr.bf16.mxu0 %v5210
    %5497 = vmatpush1.bf16.msra.mxu0 %v5209
    %5498 = vmatprep.subr.bf16.mxu0 %v5214
    %5499 = vmatpush1.bf16.msra.mxu0 %v5213
    %5500 = vmatprep.subr.bf16.mxu0 %v5218
    %5501 = vmatpush1.bf16.msra.mxu0 %v5217
    %5502 = vmatprep.mubr.bf16.mxu0 %v4556
    %5503 = vmatmul.mubr.bf16.gmra.mrb[0].mxu0 %v4555
    %v5504 = vpop.f32.mrb[0].mxu0
    %v5505 = vadd.f32 %v5464, %v5504
    %v5506 = vpop.f32.mrb[0].mxu0
    %v5507 = vadd.f32 %v5466, %v5506
    %v5508 = vpop.f32.mrb[0].mxu0
    %v5509 = vpop.f32.mrb[0].mxu0
    %5510 = vdwg.mxu0
    %v5511 = vmul.f32 %v5423, 0.01
    %v5512 = vmul.f32 %v5425, 0.01
    %v5513 = vmul.f32 %v5505, 0.01
    %v5514 = vmul.f32 %v5507, 0.01
    %v5515 = vmax.f32 %v5423, %v5511
    %v5516 = vmax.f32 %v5425, %v5512
    %v5517 = vmax.f32 %v5505, %v5513
    %v5518 = vmax.f32 %v5507, %v5514
    %v5519 = vpack.c.bf16 %v5515, %v5515
    %v5520 = vpack.c.bf16 %v5516, %v5516
    %v5521 = vpack.c.bf16 %v5517, %v5517
    %v5522 = vpack.c.bf16 %v5518, %v5518
    %v5523 = vld [vmem:[#allocation16] sm:$0xf]
    %v5524 = vld [vmem:[#allocation16 + $0x4] sm:$0xf]
    %v5525 = vld [vmem:[#allocation16 + $0x8] sm:$0xf]
    %v5526 = vld [vmem:[#allocation16 + $0xc] sm:$0xf]
    %v5527 = vld [vmem:[#allocation16 + $0x10] sm:$0xf]
    %v5528 = vld [vmem:[#allocation16 + $0x14] sm:$0xf]
    %v5529 = vld [vmem:[#allocation16 + $0x18] sm:$0xf]
    %v5530 = vld [vmem:[#allocation16 + $0x1c] sm:$0xf]
    %v5531 = vld [vmem:[#allocation16 + $0x20] sm:$0xf]
    %v5532 = vld [vmem:[#allocation16 + $0x24] sm:$0xf]
    %v5533 = vld [vmem:[#allocation16 + $0x28] sm:$0xf]
    %v5534 = vld [vmem:[#allocation16 + $0x2c] sm:$0xf]
    %v5535 = vld [vmem:[#allocation16 + $0x30] sm:$0xf]
    %v5536 = vld [vmem:[#allocation16 + $0x34] sm:$0xf]
    %v5537 = vld [vmem:[#allocation16 + $0x38] sm:$0xf]
    %v5538 = vld [vmem:[#allocation16 + $0x3c] sm:$0xf]
    %v5539 = vld [vmem:[#allocation16 + $0x40] sm:$0xf]
    %v5540 = vld [vmem:[#allocation16 + $0x44] sm:$0xf]
    %v5541 = vld [vmem:[#allocation16 + $0x48] sm:$0xf]
    %v5542 = vld [vmem:[#allocation16 + $0x4c] sm:$0xf]
    %v5543 = vld [vmem:[#allocation16 + $0x50] sm:$0xf]
    %v5544 = vld [vmem:[#allocation16 + $0x54] sm:$0xf]
    %v5545 = vld [vmem:[#allocation16 + $0x58] sm:$0xf]
    %v5546 = vld [vmem:[#allocation16 + $0x5c] sm:$0xf]
    %v5547 = vld [vmem:[#allocation16 + $0x60] sm:$0xf]
    %v5548 = vld [vmem:[#allocation16 + $0x64] sm:$0xf]
    %v5549 = vld [vmem:[#allocation16 + $0x68] sm:$0xf]
    %v5550 = vld [vmem:[#allocation16 + $0x6c] sm:$0xf]
    %v5551 = vld [vmem:[#allocation16 + $0x70] sm:$0xf]
    %v5552 = vld [vmem:[#allocation16 + $0x74] sm:$0xf]
    %v5553 = vld [vmem:[#allocation16 + $0x78] sm:$0xf]
    %v5554 = vld [vmem:[#allocation16 + $0x7c] sm:$0xf]
    %v5555 = vld [vmem:[#allocation16 + $0x80] sm:$0xf]
    %v5556 = vld [vmem:[#allocation16 + $0x84] sm:$0xf]
    %v5557 = vld [vmem:[#allocation16 + $0x88] sm:$0xf]
    %v5558 = vld [vmem:[#allocation16 + $0x8c] sm:$0xf]
    %v5559 = vld [vmem:[#allocation16 + $0x90] sm:$0xf]
    %v5560 = vld [vmem:[#allocation16 + $0x94] sm:$0xf]
    %v5561 = vld [vmem:[#allocation16 + $0x98] sm:$0xf]
    %v5562 = vld [vmem:[#allocation16 + $0x9c] sm:$0xf]
    %v5563 = vld [vmem:[#allocation16 + $0xa0] sm:$0xf]
    %v5564 = vld [vmem:[#allocation16 + $0xa4] sm:$0xf]
    %v5565 = vld [vmem:[#allocation16 + $0xa8] sm:$0xf]
    %v5566 = vld [vmem:[#allocation16 + $0xac] sm:$0xf]
    %v5567 = vld [vmem:[#allocation16 + $0xb0] sm:$0xf]
    %v5568 = vld [vmem:[#allocation16 + $0xb4] sm:$0xf]
    %v5569 = vld [vmem:[#allocation16 + $0xb8] sm:$0xf]
    %v5570 = vld [vmem:[#allocation16 + $0xbc] sm:$0xf]
    %v5571 = vld [vmem:[#allocation16 + $0xc0] sm:$0xf]
    %v5572 = vld [vmem:[#allocation16 + $0xc4] sm:$0xf]
    %v5573 = vld [vmem:[#allocation16 + $0xc8] sm:$0xf]
    %v5574 = vld [vmem:[#allocation16 + $0xcc] sm:$0xf]
    %v5575 = vld [vmem:[#allocation16 + $0xd0] sm:$0xf]
    %v5576 = vld [vmem:[#allocation16 + $0xd4] sm:$0xf]
    %v5577 = vld [vmem:[#allocation16 + $0xd8] sm:$0xf]
    %v5578 = vld [vmem:[#allocation16 + $0xdc] sm:$0xf]
    %v5579 = vld [vmem:[#allocation16 + $0xe0] sm:$0xf]
    %v5580 = vld [vmem:[#allocation16 + $0xe4] sm:$0xf]
    %v5581 = vld [vmem:[#allocation16 + $0xe8] sm:$0xf]
    %v5582 = vld [vmem:[#allocation16 + $0xec] sm:$0xf]
    %v5583 = vld [vmem:[#allocation16 + $0xf0] sm:$0xf]
    %v5584 = vld [vmem:[#allocation16 + $0xf4] sm:$0xf]
    %v5585 = vld [vmem:[#allocation16 + $0xf8] sm:$0xf]
    %v5586 = vld [vmem:[#allocation16 + $0xfc] sm:$0xf]
    %v5587 = vld [vmem:[%s14] sm:$0x1]
    %v5589 = vlaneseq
    %v5590 = vshrl.u32 %v5589, 7
    %v5591 = vsub.s32 0, %v5590
    %v5592 = vrot.slane %v5587, %v5591
    %v5658 = vunpack.c.l.b16 %v5523
    %v5659 = vunpack.c.l.b16 %v5524
    %v5660 = vunpack.c.l.b16 %v5525
    %v5661 = vunpack.c.l.b16 %v5526
    %v5662 = vunpack.c.l.b16 %v5527
    %v5663 = vunpack.c.l.b16 %v5528
    %v5664 = vunpack.c.l.b16 %v5529
    %v5665 = vunpack.c.l.b16 %v5530
    %v5666 = vunpack.c.l.b16 %v5531
    %v5667 = vunpack.c.l.b16 %v5532
    %v5668 = vunpack.c.l.b16 %v5533
    %v5669 = vunpack.c.l.b16 %v5534
    %v5670 = vunpack.c.l.b16 %v5535
    %v5671 = vunpack.c.l.b16 %v5536
    %v5672 = vunpack.c.l.b16 %v5537
    %v5673 = vunpack.c.l.b16 %v5538
    %v5674 = vunpack.c.l.b16 %v5539
    %v5675 = vunpack.c.l.b16 %v5540
    %v5676 = vunpack.c.l.b16 %v5541
    %v5677 = vunpack.c.l.b16 %v5542
    %v5678 = vunpack.c.l.b16 %v5543
    %v5679 = vunpack.c.l.b16 %v5544
    %v5680 = vunpack.c.l.b16 %v5545
    %v5681 = vunpack.c.l.b16 %v5546
    %v5682 = vunpack.c.l.b16 %v5547
    %v5683 = vunpack.c.l.b16 %v5548
    %v5684 = vunpack.c.l.b16 %v5549
    %v5685 = vunpack.c.l.b16 %v5550
    %v5686 = vunpack.c.l.b16 %v5551
    %v5687 = vunpack.c.l.b16 %v5552
    %v5688 = vunpack.c.l.b16 %v5553
    %v5689 = vunpack.c.l.b16 %v5554
    %v5690 = vunpack.c.l.b16 %v5555
    %v5691 = vunpack.c.l.b16 %v5556
    %v5692 = vunpack.c.l.b16 %v5557
    %v5693 = vunpack.c.l.b16 %v5558
    %v5694 = vunpack.c.l.b16 %v5559
    %v5695 = vunpack.c.l.b16 %v5560
    %v5696 = vunpack.c.l.b16 %v5561
    %v5697 = vunpack.c.l.b16 %v5562
    %v5698 = vunpack.c.l.b16 %v5563
    %v5699 = vunpack.c.l.b16 %v5564
    %v5700 = vunpack.c.l.b16 %v5565
    %v5701 = vunpack.c.l.b16 %v5566
    %v5702 = vunpack.c.l.b16 %v5567
    %v5703 = vunpack.c.l.b16 %v5568
    %v5704 = vunpack.c.l.b16 %v5569
    %v5705 = vunpack.c.l.b16 %v5570
    %v5706 = vunpack.c.l.b16 %v5571
    %v5707 = vunpack.c.l.b16 %v5572
    %v5708 = vunpack.c.l.b16 %v5573
    %v5709 = vunpack.c.l.b16 %v5574
    %v5710 = vunpack.c.l.b16 %v5575
    %v5711 = vunpack.c.l.b16 %v5576
    %v5712 = vunpack.c.l.b16 %v5577
    %v5713 = vunpack.c.l.b16 %v5578
    %v5714 = vunpack.c.l.b16 %v5579
    %v5715 = vunpack.c.l.b16 %v5580
    %v5716 = vunpack.c.l.b16 %v5581
    %v5717 = vunpack.c.l.b16 %v5582
    %v5718 = vunpack.c.l.b16 %v5583
    %v5719 = vunpack.c.l.b16 %v5584
    %v5720 = vunpack.c.l.b16 %v5585
    %v5721 = vunpack.c.l.b16 %v5586
    %v5722 = vpack.c.b16 %v5659, %v5658
    %v5723 = vpack.c.b16 %v5661, %v5660
    %v5724 = vpack.c.b16 %v5663, %v5662
    %v5725 = vpack.c.b16 %v5665, %v5664
    %v5726 = vpack.c.b16 %v5667, %v5666
    %v5727 = vpack.c.b16 %v5669, %v5668
    %v5728 = vpack.c.b16 %v5671, %v5670
    %v5729 = vpack.c.b16 %v5673, %v5672
    %v5730 = vpack.c.b16 %v5675, %v5674
    %v5731 = vpack.c.b16 %v5677, %v5676
    %v5732 = vpack.c.b16 %v5679, %v5678
    %v5733 = vpack.c.b16 %v5681, %v5680
    %v5734 = vpack.c.b16 %v5683, %v5682
    %v5735 = vpack.c.b16 %v5685, %v5684
    %v5736 = vpack.c.b16 %v5687, %v5686
    %v5737 = vpack.c.b16 %v5689, %v5688
    %v5738 = vpack.c.b16 %v5691, %v5690
    %v5739 = vpack.c.b16 %v5693, %v5692
    %v5740 = vpack.c.b16 %v5695, %v5694
    %v5741 = vpack.c.b16 %v5697, %v5696
    %v5742 = vpack.c.b16 %v5699, %v5698
    %v5743 = vpack.c.b16 %v5701, %v5700
    %v5744 = vpack.c.b16 %v5703, %v5702
    %v5745 = vpack.c.b16 %v5705, %v5704
    %v5746 = vpack.c.b16 %v5707, %v5706
    %v5747 = vpack.c.b16 %v5709, %v5708
    %v5748 = vpack.c.b16 %v5711, %v5710
    %v5749 = vpack.c.b16 %v5713, %v5712
    %v5750 = vpack.c.b16 %v5715, %v5714
    %v5751 = vpack.c.b16 %v5717, %v5716
    %v5752 = vpack.c.b16 %v5719, %v5718
    %v5753 = vpack.c.b16 %v5721, %v5720
    %5786 = vmatprep.subr.bf16.mxu0 0
    %5787 = vmatpush1.bf16.msra.mxu0 %v5722
    %5788 = vmatprep.subr.bf16.mxu0 0
    %5789 = vmatpush1.bf16.msra.mxu0 %v5723
    %5790 = vmatprep.subr.bf16.mxu0 0
    %5791 = vmatpush1.bf16.msra.mxu0 %v5724
    %5792 = vmatprep.subr.bf16.mxu0 0
    %5793 = vmatpush1.bf16.msra.mxu0 %v5725
    %5794 = vmatprep.subr.bf16.mxu0 0
    %5795 = vmatpush1.bf16.msra.mxu0 %v5726
    %5796 = vmatprep.subr.bf16.mxu0 0
    %5797 = vmatpush1.bf16.msra.mxu0 %v5727
    %5798 = vmatprep.subr.bf16.mxu0 0
    %5799 = vmatpush1.bf16.msra.mxu0 %v5728
    %5800 = vmatprep.subr.bf16.mxu0 0
    %5801 = vmatpush1.bf16.msra.mxu0 %v5729
    %5802 = vmatprep.subr.bf16.mxu0 0
    %5803 = vmatpush1.bf16.msra.mxu0 %v5730
    %5804 = vmatprep.subr.bf16.mxu0 0
    %5805 = vmatpush1.bf16.msra.mxu0 %v5731
    %5806 = vmatprep.subr.bf16.mxu0 0
    %5807 = vmatpush1.bf16.msra.mxu0 %v5732
    %5808 = vmatprep.subr.bf16.mxu0 0
    %5809 = vmatpush1.bf16.msra.mxu0 %v5733
    %5810 = vmatprep.subr.bf16.mxu0 0
    %5811 = vmatpush1.bf16.msra.mxu0 %v5734
    %5812 = vmatprep.subr.bf16.mxu0 0
    %5813 = vmatpush1.bf16.msra.mxu0 %v5735
    %5814 = vmatprep.subr.bf16.mxu0 0
    %5815 = vmatpush1.bf16.msra.mxu0 %v5736
    %5816 = vmatprep.subr.bf16.mxu0 0
    %5817 = vmatpush1.bf16.msra.mxu0 %v5737
    %5818 = vmatprep.mubr.bf16.mxu0 %v5520
    %5819 = vmatmul.mubr.bf16.gmra.mrb[0].mxu0 %v5519
    %v5820 = vpop.f32.mrb[0].mxu0
    %v5821 = vadd.f32 %v5592, %v5820
    %v5822 = vpop.f32.mrb[0].mxu0
    %v5823 = vpop.f32.mrb[0].mxu0
    %v5824 = vpop.f32.mrb[0].mxu0
    %5825 = vdwg.mxu0
    %5826 = vmatprep.subr.bf16.mxu0 0
    %5827 = vmatpush1.bf16.msra.mxu0 %v5738
    %5828 = vmatprep.subr.bf16.mxu0 0
    %5829 = vmatpush1.bf16.msra.mxu0 %v5739
    %5830 = vmatprep.subr.bf16.mxu0 0
    %5831 = vmatpush1.bf16.msra.mxu0 %v5740
    %5832 = vmatprep.subr.bf16.mxu0 0
    %5833 = vmatpush1.bf16.msra.mxu0 %v5741
    %5834 = vmatprep.subr.bf16.mxu0 0
    %5835 = vmatpush1.bf16.msra.mxu0 %v5742
    %5836 = vmatprep.subr.bf16.mxu0 0
    %5837 = vmatpush1.bf16.msra.mxu0 %v5743
    %5838 = vmatprep.subr.bf16.mxu0 0
    %5839 = vmatpush1.bf16.msra.mxu0 %v5744
    %5840 = vmatprep.subr.bf16.mxu0 0
    %5841 = vmatpush1.bf16.msra.mxu0 %v5745
    %5842 = vmatprep.subr.bf16.mxu0 0
    %5843 = vmatpush1.bf16.msra.mxu0 %v5746
    %5844 = vmatprep.subr.bf16.mxu0 0
    %5845 = vmatpush1.bf16.msra.mxu0 %v5747
    %5846 = vmatprep.subr.bf16.mxu0 0
    %5847 = vmatpush1.bf16.msra.mxu0 %v5748
    %5848 = vmatprep.subr.bf16.mxu0 0
    %5849 = vmatpush1.bf16.msra.mxu0 %v5749
    %5850 = vmatprep.subr.bf16.mxu0 0
    %5851 = vmatpush1.bf16.msra.mxu0 %v5750
    %5852 = vmatprep.subr.bf16.mxu0 0
    %5853 = vmatpush1.bf16.msra.mxu0 %v5751
    %5854 = vmatprep.subr.bf16.mxu0 0
    %5855 = vmatpush1.bf16.msra.mxu0 %v5752
    %5856 = vmatprep.subr.bf16.mxu0 0
    %5857 = vmatpush1.bf16.msra.mxu0 %v5753
    %5858 = vmatprep.mubr.bf16.mxu0 %v5522
    %5859 = vmatmul.mubr.bf16.gmra.mrb[0].mxu0 %v5521
    %v5860 = vpop.f32.mrb[0].mxu0
    %v5861 = vadd.f32 %v5821, %v5860
    %v5862 = vpop.f32.mrb[0].mxu0
    %v5863 = vpop.f32.mrb[0].mxu0
    %v5864 = vpop.f32.mrb[0].mxu0
    %5865 = vdwg.mxu0
    %5866 = vst [vmem:[#allocation17] sm:$0xff] %v5861
    // Predicated region
    $region98: #{tpu_custom_call.1} parent=1 // pred_check
      _
    $region99: #{tpu_custom_call.1} parent=1 // pred_check_branch
      %5868 = sbr.rel (0) target = $region101
    $region100: #{tpu_custom_call.1} parent=1 // pred_region
      %s5870 = ssub.s32 128, 128
      %5871 = vsyncadd [#allocation4], %s5870
      %s5873 = sshll.u32 [#allocation17], 4
      %s5874 = int_to_ptr.vmem [resolvable:$true] %s5873
      %5876 = dma.vmem_to_hbm [thread:$0]  %s5874, 128, %s15, [#allocation4]
    $region101: #{tpu_custom_call.1} parent=1 // pred_fallthru
      _
    // Predicated region
    $region102: #{tpu_custom_call.1} parent=1 // pred_check
      _
    $region103: #{tpu_custom_call.1} parent=1 // pred_check_branch
      %5878 = sbr.rel (0) target = $region105
    $region104: #{tpu_custom_call.1} parent=1 // pred_region
      %5879 = dma.done [#allocation4], 128
    $region105: #{tpu_custom_call.1} parent=1 // pred_fallthru
      _
    %5880 = vsyncpa [#allocation3], 1
    %5881 = vsyncpa [#allocation6], 1
    %5882 = vsyncpa [#allocation9], 1
    %5883 = vsyncpa [#allocation12], 1
    %5884 = vsyncpa [#allocation15], 1
    %5885 = vsyncpa [#allocation4], 1

</llo_original>
